<compile_context>
chip_gen: v7x
topology: tpu7x:2x2x1
jax: 0.10.0
libtpu: 0.0.40
codegen_flags: <defaults>
</compile_context>

<pallas_src>
import math

import jax
import jax.numpy as jnp
from jax.experimental import pallas as pl
from jax.experimental.pallas import tpu as pltpu


def _round_up(x, m):
    return ((x + m - 1) // m) * m


# ----------------------------- Pallas kernel -------------------------------

def make_rnnlm_kernel(num_layers, seq_len, hidden_dim):
    L, T, H = num_layers, seq_len, hidden_dim

    def lstm_cell(z, c):
        # z: [1, 4H] fused pre-activation; i/f/o blocks are pre-scaled by 0.5 at
        # packing time, so a single tanh yields all gates:
        #   sigmoid(a) = 0.5 * tanh(0.5 a) + 0.5
        u = jnp.tanh(z)                            # one full-width EUP op per step
        i_g = 0.5 * u[:, 0 * H:1 * H] + 0.5
        f_g = 0.5 * u[:, 1 * H:2 * H] + 0.5
        g_g = u[:, 2 * H:3 * H]                    # tanh gate (unscaled block)
        o_g = 0.5 * u[:, 3 * H:4 * H] + 0.5
        c_new = f_g * c + i_g * g_g
        h_new = o_g * jnp.tanh(c_new)
        return h_new, c_new

    def kernel(emb_ref, wih0_ref, whh0_ref, wihr_ref, whhr_ref, b_ref,
               wlin_ref, blin_ref, out_ref, hs_ref):
        # Hoisted layer-0 input projection for ALL timesteps (off the serial chain):
        #   [T, E] @ [E, 4H] + b0  ->  [T, 4H]   (value, read back via static slices)
        gx0 = (jnp.dot(emb_ref[...], wih0_ref[...],
                       preferred_element_type=jnp.float32) + b_ref[0])

        whh0 = whh0_ref[...]                                   # [H, 4H]
        wih_r = [wihr_ref[l - 1] for l in range(1, L)]         # each [H, 4H]
        whh_r = [whhr_ref[l - 1] for l in range(1, L)]
        b_r = [b_ref[l] for l in range(1, L)]                  # each [1, 4H]

        zero = jnp.zeros((1, H), jnp.float32)                  # init_hidden(): zeros
        h = [zero] * L
        c = [zero] * L
        x_out = [[None] * T for _ in range(L)]                 # per-(layer, t) hidden value

        # Wavefront: diagonal d activates every (l, t) with l + t == d.  All steps on
        # one diagonal are independent -> they pipeline on the MXU/EUP.  T and L are
        # small and static, so the loops are fully unrolled at trace time.
        for d in range(T + L - 1):
            for l in range(L):
                t = d - l
                if not (0 <= t < T):
                    continue
                if l == 0:
                    # Single recurrent matmul on the chain: [1, H] @ [H, 4H].
                    z = gx0[t:t + 1, :] + jnp.dot(
                        h[0], whh0, preferred_element_type=jnp.float32)
                else:
                    # Two independent [1, H] @ [H, 4H] matmuls; one MXU latency on
                    # the chain, no lane-concatenate needed.
                    z = (jnp.dot(x_out[l - 1][t], wih_r[l - 1],
                                 preferred_element_type=jnp.float32)
                         + jnp.dot(h[l], whh_r[l - 1],
                                   preferred_element_type=jnp.float32)
                         + b_r[l - 1])
                h_new, c_new = lstm_cell(z, c[l])
                h[l], c[l] = h_new, c_new
                x_out[l][t] = h_new
                if l == L - 1:
                    # Top-layer output feeds the final projection only: store is
                    # not on the recurrent dependency chain.
                    hs_ref[pl.ds(t, 1), :] = h_new

        # Final linear + log_softmax over the (lane-padded) vocab dimension.
        logits = (jnp.dot(hs_ref[...], wlin_ref[...],
                          preferred_element_type=jnp.float32)
                  + blin_ref[...])                                       # [T, Vp]
        m = jnp.max(logits, axis=-1, keepdims=True)
        lse = m + jnp.log(jnp.sum(jnp.exp(logits - m), axis=-1, keepdims=True))
        out_ref[...] = logits - lse

    return kernel


# ------------------------------ Wrapper ------------------------------------

def rnnlm_forward(sentence, packed, *, num_layers, hidden_dim, vocab_size):
    """Runs the Pallas kernel. `packed` holds kernel-layout parameters."""
    T = sentence.shape[0]
    L, H, V = num_layers, hidden_dim, vocab_size
    Vp = packed["w_lin"].shape[1]

    # Glue: embedding gather (nn.Embedding) done as a JAX indexing op feeding the kernel.
    embeds = packed["embedding"][sentence]                              # [T, E]

    vmem = pl.BlockSpec(memory_space=pltpu.MemorySpace.VMEM)

    out = pl.pallas_call(
        make_rnnlm_kernel(L, T, H),
        out_shape=jax.ShapeDtypeStruct((T, Vp), jnp.float32),
        in_specs=[vmem] * 8,
        out_specs=vmem,
        scratch_shapes=[
            pltpu.VMEM((T, H), jnp.float32),   # top-layer hidden stack (off-chain)
        ],
    )(embeds, packed["w_ih0"], packed["w_hh0"], packed["w_ihr"],
      packed["w_hhr"], packed["b"], packed["w_lin"], packed["b_lin"])

    return out[:, :V]    # drop the lane padding of the vocab dimension


# ---------------------- Deterministic parameter init -----------------------

def init_params(key, *, embedding_dim, hidden_dim, num_layers, vocab_size):
    E, H, L, V = embedding_dim, hidden_dim, num_layers, vocab_size
    G = 4 * H
    Vp = _round_up(V, 128)
    Lr = max(L - 1, 1)

    kstd = 1.0 / math.sqrt(H)
    keys = jax.random.split(key, 4 * L + 3)
    ki = iter(range(len(keys)))

    raw = {}
    raw["embedding"] = jax.random.normal(keys[next(ki)], (V, E), jnp.float32)

    raw["lstm"] = []
    for l in range(L):
        in_l = E if l == 0 else H
        W_ih = jax.random.uniform(keys[next(ki)], (G, in_l), jnp.float32, -kstd, kstd)
        W_hh = jax.random.uniform(keys[next(ki)], (G, H), jnp.float32, -kstd, kstd)
        b_ih = jax.random.uniform(keys[next(ki)], (G,), jnp.float32, -kstd, kstd)
        b_hh = jax.random.uniform(keys[next(ki)], (G,), jnp.float32, -kstd, kstd)
        raw["lstm"].append((W_ih, W_hh, b_ih, b_hh))

    raw["lin_W"] = jax.random.uniform(keys[next(ki)], (V, H), jnp.float32, -kstd, kstd)
    raw["lin_b"] = jax.random.uniform(keys[next(ki)], (V,), jnp.float32, -kstd, kstd)

    # ---- Kernel-friendly packing -------------------------------------------
    #  * gate-fused weights, input on the LEFT of the matmuls: x[*,in] @ W[in,4H]
    #    with gate blocks i|f|g|o along the lane axis (4H = 128, lane-dense)
    #  * i/f/o gate blocks (weights AND bias) pre-scaled by 0.5 so a single in-kernel
    #    tanh recovers all gates: sigmoid(a) = 0.5*tanh(0.5 a) + 0.5
    #  * vocab padded to a 128-lane multiple; padded logits driven to ~-inf via a
    #    finite -1e30 bias (NOT -inf) so the in-kernel log_softmax stays exact
    gscale = jnp.concatenate([jnp.full((H,), 0.5), jnp.full((H,), 0.5),
                              jnp.ones((H,)), jnp.full((H,), 0.5)]).astype(jnp.float32)

    def pack_layer(l):
        W_ih, W_hh, b_ih, b_hh = raw["lstm"][l]
        return (W_ih.T * gscale,                 # [in_l, 4H]
                W_hh.T * gscale,                 # [H, 4H]
                ((b_ih + b_hh) * gscale)[None, :])   # [1, 4H]

    w_ih0, w_hh0, b0 = pack_layer(0)
    w_ihr = jnp.zeros((Lr, H, G), jnp.float32)
    w_hhr = jnp.zeros((Lr, H, G), jnp.float32)
    b_all = jnp.zeros((L, 1, G), jnp.float32).at[0].set(b0)
    for l in range(1, L):
        wi, wh, bl = pack_layer(l)
        w_ihr = w_ihr.at[l - 1].set(wi)
        w_hhr = w_hhr.at[l - 1].set(wh)
        b_all = b_all.at[l].set(bl)

    w_lin = jnp.zeros((H, Vp), jnp.float32).at[:, :V].set(raw["lin_W"].T)
    b_lin = jnp.full((1, Vp), -1e30, jnp.float32).at[0, :V].set(raw["lin_b"])

    packed = {"embedding": raw["embedding"], "w_ih0": w_ih0, "w_hh0": w_hh0,
              "w_ihr": w_ihr, "w_hhr": w_hhr, "b": b_all,
              "w_lin": w_lin, "b_lin": b_lin}
    return raw, packed


# --------------------------- Pure-JAX reference -----------------------------

def ref_forward(sentence, raw, *, hidden_dim, num_layers):
    H, L = hidden_dim, num_layers
    x_seq = raw["embedding"][sentence]                              # [T, E]
    T = x_seq.shape[0]
    h = [jnp.zeros((H,), jnp.float32) for _ in range(L)]
    c = [jnp.zeros((H,), jnp.float32) for _ in range(L)]
    outs = []
    for t in range(T):
        x = x_seq[t]
        for l in range(L):
            W_ih, W_hh, b_ih, b_hh = raw["lstm"][l]
            gates = W_ih @ x + b_ih + W_hh @ h[l] + b_hh
            i = jax.nn.sigmoid(gates[0:H])
            f = jax.nn.sigmoid(gates[H:2 * H])
            g = jnp.tanh(gates[2 * H:3 * H])
            o = jax.nn.sigmoid(gates[3 * H:4 * H])
            c[l] = f * c[l] + i * g
            h[l] = o * jnp.tanh(c[l])
            x = h[l]
        outs.append(x)
    hs = jnp.stack(outs)                                            # [T, H]
    logits = hs @ raw["lin_W"].T + raw["lin_b"]                     # [T, V]
    return jax.nn.log_softmax(logits, axis=1)


# --------------------------------- Main -------------------------------------

if __name__ == "__main__":
    EMBEDDING_DIM = 32
    HIDDEN_DIM = 32
    NUM_LAYERS = 2
    VOCAB_SIZE = 64
    SEQ_LEN = 8

    key = jax.random.PRNGKey(0)
    k_params, k_sent = jax.random.split(key)

    raw, packed = init_params(
        k_params,
        embedding_dim=EMBEDDING_DIM,
        hidden_dim=HIDDEN_DIM,
        num_layers=NUM_LAYERS,
        vocab_size=VOCAB_SIZE,
    )

    sentence = jax.random.randint(k_sent, (SEQ_LEN,), 0, VOCAB_SIZE, dtype=jnp.int32)

    scores = rnnlm_forward(
        sentence,
        packed,
        num_layers=NUM_LAYERS,
        hidden_dim=HIDDEN_DIM,
        vocab_size=VOCAB_SIZE,
    )
    scores = jax.block_until_ready(scores)

    expected = ref_forward(sentence, raw, hidden_dim=HIDDEN_DIM, num_layers=NUM_LAYERS)
    assert scores.shape == (SEQ_LEN, VOCAB_SIZE)
    assert jnp.allclose(scores, expected, atol=1e-4, rtol=1e-4), "mismatch vs JAX reference"

    print("KERNEL_OK")
</pallas_src>

<mosaic_0001>
module attributes {stable_mosaic.version = 11 : i64} {
  func.func @kernel(%arg0: memref<8x32xf32, #tpu.memory_space<vmem>>, %arg1: memref<32x128xf32, #tpu.memory_space<vmem>>, %arg2: memref<32x128xf32, #tpu.memory_space<vmem>>, %arg3: memref<1x32x128xf32, #tpu.memory_space<vmem>>, %arg4: memref<1x32x128xf32, #tpu.memory_space<vmem>>, %arg5: memref<2x1x128xf32, #tpu.memory_space<vmem>>, %arg6: memref<32x128xf32, #tpu.memory_space<vmem>>, %arg7: memref<1x128xf32, #tpu.memory_space<vmem>>, %arg8: memref<8x128xf32, #tpu.memory_space<vmem>>, %arg9: memref<8x32xf32, #tpu.memory_space<vmem>>) attributes {dimension_semantics = [], scalar_prefetch = 0 : i64, scratch_operands = 1 : i64, tpu.core_type = #tpu.core_type<tc>} {
    %c0 = arith.constant 0 : index
    %c0_0 = arith.constant 0 : index
    %0 = vector.load %arg0[%c0, %c0_0] : memref<8x32xf32, #tpu.memory_space<vmem>>, vector<8x32xf32>
    %c0_1 = arith.constant 0 : index
    %c0_2 = arith.constant 0 : index
    %1 = vector.load %arg1[%c0_1, %c0_2] : memref<32x128xf32, #tpu.memory_space<vmem>>, vector<32x128xf32>
    %cst = arith.constant dense<0.000000e+00> : vector<8x128xf32>
    %2 = tpu.matmul %0, %1, %cst {dimension_numbers = #tpu.dot_dimension_numbers<[1], [0], [0], [1], [0, 0, 1, 1], [], []>} : vector<8x32xf32>, vector<32x128xf32>, vector<8x128xf32> -> vector<8x128xf32>
    %c0_3 = arith.constant 0 : index
    %c0_4 = arith.constant 0 : index
    %c0_5 = arith.constant 0 : index
    %3 = vector.load %arg5[%c0_3, %c0_4, %c0_5] : memref<2x1x128xf32, #tpu.memory_space<vmem>>, vector<1x1x128xf32>
    %4 = vector.shape_cast %3 : vector<1x1x128xf32> to vector<1x128xf32>
    %5 = vector.broadcast %4 : vector<1x128xf32> to vector<8x128xf32>
    %6 = arith.addf %2, %5 : vector<8x128xf32>
    %c0_6 = arith.constant 0 : index
    %c0_7 = arith.constant 0 : index
    %7 = vector.load %arg2[%c0_6, %c0_7] : memref<32x128xf32, #tpu.memory_space<vmem>>, vector<32x128xf32>
    %c0_8 = arith.constant 0 : index
    %c0_9 = arith.constant 0 : index
    %c0_10 = arith.constant 0 : index
    %8 = vector.load %arg3[%c0_8, %c0_9, %c0_10] : memref<1x32x128xf32, #tpu.memory_space<vmem>>, vector<1x32x128xf32>
    %9 = vector.shape_cast %8 : vector<1x32x128xf32> to vector<32x128xf32>
    %c0_11 = arith.constant 0 : index
    %c0_12 = arith.constant 0 : index
    %c0_13 = arith.constant 0 : index
    %10 = vector.load %arg4[%c0_11, %c0_12, %c0_13] : memref<1x32x128xf32, #tpu.memory_space<vmem>>, vector<1x32x128xf32>
    %11 = vector.shape_cast %10 : vector<1x32x128xf32> to vector<32x128xf32>
    %c1 = arith.constant 1 : index
    %c0_14 = arith.constant 0 : index
    %c0_15 = arith.constant 0 : index
    %12 = vector.load %arg5[%c1, %c0_14, %c0_15] : memref<2x1x128xf32, #tpu.memory_space<vmem>>, vector<1x1x128xf32>
    %13 = vector.shape_cast %12 : vector<1x1x128xf32> to vector<1x128xf32>
    %cst_16 = arith.constant 0.000000e+00 : f32
    %14 = vector.broadcast %cst_16 : f32 to vector<1x32xf32>
    %15 = vector.extract_strided_slice %6 {offsets = [0, 0], sizes = [1, 128], strides = [1, 1]} : vector<8x128xf32> to vector<1x128xf32>
    %cst_17 = arith.constant dense<0.000000e+00> : vector<1x128xf32>
    %16 = tpu.matmul %14, %7, %cst_17 {dimension_numbers = #tpu.dot_dimension_numbers<[1], [0], [0], [1], [0, 0, 1, 1], [], []>} : vector<1x32xf32>, vector<32x128xf32>, vector<1x128xf32> -> vector<1x128xf32>
    %17 = arith.addf %15, %16 : vector<1x128xf32>
    %18 = math.tanh %17 : vector<1x128xf32>
    %19 = vector.extract_strided_slice %18 {offsets = [0, 0], sizes = [1, 32], strides = [1, 1]} : vector<1x128xf32> to vector<1x32xf32>
    %cst_18 = arith.constant 5.000000e-01 : f32
    %20 = vector.broadcast %cst_18 : f32 to vector<1x32xf32>
    %21 = arith.mulf %20, %19 : vector<1x32xf32>
    %cst_19 = arith.constant 5.000000e-01 : f32
    %22 = vector.broadcast %cst_19 : f32 to vector<1x32xf32>
    %23 = arith.addf %21, %22 : vector<1x32xf32>
    %24 = vector.extract_strided_slice %18 {offsets = [0, 32], sizes = [1, 32], strides = [1, 1]} : vector<1x128xf32> to vector<1x32xf32>
    %cst_20 = arith.constant 5.000000e-01 : f32
    %25 = vector.broadcast %cst_20 : f32 to vector<1x32xf32>
    %26 = arith.mulf %25, %24 : vector<1x32xf32>
    %cst_21 = arith.constant 5.000000e-01 : f32
    %27 = vector.broadcast %cst_21 : f32 to vector<1x32xf32>
    %28 = arith.addf %26, %27 : vector<1x32xf32>
    %29 = vector.extract_strided_slice %18 {offsets = [0, 64], sizes = [1, 32], strides = [1, 1]} : vector<1x128xf32> to vector<1x32xf32>
    %30 = vector.extract_strided_slice %18 {offsets = [0, 96], sizes = [1, 32], strides = [1, 1]} : vector<1x128xf32> to vector<1x32xf32>
    %cst_22 = arith.constant 5.000000e-01 : f32
    %31 = vector.broadcast %cst_22 : f32 to vector<1x32xf32>
    %32 = arith.mulf %31, %30 : vector<1x32xf32>
    %cst_23 = arith.constant 5.000000e-01 : f32
    %33 = vector.broadcast %cst_23 : f32 to vector<1x32xf32>
    %34 = arith.addf %32, %33 : vector<1x32xf32>
    %35 = arith.mulf %28, %14 : vector<1x32xf32>
    %36 = arith.mulf %23, %29 : vector<1x32xf32>
    %37 = arith.addf %35, %36 : vector<1x32xf32>
    %38 = math.tanh %37 : vector<1x32xf32>
    %39 = arith.mulf %34, %38 : vector<1x32xf32>
    %40 = vector.extract_strided_slice %6 {offsets = [1, 0], sizes = [1, 128], strides = [1, 1]} : vector<8x128xf32> to vector<1x128xf32>
    %cst_24 = arith.constant dense<0.000000e+00> : vector<1x128xf32>
    %41 = tpu.matmul %39, %7, %cst_24 {dimension_numbers = #tpu.dot_dimension_numbers<[1], [0], [0], [1], [0, 0, 1, 1], [], []>} : vector<1x32xf32>, vector<32x128xf32>, vector<1x128xf32> -> vector<1x128xf32>
    %42 = arith.addf %40, %41 : vector<1x128xf32>
    %43 = math.tanh %42 : vector<1x128xf32>
    %44 = vector.extract_strided_slice %43 {offsets = [0, 0], sizes = [1, 32], strides = [1, 1]} : vector<1x128xf32> to vector<1x32xf32>
    %cst_25 = arith.constant 5.000000e-01 : f32
    %45 = vector.broadcast %cst_25 : f32 to vector<1x32xf32>
    %46 = arith.mulf %45, %44 : vector<1x32xf32>
    %cst_26 = arith.constant 5.000000e-01 : f32
    %47 = vector.broadcast %cst_26 : f32 to vector<1x32xf32>
    %48 = arith.addf %46, %47 : vector<1x32xf32>
    %49 = vector.extract_strided_slice %43 {offsets = [0, 32], sizes = [1, 32], strides = [1, 1]} : vector<1x128xf32> to vector<1x32xf32>
    %cst_27 = arith.constant 5.000000e-01 : f32
    %50 = vector.broadcast %cst_27 : f32 to vector<1x32xf32>
    %51 = arith.mulf %50, %49 : vector<1x32xf32>
    %cst_28 = arith.constant 5.000000e-01 : f32
    %52 = vector.broadcast %cst_28 : f32 to vector<1x32xf32>
    %53 = arith.addf %51, %52 : vector<1x32xf32>
    %54 = vector.extract_strided_slice %43 {offsets = [0, 64], sizes = [1, 32], strides = [1, 1]} : vector<1x128xf32> to vector<1x32xf32>
    %55 = vector.extract_strided_slice %43 {offsets = [0, 96], sizes = [1, 32], strides = [1, 1]} : vector<1x128xf32> to vector<1x32xf32>
    %cst_29 = arith.constant 5.000000e-01 : f32
    %56 = vector.broadcast %cst_29 : f32 to vector<1x32xf32>
    %57 = arith.mulf %56, %55 : vector<1x32xf32>
    %cst_30 = arith.constant 5.000000e-01 : f32
    %58 = vector.broadcast %cst_30 : f32 to vector<1x32xf32>
    %59 = arith.addf %57, %58 : vector<1x32xf32>
    %60 = arith.mulf %53, %37 : vector<1x32xf32>
    %61 = arith.mulf %48, %54 : vector<1x32xf32>
    %62 = arith.addf %60, %61 : vector<1x32xf32>
    %63 = math.tanh %62 : vector<1x32xf32>
    %64 = arith.mulf %59, %63 : vector<1x32xf32>
    %cst_31 = arith.constant dense<0.000000e+00> : vector<1x128xf32>
    %65 = tpu.matmul %39, %9, %cst_31 {dimension_numbers = #tpu.dot_dimension_numbers<[1], [0], [0], [1], [0, 0, 1, 1], [], []>} : vector<1x32xf32>, vector<32x128xf32>, vector<1x128xf32> -> vector<1x128xf32>
    %cst_32 = arith.constant dense<0.000000e+00> : vector<1x128xf32>
    %66 = tpu.matmul %14, %11, %cst_32 {dimension_numbers = #tpu.dot_dimension_numbers<[1], [0], [0], [1], [0, 0, 1, 1], [], []>} : vector<1x32xf32>, vector<32x128xf32>, vector<1x128xf32> -> vector<1x128xf32>
    %67 = arith.addf %65, %66 : vector<1x128xf32>
    %68 = arith.addf %67, %13 : vector<1x128xf32>
    %69 = math.tanh %68 : vector<1x128xf32>
    %70 = vector.extract_strided_slice %69 {offsets = [0, 0], sizes = [1, 32], strides = [1, 1]} : vector<1x128xf32> to vector<1x32xf32>
    %cst_33 = arith.constant 5.000000e-01 : f32
    %71 = vector.broadcast %cst_33 : f32 to vector<1x32xf32>
    %72 = arith.mulf %71, %70 : vector<1x32xf32>
    %cst_34 = arith.constant 5.000000e-01 : f32
    %73 = vector.broadcast %cst_34 : f32 to vector<1x32xf32>
    %74 = arith.addf %72, %73 : vector<1x32xf32>
    %75 = vector.extract_strided_slice %69 {offsets = [0, 32], sizes = [1, 32], strides = [1, 1]} : vector<1x128xf32> to vector<1x32xf32>
    %cst_35 = arith.constant 5.000000e-01 : f32
    %76 = vector.broadcast %cst_35 : f32 to vector<1x32xf32>
    %77 = arith.mulf %76, %75 : vector<1x32xf32>
    %cst_36 = arith.constant 5.000000e-01 : f32
    %78 = vector.broadcast %cst_36 : f32 to vector<1x32xf32>
    %79 = arith.addf %77, %78 : vector<1x32xf32>
    %80 = vector.extract_strided_slice %69 {offsets = [0, 64], sizes = [1, 32], strides = [1, 1]} : vector<1x128xf32> to vector<1x32xf32>
    %81 = vector.extract_strided_slice %69 {offsets = [0, 96], sizes = [1, 32], strides = [1, 1]} : vector<1x128xf32> to vector<1x32xf32>
    %cst_37 = arith.constant 5.000000e-01 : f32
    %82 = vector.broadcast %cst_37 : f32 to vector<1x32xf32>
    %83 = arith.mulf %82, %81 : vector<1x32xf32>
    %cst_38 = arith.constant 5.000000e-01 : f32
    %84 = vector.broadcast %cst_38 : f32 to vector<1x32xf32>
    %85 = arith.addf %83, %84 : vector<1x32xf32>
    %86 = arith.mulf %79, %14 : vector<1x32xf32>
    %87 = arith.mulf %74, %80 : vector<1x32xf32>
    %88 = arith.addf %86, %87 : vector<1x32xf32>
    %89 = math.tanh %88 : vector<1x32xf32>
    %90 = arith.mulf %85, %89 : vector<1x32xf32>
    %c0_39 = arith.constant 0 : index
    %c0_40 = arith.constant 0 : index
    %91 = vector.load %arg9[%c0_39, %c0_40] : memref<8x32xf32, #tpu.memory_space<vmem>>, vector<1x32xf32>
    tpu.vector_store %arg9[%c0_39, %c0_40], %90 {strides = array<i32>} : memref<8x32xf32, #tpu.memory_space<vmem>>, vector<1x32xf32>,
    %92 = vector.extract_strided_slice %6 {offsets = [2, 0], sizes = [1, 128], strides = [1, 1]} : vector<8x128xf32> to vector<1x128xf32>
    %cst_41 = arith.constant dense<0.000000e+00> : vector<1x128xf32>
    %93 = tpu.matmul %64, %7, %cst_41 {dimension_numbers = #tpu.dot_dimension_numbers<[1], [0], [0], [1], [0, 0, 1, 1], [], []>} : vector<1x32xf32>, vector<32x128xf32>, vector<1x128xf32> -> vector<1x128xf32>
    %94 = arith.addf %92, %93 : vector<1x128xf32>
    %95 = math.tanh %94 : vector<1x128xf32>
    %96 = vector.extract_strided_slice %95 {offsets = [0, 0], sizes = [1, 32], strides = [1, 1]} : vector<1x128xf32> to vector<1x32xf32>
    %cst_42 = arith.constant 5.000000e-01 : f32
    %97 = vector.broadcast %cst_42 : f32 to vector<1x32xf32>
    %98 = arith.mulf %97, %96 : vector<1x32xf32>
    %cst_43 = arith.constant 5.000000e-01 : f32
    %99 = vector.broadcast %cst_43 : f32 to vector<1x32xf32>
    %100 = arith.addf %98, %99 : vector<1x32xf32>
    %101 = vector.extract_strided_slice %95 {offsets = [0, 32], sizes = [1, 32], strides = [1, 1]} : vector<1x128xf32> to vector<1x32xf32>
    %cst_44 = arith.constant 5.000000e-01 : f32
    %102 = vector.broadcast %cst_44 : f32 to vector<1x32xf32>
    %103 = arith.mulf %102, %101 : vector<1x32xf32>
    %cst_45 = arith.constant 5.000000e-01 : f32
    %104 = vector.broadcast %cst_45 : f32 to vector<1x32xf32>
    %105 = arith.addf %103, %104 : vector<1x32xf32>
    %106 = vector.extract_strided_slice %95 {offsets = [0, 64], sizes = [1, 32], strides = [1, 1]} : vector<1x128xf32> to vector<1x32xf32>
    %107 = vector.extract_strided_slice %95 {offsets = [0, 96], sizes = [1, 32], strides = [1, 1]} : vector<1x128xf32> to vector<1x32xf32>
    %cst_46 = arith.constant 5.000000e-01 : f32
    %108 = vector.broadcast %cst_46 : f32 to vector<1x32xf32>
    %109 = arith.mulf %108, %107 : vector<1x32xf32>
    %cst_47 = arith.constant 5.000000e-01 : f32
    %110 = vector.broadcast %cst_47 : f32 to vector<1x32xf32>
    %111 = arith.addf %109, %110 : vector<1x32xf32>
    %112 = arith.mulf %105, %62 : vector<1x32xf32>
    %113 = arith.mulf %100, %106 : vector<1x32xf32>
    %114 = arith.addf %112, %113 : vector<1x32xf32>
    %115 = math.tanh %114 : vector<1x32xf32>
    %116 = arith.mulf %111, %115 : vector<1x32xf32>
    %cst_48 = arith.constant dense<0.000000e+00> : vector<1x128xf32>
    %117 = tpu.matmul %64, %9, %cst_48 {dimension_numbers = #tpu.dot_dimension_numbers<[1], [0], [0], [1], [0, 0, 1, 1], [], []>} : vector<1x32xf32>, vector<32x128xf32>, vector<1x128xf32> -> vector<1x128xf32>
    %cst_49 = arith.constant dense<0.000000e+00> : vector<1x128xf32>
    %118 = tpu.matmul %90, %11, %cst_49 {dimension_numbers = #tpu.dot_dimension_numbers<[1], [0], [0], [1], [0, 0, 1, 1], [], []>} : vector<1x32xf32>, vector<32x128xf32>, vector<1x128xf32> -> vector<1x128xf32>
    %119 = arith.addf %117, %118 : vector<1x128xf32>
    %120 = arith.addf %119, %13 : vector<1x128xf32>
    %121 = math.tanh %120 : vector<1x128xf32>
    %122 = vector.extract_strided_slice %121 {offsets = [0, 0], sizes = [1, 32], strides = [1, 1]} : vector<1x128xf32> to vector<1x32xf32>
    %cst_50 = arith.constant 5.000000e-01 : f32
    %123 = vector.broadcast %cst_50 : f32 to vector<1x32xf32>
    %124 = arith.mulf %123, %122 : vector<1x32xf32>
    %cst_51 = arith.constant 5.000000e-01 : f32
    %125 = vector.broadcast %cst_51 : f32 to vector<1x32xf32>
    %126 = arith.addf %124, %125 : vector<1x32xf32>
    %127 = vector.extract_strided_slice %121 {offsets = [0, 32], sizes = [1, 32], strides = [1, 1]} : vector<1x128xf32> to vector<1x32xf32>
    %cst_52 = arith.constant 5.000000e-01 : f32
    %128 = vector.broadcast %cst_52 : f32 to vector<1x32xf32>
    %129 = arith.mulf %128, %127 : vector<1x32xf32>
    %cst_53 = arith.constant 5.000000e-01 : f32
    %130 = vector.broadcast %cst_53 : f32 to vector<1x32xf32>
    %131 = arith.addf %129, %130 : vector<1x32xf32>
    %132 = vector.extract_strided_slice %121 {offsets = [0, 64], sizes = [1, 32], strides = [1, 1]} : vector<1x128xf32> to vector<1x32xf32>
    %133 = vector.extract_strided_slice %121 {offsets = [0, 96], sizes = [1, 32], strides = [1, 1]} : vector<1x128xf32> to vector<1x32xf32>
    %cst_54 = arith.constant 5.000000e-01 : f32
    %134 = vector.broadcast %cst_54 : f32 to vector<1x32xf32>
    %135 = arith.mulf %134, %133 : vector<1x32xf32>
    %cst_55 = arith.constant 5.000000e-01 : f32
    %136 = vector.broadcast %cst_55 : f32 to vector<1x32xf32>
    %137 = arith.addf %135, %136 : vector<1x32xf32>
    %138 = arith.mulf %131, %88 : vector<1x32xf32>
    %139 = arith.mulf %126, %132 : vector<1x32xf32>
    %140 = arith.addf %138, %139 : vector<1x32xf32>
    %141 = math.tanh %140 : vector<1x32xf32>
    %142 = arith.mulf %137, %141 : vector<1x32xf32>
    %c1_56 = arith.constant 1 : index
    %c0_57 = arith.constant 0 : index
    %143 = vector.load %arg9[%c1_56, %c0_57] : memref<8x32xf32, #tpu.memory_space<vmem>>, vector<1x32xf32>
    tpu.vector_store %arg9[%c1_56, %c0_57], %142 {strides = array<i32>} : memref<8x32xf32, #tpu.memory_space<vmem>>, vector<1x32xf32>,
    %144 = vector.extract_strided_slice %6 {offsets = [3, 0], sizes = [1, 128], strides = [1, 1]} : vector<8x128xf32> to vector<1x128xf32>
    %cst_58 = arith.constant dense<0.000000e+00> : vector<1x128xf32>
    %145 = tpu.matmul %116, %7, %cst_58 {dimension_numbers = #tpu.dot_dimension_numbers<[1], [0], [0], [1], [0, 0, 1, 1], [], []>} : vector<1x32xf32>, vector<32x128xf32>, vector<1x128xf32> -> vector<1x128xf32>
    %146 = arith.addf %144, %145 : vector<1x128xf32>
    %147 = math.tanh %146 : vector<1x128xf32>
    %148 = vector.extract_strided_slice %147 {offsets = [0, 0], sizes = [1, 32], strides = [1, 1]} : vector<1x128xf32> to vector<1x32xf32>
    %cst_59 = arith.constant 5.000000e-01 : f32
    %149 = vector.broadcast %cst_59 : f32 to vector<1x32xf32>
    %150 = arith.mulf %149, %148 : vector<1x32xf32>
    %cst_60 = arith.constant 5.000000e-01 : f32
    %151 = vector.broadcast %cst_60 : f32 to vector<1x32xf32>
    %152 = arith.addf %150, %151 : vector<1x32xf32>
    %153 = vector.extract_strided_slice %147 {offsets = [0, 32], sizes = [1, 32], strides = [1, 1]} : vector<1x128xf32> to vector<1x32xf32>
    %cst_61 = arith.constant 5.000000e-01 : f32
    %154 = vector.broadcast %cst_61 : f32 to vector<1x32xf32>
    %155 = arith.mulf %154, %153 : vector<1x32xf32>
    %cst_62 = arith.constant 5.000000e-01 : f32
    %156 = vector.broadcast %cst_62 : f32 to vector<1x32xf32>
    %157 = arith.addf %155, %156 : vector<1x32xf32>
    %158 = vector.extract_strided_slice %147 {offsets = [0, 64], sizes = [1, 32], strides = [1, 1]} : vector<1x128xf32> to vector<1x32xf32>
    %159 = vector.extract_strided_slice %147 {offsets = [0, 96], sizes = [1, 32], strides = [1, 1]} : vector<1x128xf32> to vector<1x32xf32>
    %cst_63 = arith.constant 5.000000e-01 : f32
    %160 = vector.broadcast %cst_63 : f32 to vector<1x32xf32>
    %161 = arith.mulf %160, %159 : vector<1x32xf32>
    %cst_64 = arith.constant 5.000000e-01 : f32
    %162 = vector.broadcast %cst_64 : f32 to vector<1x32xf32>
    %163 = arith.addf %161, %162 : vector<1x32xf32>
    %164 = arith.mulf %157, %114 : vector<1x32xf32>
    %165 = arith.mulf %152, %158 : vector<1x32xf32>
    %166 = arith.addf %164, %165 : vector<1x32xf32>
    %167 = math.tanh %166 : vector<1x32xf32>
    %168 = arith.mulf %163, %167 : vector<1x32xf32>
    %cst_65 = arith.constant dense<0.000000e+00> : vector<1x128xf32>
    %169 = tpu.matmul %116, %9, %cst_65 {dimension_numbers = #tpu.dot_dimension_numbers<[1], [0], [0], [1], [0, 0, 1, 1], [], []>} : vector<1x32xf32>, vector<32x128xf32>, vector<1x128xf32> -> vector<1x128xf32>
    %cst_66 = arith.constant dense<0.000000e+00> : vector<1x128xf32>
    %170 = tpu.matmul %142, %11, %cst_66 {dimension_numbers = #tpu.dot_dimension_numbers<[1], [0], [0], [1], [0, 0, 1, 1], [], []>} : vector<1x32xf32>, vector<32x128xf32>, vector<1x128xf32> -> vector<1x128xf32>
    %171 = arith.addf %169, %170 : vector<1x128xf32>
    %172 = arith.addf %171, %13 : vector<1x128xf32>
    %173 = math.tanh %172 : vector<1x128xf32>
    %174 = vector.extract_strided_slice %173 {offsets = [0, 0], sizes = [1, 32], strides = [1, 1]} : vector<1x128xf32> to vector<1x32xf32>
    %cst_67 = arith.constant 5.000000e-01 : f32
    %175 = vector.broadcast %cst_67 : f32 to vector<1x32xf32>
    %176 = arith.mulf %175, %174 : vector<1x32xf32>
    %cst_68 = arith.constant 5.000000e-01 : f32
    %177 = vector.broadcast %cst_68 : f32 to vector<1x32xf32>
    %178 = arith.addf %176, %177 : vector<1x32xf32>
    %179 = vector.extract_strided_slice %173 {offsets = [0, 32], sizes = [1, 32], strides = [1, 1]} : vector<1x128xf32> to vector<1x32xf32>
    %cst_69 = arith.constant 5.000000e-01 : f32
    %180 = vector.broadcast %cst_69 : f32 to vector<1x32xf32>
    %181 = arith.mulf %180, %179 : vector<1x32xf32>
    %cst_70 = arith.constant 5.000000e-01 : f32
    %182 = vector.broadcast %cst_70 : f32 to vector<1x32xf32>
    %183 = arith.addf %181, %182 : vector<1x32xf32>
    %184 = vector.extract_strided_slice %173 {offsets = [0, 64], sizes = [1, 32], strides = [1, 1]} : vector<1x128xf32> to vector<1x32xf32>
    %185 = vector.extract_strided_slice %173 {offsets = [0, 96], sizes = [1, 32], strides = [1, 1]} : vector<1x128xf32> to vector<1x32xf32>
    %cst_71 = arith.constant 5.000000e-01 : f32
    %186 = vector.broadcast %cst_71 : f32 to vector<1x32xf32>
    %187 = arith.mulf %186, %185 : vector<1x32xf32>
    %cst_72 = arith.constant 5.000000e-01 : f32
    %188 = vector.broadcast %cst_72 : f32 to vector<1x32xf32>
    %189 = arith.addf %187, %188 : vector<1x32xf32>
    %190 = arith.mulf %183, %140 : vector<1x32xf32>
    %191 = arith.mulf %178, %184 : vector<1x32xf32>
    %192 = arith.addf %190, %191 : vector<1x32xf32>
    %193 = math.tanh %192 : vector<1x32xf32>
    %194 = arith.mulf %189, %193 : vector<1x32xf32>
    %c2 = arith.constant 2 : index
    %c0_73 = arith.constant 0 : index
    %195 = vector.load %arg9[%c2, %c0_73] : memref<8x32xf32, #tpu.memory_space<vmem>>, vector<1x32xf32>
    tpu.vector_store %arg9[%c2, %c0_73], %194 {strides = array<i32>} : memref<8x32xf32, #tpu.memory_space<vmem>>, vector<1x32xf32>,
    %196 = vector.extract_strided_slice %6 {offsets = [4, 0], sizes = [1, 128], strides = [1, 1]} : vector<8x128xf32> to vector<1x128xf32>
    %cst_74 = arith.constant dense<0.000000e+00> : vector<1x128xf32>
    %197 = tpu.matmul %168, %7, %cst_74 {dimension_numbers = #tpu.dot_dimension_numbers<[1], [0], [0], [1], [0, 0, 1, 1], [], []>} : vector<1x32xf32>, vector<32x128xf32>, vector<1x128xf32> -> vector<1x128xf32>
    %198 = arith.addf %196, %197 : vector<1x128xf32>
    %199 = math.tanh %198 : vector<1x128xf32>
    %200 = vector.extract_strided_slice %199 {offsets = [0, 0], sizes = [1, 32], strides = [1, 1]} : vector<1x128xf32> to vector<1x32xf32>
    %cst_75 = arith.constant 5.000000e-01 : f32
    %201 = vector.broadcast %cst_75 : f32 to vector<1x32xf32>
    %202 = arith.mulf %201, %200 : vector<1x32xf32>
    %cst_76 = arith.constant 5.000000e-01 : f32
    %203 = vector.broadcast %cst_76 : f32 to vector<1x32xf32>
    %204 = arith.addf %202, %203 : vector<1x32xf32>
    %205 = vector.extract_strided_slice %199 {offsets = [0, 32], sizes = [1, 32], strides = [1, 1]} : vector<1x128xf32> to vector<1x32xf32>
    %cst_77 = arith.constant 5.000000e-01 : f32
    %206 = vector.broadcast %cst_77 : f32 to vector<1x32xf32>
    %207 = arith.mulf %206, %205 : vector<1x32xf32>
    %cst_78 = arith.constant 5.000000e-01 : f32
    %208 = vector.broadcast %cst_78 : f32 to vector<1x32xf32>
    %209 = arith.addf %207, %208 : vector<1x32xf32>
    %210 = vector.extract_strided_slice %199 {offsets = [0, 64], sizes = [1, 32], strides = [1, 1]} : vector<1x128xf32> to vector<1x32xf32>
    %211 = vector.extract_strided_slice %199 {offsets = [0, 96], sizes = [1, 32], strides = [1, 1]} : vector<1x128xf32> to vector<1x32xf32>
    %cst_79 = arith.constant 5.000000e-01 : f32
    %212 = vector.broadcast %cst_79 : f32 to vector<1x32xf32>
    %213 = arith.mulf %212, %211 : vector<1x32xf32>
    %cst_80 = arith.constant 5.000000e-01 : f32
    %214 = vector.broadcast %cst_80 : f32 to vector<1x32xf32>
    %215 = arith.addf %213, %214 : vector<1x32xf32>
    %216 = arith.mulf %209, %166 : vector<1x32xf32>
    %217 = arith.mulf %204, %210 : vector<1x32xf32>
    %218 = arith.addf %216, %217 : vector<1x32xf32>
    %219 = math.tanh %218 : vector<1x32xf32>
    %220 = arith.mulf %215, %219 : vector<1x32xf32>
    %cst_81 = arith.constant dense<0.000000e+00> : vector<1x128xf32>
    %221 = tpu.matmul %168, %9, %cst_81 {dimension_numbers = #tpu.dot_dimension_numbers<[1], [0], [0], [1], [0, 0, 1, 1], [], []>} : vector<1x32xf32>, vector<32x128xf32>, vector<1x128xf32> -> vector<1x128xf32>
    %cst_82 = arith.constant dense<0.000000e+00> : vector<1x128xf32>
    %222 = tpu.matmul %194, %11, %cst_82 {dimension_numbers = #tpu.dot_dimension_numbers<[1], [0], [0], [1], [0, 0, 1, 1], [], []>} : vector<1x32xf32>, vector<32x128xf32>, vector<1x128xf32> -> vector<1x128xf32>
    %223 = arith.addf %221, %222 : vector<1x128xf32>
    %224 = arith.addf %223, %13 : vector<1x128xf32>
    %225 = math.tanh %224 : vector<1x128xf32>
    %226 = vector.extract_strided_slice %225 {offsets = [0, 0], sizes = [1, 32], strides = [1, 1]} : vector<1x128xf32> to vector<1x32xf32>
    %cst_83 = arith.constant 5.000000e-01 : f32
    %227 = vector.broadcast %cst_83 : f32 to vector<1x32xf32>
    %228 = arith.mulf %227, %226 : vector<1x32xf32>
    %cst_84 = arith.constant 5.000000e-01 : f32
    %229 = vector.broadcast %cst_84 : f32 to vector<1x32xf32>
    %230 = arith.addf %228, %229 : vector<1x32xf32>
    %231 = vector.extract_strided_slice %225 {offsets = [0, 32], sizes = [1, 32], strides = [1, 1]} : vector<1x128xf32> to vector<1x32xf32>
    %cst_85 = arith.constant 5.000000e-01 : f32
    %232 = vector.broadcast %cst_85 : f32 to vector<1x32xf32>
    %233 = arith.mulf %232, %231 : vector<1x32xf32>
    %cst_86 = arith.constant 5.000000e-01 : f32
    %234 = vector.broadcast %cst_86 : f32 to vector<1x32xf32>
    %235 = arith.addf %233, %234 : vector<1x32xf32>
    %236 = vector.extract_strided_slice %225 {offsets = [0, 64], sizes = [1, 32], strides = [1, 1]} : vector<1x128xf32> to vector<1x32xf32>
    %237 = vector.extract_strided_slice %225 {offsets = [0, 96], sizes = [1, 32], strides = [1, 1]} : vector<1x128xf32> to vector<1x32xf32>
    %cst_87 = arith.constant 5.000000e-01 : f32
    %238 = vector.broadcast %cst_87 : f32 to vector<1x32xf32>
    %239 = arith.mulf %238, %237 : vector<1x32xf32>
    %cst_88 = arith.constant 5.000000e-01 : f32
    %240 = vector.broadcast %cst_88 : f32 to vector<1x32xf32>
    %241 = arith.addf %239, %240 : vector<1x32xf32>
    %242 = arith.mulf %235, %192 : vector<1x32xf32>
    %243 = arith.mulf %230, %236 : vector<1x32xf32>
    %244 = arith.addf %242, %243 : vector<1x32xf32>
    %245 = math.tanh %244 : vector<1x32xf32>
    %246 = arith.mulf %241, %245 : vector<1x32xf32>
    %c3 = arith.constant 3 : index
    %c0_89 = arith.constant 0 : index
    %247 = vector.load %arg9[%c3, %c0_89] : memref<8x32xf32, #tpu.memory_space<vmem>>, vector<1x32xf32>
    tpu.vector_store %arg9[%c3, %c0_89], %246 {strides = array<i32>} : memref<8x32xf32, #tpu.memory_space<vmem>>, vector<1x32xf32>,
    %248 = vector.extract_strided_slice %6 {offsets = [5, 0], sizes = [1, 128], strides = [1, 1]} : vector<8x128xf32> to vector<1x128xf32>
    %cst_90 = arith.constant dense<0.000000e+00> : vector<1x128xf32>
    %249 = tpu.matmul %220, %7, %cst_90 {dimension_numbers = #tpu.dot_dimension_numbers<[1], [0], [0], [1], [0, 0, 1, 1], [], []>} : vector<1x32xf32>, vector<32x128xf32>, vector<1x128xf32> -> vector<1x128xf32>
    %250 = arith.addf %248, %249 : vector<1x128xf32>
    %251 = math.tanh %250 : vector<1x128xf32>
    %252 = vector.extract_strided_slice %251 {offsets = [0, 0], sizes = [1, 32], strides = [1, 1]} : vector<1x128xf32> to vector<1x32xf32>
    %cst_91 = arith.constant 5.000000e-01 : f32
    %253 = vector.broadcast %cst_91 : f32 to vector<1x32xf32>
    %254 = arith.mulf %253, %252 : vector<1x32xf32>
    %cst_92 = arith.constant 5.000000e-01 : f32
    %255 = vector.broadcast %cst_92 : f32 to vector<1x32xf32>
    %256 = arith.addf %254, %255 : vector<1x32xf32>
    %257 = vector.extract_strided_slice %251 {offsets = [0, 32], sizes = [1, 32], strides = [1, 1]} : vector<1x128xf32> to vector<1x32xf32>
    %cst_93 = arith.constant 5.000000e-01 : f32
    %258 = vector.broadcast %cst_93 : f32 to vector<1x32xf32>
    %259 = arith.mulf %258, %257 : vector<1x32xf32>
    %cst_94 = arith.constant 5.000000e-01 : f32
    %260 = vector.broadcast %cst_94 : f32 to vector<1x32xf32>
    %261 = arith.addf %259, %260 : vector<1x32xf32>
    %262 = vector.extract_strided_slice %251 {offsets = [0, 64], sizes = [1, 32], strides = [1, 1]} : vector<1x128xf32> to vector<1x32xf32>
    %263 = vector.extract_strided_slice %251 {offsets = [0, 96], sizes = [1, 32], strides = [1, 1]} : vector<1x128xf32> to vector<1x32xf32>
    %cst_95 = arith.constant 5.000000e-01 : f32
    %264 = vector.broadcast %cst_95 : f32 to vector<1x32xf32>
    %265 = arith.mulf %264, %263 : vector<1x32xf32>
    %cst_96 = arith.constant 5.000000e-01 : f32
    %266 = vector.broadcast %cst_96 : f32 to vector<1x32xf32>
    %267 = arith.addf %265, %266 : vector<1x32xf32>
    %268 = arith.mulf %261, %218 : vector<1x32xf32>
    %269 = arith.mulf %256, %262 : vector<1x32xf32>
    %270 = arith.addf %268, %269 : vector<1x32xf32>
    %271 = math.tanh %270 : vector<1x32xf32>
    %272 = arith.mulf %267, %271 : vector<1x32xf32>
    %cst_97 = arith.constant dense<0.000000e+00> : vector<1x128xf32>
    %273 = tpu.matmul %220, %9, %cst_97 {dimension_numbers = #tpu.dot_dimension_numbers<[1], [0], [0], [1], [0, 0, 1, 1], [], []>} : vector<1x32xf32>, vector<32x128xf32>, vector<1x128xf32> -> vector<1x128xf32>
    %cst_98 = arith.constant dense<0.000000e+00> : vector<1x128xf32>
    %274 = tpu.matmul %246, %11, %cst_98 {dimension_numbers = #tpu.dot_dimension_numbers<[1], [0], [0], [1], [0, 0, 1, 1], [], []>} : vector<1x32xf32>, vector<32x128xf32>, vector<1x128xf32> -> vector<1x128xf32>
    %275 = arith.addf %273, %274 : vector<1x128xf32>
    %276 = arith.addf %275, %13 : vector<1x128xf32>
    %277 = math.tanh %276 : vector<1x128xf32>
    %278 = vector.extract_strided_slice %277 {offsets = [0, 0], sizes = [1, 32], strides = [1, 1]} : vector<1x128xf32> to vector<1x32xf32>
    %cst_99 = arith.constant 5.000000e-01 : f32
    %279 = vector.broadcast %cst_99 : f32 to vector<1x32xf32>
    %280 = arith.mulf %279, %278 : vector<1x32xf32>
    %cst_100 = arith.constant 5.000000e-01 : f32
    %281 = vector.broadcast %cst_100 : f32 to vector<1x32xf32>
    %282 = arith.addf %280, %281 : vector<1x32xf32>
    %283 = vector.extract_strided_slice %277 {offsets = [0, 32], sizes = [1, 32], strides = [1, 1]} : vector<1x128xf32> to vector<1x32xf32>
    %cst_101 = arith.constant 5.000000e-01 : f32
    %284 = vector.broadcast %cst_101 : f32 to vector<1x32xf32>
    %285 = arith.mulf %284, %283 : vector<1x32xf32>
    %cst_102 = arith.constant 5.000000e-01 : f32
    %286 = vector.broadcast %cst_102 : f32 to vector<1x32xf32>
    %287 = arith.addf %285, %286 : vector<1x32xf32>
    %288 = vector.extract_strided_slice %277 {offsets = [0, 64], sizes = [1, 32], strides = [1, 1]} : vector<1x128xf32> to vector<1x32xf32>
    %289 = vector.extract_strided_slice %277 {offsets = [0, 96], sizes = [1, 32], strides = [1, 1]} : vector<1x128xf32> to vector<1x32xf32>
    %cst_103 = arith.constant 5.000000e-01 : f32
    %290 = vector.broadcast %cst_103 : f32 to vector<1x32xf32>
    %291 = arith.mulf %290, %289 : vector<1x32xf32>
    %cst_104 = arith.constant 5.000000e-01 : f32
    %292 = vector.broadcast %cst_104 : f32 to vector<1x32xf32>
    %293 = arith.addf %291, %292 : vector<1x32xf32>
    %294 = arith.mulf %287, %244 : vector<1x32xf32>
    %295 = arith.mulf %282, %288 : vector<1x32xf32>
    %296 = arith.addf %294, %295 : vector<1x32xf32>
    %297 = math.tanh %296 : vector<1x32xf32>
    %298 = arith.mulf %293, %297 : vector<1x32xf32>
    %c4 = arith.constant 4 : index
    %c0_105 = arith.constant 0 : index
    %299 = vector.load %arg9[%c4, %c0_105] : memref<8x32xf32, #tpu.memory_space<vmem>>, vector<1x32xf32>
    tpu.vector_store %arg9[%c4, %c0_105], %298 {strides = array<i32>} : memref<8x32xf32, #tpu.memory_space<vmem>>, vector<1x32xf32>,
    %300 = vector.extract_strided_slice %6 {offsets = [6, 0], sizes = [1, 128], strides = [1, 1]} : vector<8x128xf32> to vector<1x128xf32>
    %cst_106 = arith.constant dense<0.000000e+00> : vector<1x128xf32>
    %301 = tpu.matmul %272, %7, %cst_106 {dimension_numbers = #tpu.dot_dimension_numbers<[1], [0], [0], [1], [0, 0, 1, 1], [], []>} : vector<1x32xf32>, vector<32x128xf32>, vector<1x128xf32> -> vector<1x128xf32>
    %302 = arith.addf %300, %301 : vector<1x128xf32>
    %303 = math.tanh %302 : vector<1x128xf32>
    %304 = vector.extract_strided_slice %303 {offsets = [0, 0], sizes = [1, 32], strides = [1, 1]} : vector<1x128xf32> to vector<1x32xf32>
    %cst_107 = arith.constant 5.000000e-01 : f32
    %305 = vector.broadcast %cst_107 : f32 to vector<1x32xf32>
    %306 = arith.mulf %305, %304 : vector<1x32xf32>
    %cst_108 = arith.constant 5.000000e-01 : f32
    %307 = vector.broadcast %cst_108 : f32 to vector<1x32xf32>
    %308 = arith.addf %306, %307 : vector<1x32xf32>
    %309 = vector.extract_strided_slice %303 {offsets = [0, 32], sizes = [1, 32], strides = [1, 1]} : vector<1x128xf32> to vector<1x32xf32>
    %cst_109 = arith.constant 5.000000e-01 : f32
    %310 = vector.broadcast %cst_109 : f32 to vector<1x32xf32>
    %311 = arith.mulf %310, %309 : vector<1x32xf32>
    %cst_110 = arith.constant 5.000000e-01 : f32
    %312 = vector.broadcast %cst_110 : f32 to vector<1x32xf32>
    %313 = arith.addf %311, %312 : vector<1x32xf32>
    %314 = vector.extract_strided_slice %303 {offsets = [0, 64], sizes = [1, 32], strides = [1, 1]} : vector<1x128xf32> to vector<1x32xf32>
    %315 = vector.extract_strided_slice %303 {offsets = [0, 96], sizes = [1, 32], strides = [1, 1]} : vector<1x128xf32> to vector<1x32xf32>
    %cst_111 = arith.constant 5.000000e-01 : f32
    %316 = vector.broadcast %cst_111 : f32 to vector<1x32xf32>
    %317 = arith.mulf %316, %315 : vector<1x32xf32>
    %cst_112 = arith.constant 5.000000e-01 : f32
    %318 = vector.broadcast %cst_112 : f32 to vector<1x32xf32>
    %319 = arith.addf %317, %318 : vector<1x32xf32>
    %320 = arith.mulf %313, %270 : vector<1x32xf32>
    %321 = arith.mulf %308, %314 : vector<1x32xf32>
    %322 = arith.addf %320, %321 : vector<1x32xf32>
    %323 = math.tanh %322 : vector<1x32xf32>
    %324 = arith.mulf %319, %323 : vector<1x32xf32>
    %cst_113 = arith.constant dense<0.000000e+00> : vector<1x128xf32>
    %325 = tpu.matmul %272, %9, %cst_113 {dimension_numbers = #tpu.dot_dimension_numbers<[1], [0], [0], [1], [0, 0, 1, 1], [], []>} : vector<1x32xf32>, vector<32x128xf32>, vector<1x128xf32> -> vector<1x128xf32>
    %cst_114 = arith.constant dense<0.000000e+00> : vector<1x128xf32>
    %326 = tpu.matmul %298, %11, %cst_114 {dimension_numbers = #tpu.dot_dimension_numbers<[1], [0], [0], [1], [0, 0, 1, 1], [], []>} : vector<1x32xf32>, vector<32x128xf32>, vector<1x128xf32> -> vector<1x128xf32>
    %327 = arith.addf %325, %326 : vector<1x128xf32>
    %328 = arith.addf %327, %13 : vector<1x128xf32>
    %329 = math.tanh %328 : vector<1x128xf32>
    %330 = vector.extract_strided_slice %329 {offsets = [0, 0], sizes = [1, 32], strides = [1, 1]} : vector<1x128xf32> to vector<1x32xf32>
    %cst_115 = arith.constant 5.000000e-01 : f32
    %331 = vector.broadcast %cst_115 : f32 to vector<1x32xf32>
    %332 = arith.mulf %331, %330 : vector<1x32xf32>
    %cst_116 = arith.constant 5.000000e-01 : f32
    %333 = vector.broadcast %cst_116 : f32 to vector<1x32xf32>
    %334 = arith.addf %332, %333 : vector<1x32xf32>
    %335 = vector.extract_strided_slice %329 {offsets = [0, 32], sizes = [1, 32], strides = [1, 1]} : vector<1x128xf32> to vector<1x32xf32>
    %cst_117 = arith.constant 5.000000e-01 : f32
    %336 = vector.broadcast %cst_117 : f32 to vector<1x32xf32>
    %337 = arith.mulf %336, %335 : vector<1x32xf32>
    %cst_118 = arith.constant 5.000000e-01 : f32
    %338 = vector.broadcast %cst_118 : f32 to vector<1x32xf32>
    %339 = arith.addf %337, %338 : vector<1x32xf32>
    %340 = vector.extract_strided_slice %329 {offsets = [0, 64], sizes = [1, 32], strides = [1, 1]} : vector<1x128xf32> to vector<1x32xf32>
    %341 = vector.extract_strided_slice %329 {offsets = [0, 96], sizes = [1, 32], strides = [1, 1]} : vector<1x128xf32> to vector<1x32xf32>
    %cst_119 = arith.constant 5.000000e-01 : f32
    %342 = vector.broadcast %cst_119 : f32 to vector<1x32xf32>
    %343 = arith.mulf %342, %341 : vector<1x32xf32>
    %cst_120 = arith.constant 5.000000e-01 : f32
    %344 = vector.broadcast %cst_120 : f32 to vector<1x32xf32>
    %345 = arith.addf %343, %344 : vector<1x32xf32>
    %346 = arith.mulf %339, %296 : vector<1x32xf32>
    %347 = arith.mulf %334, %340 : vector<1x32xf32>
    %348 = arith.addf %346, %347 : vector<1x32xf32>
    %349 = math.tanh %348 : vector<1x32xf32>
    %350 = arith.mulf %345, %349 : vector<1x32xf32>
    %c5 = arith.constant 5 : index
    %c0_121 = arith.constant 0 : index
    %351 = vector.load %arg9[%c5, %c0_121] : memref<8x32xf32, #tpu.memory_space<vmem>>, vector<1x32xf32>
    tpu.vector_store %arg9[%c5, %c0_121], %350 {strides = array<i32>} : memref<8x32xf32, #tpu.memory_space<vmem>>, vector<1x32xf32>,
    %352 = vector.extract_strided_slice %6 {offsets = [7, 0], sizes = [1, 128], strides = [1, 1]} : vector<8x128xf32> to vector<1x128xf32>
    %cst_122 = arith.constant dense<0.000000e+00> : vector<1x128xf32>
    %353 = tpu.matmul %324, %7, %cst_122 {dimension_numbers = #tpu.dot_dimension_numbers<[1], [0], [0], [1], [0, 0, 1, 1], [], []>} : vector<1x32xf32>, vector<32x128xf32>, vector<1x128xf32> -> vector<1x128xf32>
    %354 = arith.addf %352, %353 : vector<1x128xf32>
    %355 = math.tanh %354 : vector<1x128xf32>
    %356 = vector.extract_strided_slice %355 {offsets = [0, 0], sizes = [1, 32], strides = [1, 1]} : vector<1x128xf32> to vector<1x32xf32>
    %cst_123 = arith.constant 5.000000e-01 : f32
    %357 = vector.broadcast %cst_123 : f32 to vector<1x32xf32>
    %358 = arith.mulf %357, %356 : vector<1x32xf32>
    %cst_124 = arith.constant 5.000000e-01 : f32
    %359 = vector.broadcast %cst_124 : f32 to vector<1x32xf32>
    %360 = arith.addf %358, %359 : vector<1x32xf32>
    %361 = vector.extract_strided_slice %355 {offsets = [0, 32], sizes = [1, 32], strides = [1, 1]} : vector<1x128xf32> to vector<1x32xf32>
    %cst_125 = arith.constant 5.000000e-01 : f32
    %362 = vector.broadcast %cst_125 : f32 to vector<1x32xf32>
    %363 = arith.mulf %362, %361 : vector<1x32xf32>
    %cst_126 = arith.constant 5.000000e-01 : f32
    %364 = vector.broadcast %cst_126 : f32 to vector<1x32xf32>
    %365 = arith.addf %363, %364 : vector<1x32xf32>
    %366 = vector.extract_strided_slice %355 {offsets = [0, 64], sizes = [1, 32], strides = [1, 1]} : vector<1x128xf32> to vector<1x32xf32>
    %367 = vector.extract_strided_slice %355 {offsets = [0, 96], sizes = [1, 32], strides = [1, 1]} : vector<1x128xf32> to vector<1x32xf32>
    %cst_127 = arith.constant 5.000000e-01 : f32
    %368 = vector.broadcast %cst_127 : f32 to vector<1x32xf32>
    %369 = arith.mulf %368, %367 : vector<1x32xf32>
    %cst_128 = arith.constant 5.000000e-01 : f32
    %370 = vector.broadcast %cst_128 : f32 to vector<1x32xf32>
    %371 = arith.addf %369, %370 : vector<1x32xf32>
    %372 = arith.mulf %365, %322 : vector<1x32xf32>
    %373 = arith.mulf %360, %366 : vector<1x32xf32>
    %374 = arith.addf %372, %373 : vector<1x32xf32>
    %375 = math.tanh %374 : vector<1x32xf32>
    %376 = arith.mulf %371, %375 : vector<1x32xf32>
    %cst_129 = arith.constant dense<0.000000e+00> : vector<1x128xf32>
    %377 = tpu.matmul %324, %9, %cst_129 {dimension_numbers = #tpu.dot_dimension_numbers<[1], [0], [0], [1], [0, 0, 1, 1], [], []>} : vector<1x32xf32>, vector<32x128xf32>, vector<1x128xf32> -> vector<1x128xf32>
    %cst_130 = arith.constant dense<0.000000e+00> : vector<1x128xf32>
    %378 = tpu.matmul %350, %11, %cst_130 {dimension_numbers = #tpu.dot_dimension_numbers<[1], [0], [0], [1], [0, 0, 1, 1], [], []>} : vector<1x32xf32>, vector<32x128xf32>, vector<1x128xf32> -> vector<1x128xf32>
    %379 = arith.addf %377, %378 : vector<1x128xf32>
    %380 = arith.addf %379, %13 : vector<1x128xf32>
    %381 = math.tanh %380 : vector<1x128xf32>
    %382 = vector.extract_strided_slice %381 {offsets = [0, 0], sizes = [1, 32], strides = [1, 1]} : vector<1x128xf32> to vector<1x32xf32>
    %cst_131 = arith.constant 5.000000e-01 : f32
    %383 = vector.broadcast %cst_131 : f32 to vector<1x32xf32>
    %384 = arith.mulf %383, %382 : vector<1x32xf32>
    %cst_132 = arith.constant 5.000000e-01 : f32
    %385 = vector.broadcast %cst_132 : f32 to vector<1x32xf32>
    %386 = arith.addf %384, %385 : vector<1x32xf32>
    %387 = vector.extract_strided_slice %381 {offsets = [0, 32], sizes = [1, 32], strides = [1, 1]} : vector<1x128xf32> to vector<1x32xf32>
    %cst_133 = arith.constant 5.000000e-01 : f32
    %388 = vector.broadcast %cst_133 : f32 to vector<1x32xf32>
    %389 = arith.mulf %388, %387 : vector<1x32xf32>
    %cst_134 = arith.constant 5.000000e-01 : f32
    %390 = vector.broadcast %cst_134 : f32 to vector<1x32xf32>
    %391 = arith.addf %389, %390 : vector<1x32xf32>
    %392 = vector.extract_strided_slice %381 {offsets = [0, 64], sizes = [1, 32], strides = [1, 1]} : vector<1x128xf32> to vector<1x32xf32>
    %393 = vector.extract_strided_slice %381 {offsets = [0, 96], sizes = [1, 32], strides = [1, 1]} : vector<1x128xf32> to vector<1x32xf32>
    %cst_135 = arith.constant 5.000000e-01 : f32
    %394 = vector.broadcast %cst_135 : f32 to vector<1x32xf32>
    %395 = arith.mulf %394, %393 : vector<1x32xf32>
    %cst_136 = arith.constant 5.000000e-01 : f32
    %396 = vector.broadcast %cst_136 : f32 to vector<1x32xf32>
    %397 = arith.addf %395, %396 : vector<1x32xf32>
    %398 = arith.mulf %391, %348 : vector<1x32xf32>
    %399 = arith.mulf %386, %392 : vector<1x32xf32>
    %400 = arith.addf %398, %399 : vector<1x32xf32>
    %401 = math.tanh %400 : vector<1x32xf32>
    %402 = arith.mulf %397, %401 : vector<1x32xf32>
    %c6 = arith.constant 6 : index
    %c0_137 = arith.constant 0 : index
    %403 = vector.load %arg9[%c6, %c0_137] : memref<8x32xf32, #tpu.memory_space<vmem>>, vector<1x32xf32>
    tpu.vector_store %arg9[%c6, %c0_137], %402 {strides = array<i32>} : memref<8x32xf32, #tpu.memory_space<vmem>>, vector<1x32xf32>,
    %cst_138 = arith.constant dense<0.000000e+00> : vector<1x128xf32>
    %404 = tpu.matmul %376, %9, %cst_138 {dimension_numbers = #tpu.dot_dimension_numbers<[1], [0], [0], [1], [0, 0, 1, 1], [], []>} : vector<1x32xf32>, vector<32x128xf32>, vector<1x128xf32> -> vector<1x128xf32>
    %cst_139 = arith.constant dense<0.000000e+00> : vector<1x128xf32>
    %405 = tpu.matmul %402, %11, %cst_139 {dimension_numbers = #tpu.dot_dimension_numbers<[1], [0], [0], [1], [0, 0, 1, 1], [], []>} : vector<1x32xf32>, vector<32x128xf32>, vector<1x128xf32> -> vector<1x128xf32>
    %406 = arith.addf %404, %405 : vector<1x128xf32>
    %407 = arith.addf %406, %13 : vector<1x128xf32>
    %408 = math.tanh %407 : vector<1x128xf32>
    %409 = vector.extract_strided_slice %408 {offsets = [0, 0], sizes = [1, 32], strides = [1, 1]} : vector<1x128xf32> to vector<1x32xf32>
    %cst_140 = arith.constant 5.000000e-01 : f32
    %410 = vector.broadcast %cst_140 : f32 to vector<1x32xf32>
    %411 = arith.mulf %410, %409 : vector<1x32xf32>
    %cst_141 = arith.constant 5.000000e-01 : f32
    %412 = vector.broadcast %cst_141 : f32 to vector<1x32xf32>
    %413 = arith.addf %411, %412 : vector<1x32xf32>
    %414 = vector.extract_strided_slice %408 {offsets = [0, 32], sizes = [1, 32], strides = [1, 1]} : vector<1x128xf32> to vector<1x32xf32>
    %cst_142 = arith.constant 5.000000e-01 : f32
    %415 = vector.broadcast %cst_142 : f32 to vector<1x32xf32>
    %416 = arith.mulf %415, %414 : vector<1x32xf32>
    %cst_143 = arith.constant 5.000000e-01 : f32
    %417 = vector.broadcast %cst_143 : f32 to vector<1x32xf32>
    %418 = arith.addf %416, %417 : vector<1x32xf32>
    %419 = vector.extract_strided_slice %408 {offsets = [0, 64], sizes = [1, 32], strides = [1, 1]} : vector<1x128xf32> to vector<1x32xf32>
    %420 = vector.extract_strided_slice %408 {offsets = [0, 96], sizes = [1, 32], strides = [1, 1]} : vector<1x128xf32> to vector<1x32xf32>
    %cst_144 = arith.constant 5.000000e-01 : f32
    %421 = vector.broadcast %cst_144 : f32 to vector<1x32xf32>
    %422 = arith.mulf %421, %420 : vector<1x32xf32>
    %cst_145 = arith.constant 5.000000e-01 : f32
    %423 = vector.broadcast %cst_145 : f32 to vector<1x32xf32>
    %424 = arith.addf %422, %423 : vector<1x32xf32>
    %425 = arith.mulf %418, %400 : vector<1x32xf32>
    %426 = arith.mulf %413, %419 : vector<1x32xf32>
    %427 = arith.addf %425, %426 : vector<1x32xf32>
    %428 = math.tanh %427 : vector<1x32xf32>
    %429 = arith.mulf %424, %428 : vector<1x32xf32>
    %c7 = arith.constant 7 : index
    %c0_146 = arith.constant 0 : index
    %430 = vector.load %arg9[%c7, %c0_146] : memref<8x32xf32, #tpu.memory_space<vmem>>, vector<1x32xf32>
    tpu.vector_store %arg9[%c7, %c0_146], %429 {strides = array<i32>} : memref<8x32xf32, #tpu.memory_space<vmem>>, vector<1x32xf32>,
    %c0_147 = arith.constant 0 : index
    %c0_148 = arith.constant 0 : index
    %431 = vector.load %arg9[%c0_147, %c0_148] : memref<8x32xf32, #tpu.memory_space<vmem>>, vector<8x32xf32>
    %c0_149 = arith.constant 0 : index
    %c0_150 = arith.constant 0 : index
    %432 = vector.load %arg6[%c0_149, %c0_150] : memref<32x128xf32, #tpu.memory_space<vmem>>, vector<32x128xf32>
    %cst_151 = arith.constant dense<0.000000e+00> : vector<8x128xf32>
    %433 = tpu.matmul %431, %432, %cst_151 {dimension_numbers = #tpu.dot_dimension_numbers<[1], [0], [0], [1], [0, 0, 1, 1], [], []>} : vector<8x32xf32>, vector<32x128xf32>, vector<8x128xf32> -> vector<8x128xf32>
    %c0_152 = arith.constant 0 : index
    %c0_153 = arith.constant 0 : index
    %434 = vector.load %arg7[%c0_152, %c0_153] : memref<1x128xf32, #tpu.memory_space<vmem>>, vector<1x128xf32>
    %435 = vector.broadcast %434 : vector<1x128xf32> to vector<8x128xf32>
    %436 = arith.addf %433, %435 : vector<8x128xf32>
    %cst_154 = arith.constant dense<0xFF800000> : vector<8xf32>
    %437 = vector.multi_reduction <maximumf>, %436, %cst_154 [1] : vector<8x128xf32> to vector<8xf32>
    %438 = vector.shape_cast %437 : vector<8xf32> to vector<8x1xf32>
    %439 = vector.broadcast %438 : vector<8x1xf32> to vector<8x128xf32>
    %440 = arith.subf %436, %439 : vector<8x128xf32>
    %441 = math.exp %440 : vector<8x128xf32>
    %cst_155 = arith.constant dense<0.000000e+00> : vector<8xf32>
    %442 = vector.multi_reduction <add>, %441, %cst_155 [1] : vector<8x128xf32> to vector<8xf32>
    %443 = vector.shape_cast %442 : vector<8xf32> to vector<8x1xf32>
    %444 = math.log %443 : vector<8x1xf32>
    %445 = arith.addf %438, %444 : vector<8x1xf32>
    %446 = vector.broadcast %445 : vector<8x1xf32> to vector<8x128xf32>
    %447 = arith.subf %436, %446 : vector<8x128xf32>
    %c0_156 = arith.constant 0 : index
    %c0_157 = arith.constant 0 : index
    %448 = vector.load %arg8[%c0_156, %c0_157] : memref<8x128xf32, #tpu.memory_space<vmem>>, vector<8x128xf32>
    tpu.vector_store %arg8[%c0_156, %c0_157], %447 {strides = array<i32>} : memref<8x128xf32, #tpu.memory_space<vmem>>, vector<8x128xf32>,
    return
  }
}

</mosaic_0001>

<llo_original>
// kernel: tpu_custom_call.1
$region0: #{tpu_custom_call.1}
  #allocation0 [shape = 'u32[]', space=smem, size = 0x4, offset = 0x4, fixed_abs, tag = 'smem constant byte address 0x4 - core index']
  #allocation1 [shape = 'u32[144,128]{1,0:T(1,128)}', space=vmem, size = 0x12000, scoped, tag = 'internal scratch']
  #allocation2 [shape = 'f32[8,32]{1,0:T(8,128)}', space=vmem, size = 0x1000, scoped, tag = 'scratch operand']
  %s0 = inlined_call_operand.hbm [shape: f32[8,32], index: 0, kind: input, shape index: {}]
  %s1 = inlined_call_operand.hbm [shape: f32[32,128], index: 1, kind: input, shape index: {}]
  %s2 = inlined_call_operand.hbm [shape: f32[32,128], index: 2, kind: input, shape index: {}]
  %s3 = inlined_call_operand.hbm [shape: f32[1,32,128], index: 3, kind: input, shape index: {}]
  %s4 = inlined_call_operand.hbm [shape: f32[1,32,128], index: 4, kind: input, shape index: {}]
  %s5 = inlined_call_operand.vmem [shape: f32[2,1,128], index: 5, kind: input, shape index: {}]
  %s6 = inlined_call_operand.hbm [shape: f32[32,128], index: 6, kind: input, shape index: {}]
  %s7 = inlined_call_operand.vmem [shape: f32[1,128], index: 7, kind: input, shape index: {}]
  %s8 = inlined_call_operand.hbm [shape: f32[8,128], index: 8, kind: output, shape index: {}]
  %s9 = sld [smem:[#allocation0]]
  $region66: #{tpu_custom_call.1} parent=0
    _
  %s11 = ssub.s32 1, %s9
  %s12 = scalar_select 0, %s11, %s9
  $region1: #{tpu_custom_call.1} parent=0
    #allocation3 [shape = 'u8[4096]{0}', space=vmem, size = 0x1000, scoped, tag = 'input window, operand 0, single buffered']
    #allocation4 [shape = 's32[1]{0}', space=sflag, size = 0x4, scoped, tag = 'scoped memory for tpu_custom_call.1']
    #allocation5 [shape = 's32[1]{0}', space=sflag, size = 0x4, scoped, tag = 'scoped memory for tpu_custom_call.1']
    #allocation6 [shape = 'u8[16384]{0}', space=vmem, size = 0x4000, scoped, tag = 'input window, operand 1, single buffered']
    #allocation7 [shape = 's32[1]{0}', space=sflag, size = 0x4, scoped, tag = 'scoped memory for tpu_custom_call.1']
    #allocation8 [shape = 'u8[16384]{0}', space=vmem, size = 0x4000, scoped, tag = 'input window, operand 2, single buffered']
    #allocation9 [shape = 'u8[16384]{0}', space=vmem, size = 0x4000, scoped, tag = 'input window, operand 3, single buffered']
    #allocation10 [shape = 's32[1]{0}', space=sflag, size = 0x4, scoped, tag = 'scoped memory for tpu_custom_call.1']
    #allocation11 [shape = 'u8[16384]{0}', space=vmem, size = 0x4000, scoped, tag = 'input window, operand 4, single buffered']
    #allocation12 [shape = 'u8[16384]{0}', space=vmem, size = 0x4000, scoped, tag = 'input window, operand 6, single buffered']
    #allocation13 [shape = 's32[1]{0}', space=sflag, size = 0x4, scoped, tag = 'scoped memory for tpu_custom_call.1']
    #allocation14 [shape = 'u8[4096]{0}', space=vmem, size = 0x1000, scoped, tag = 'output window, operand 0, single buffered']
    %13 = vsyncpa [#allocation4], 0
    %14 = vsyncpa [#allocation7], 0
    %15 = vsyncpa [#allocation10], 0
    %16 = vsyncpa [#allocation13], 0
    %17 = vsyncpa [#allocation5], 0
    // Predicated region
    $region2: #{tpu_custom_call.1} parent=1 // pred_check
      _
    $region3: #{tpu_custom_call.1} parent=1 // pred_check_branch
      %19 = sbr.rel (0) target = $region5
    $region4: #{tpu_custom_call.1} parent=1 // pred_region
      %s21 = ssub.s32 128, 128
      %22 = vsyncadd [#allocation4], %s21
      %s24 = sshll.u32 [#allocation3], 4
      %s25 = int_to_ptr.vmem [resolvable:$true] %s24
      %27 = dma.hbm_to_vmem [thread:$0]  %s0, 128, %s25, [#allocation4]
    $region5: #{tpu_custom_call.1} parent=1 // pred_fallthru
      _
    // Predicated region
    $region6: #{tpu_custom_call.1} parent=1 // pred_check
      _
    $region7: #{tpu_custom_call.1} parent=1 // pred_check_branch
      %29 = sbr.rel (0) target = $region9
    $region8: #{tpu_custom_call.1} parent=1 // pred_region
      %s31 = ssub.s32 512, 512
      %32 = vsyncadd [#allocation7], %s31
      %s33 = sshll.u32 [#allocation6], 4
      %s34 = int_to_ptr.vmem [resolvable:$true] %s33
      %39 = dma.hbm_to_vmem [thread:$0]  %s1, 512, %s34, [#allocation7], 128, 128, 8
    $region9: #{tpu_custom_call.1} parent=1 // pred_fallthru
      _
    // Predicated region
    $region10: #{tpu_custom_call.1} parent=1 // pred_check
      _
    $region11: #{tpu_custom_call.1} parent=1 // pred_check_branch
      %41 = sbr.rel (0) target = $region13
    $region12: #{tpu_custom_call.1} parent=1 // pred_region
      %s43 = ssub.s32 512, 512
      %44 = vsyncadd [#allocation7], %s43
      %s45 = sshll.u32 [#allocation8], 4
      %s46 = int_to_ptr.vmem [resolvable:$true] %s45
      %51 = dma.hbm_to_vmem [thread:$0]  %s2, 512, %s46, [#allocation7], 128, 128, 8
    $region13: #{tpu_custom_call.1} parent=1 // pred_fallthru
      _
    // Predicated region
    $region14: #{tpu_custom_call.1} parent=1 // pred_check
      _
    $region15: #{tpu_custom_call.1} parent=1 // pred_check_branch
      %53 = sbr.rel (0) target = $region17
    $region16: #{tpu_custom_call.1} parent=1 // pred_region
      %s55 = ssub.s32 512, 512
      %56 = vsyncadd [#allocation10], %s55
      %s57 = sshll.u32 [#allocation9], 4
      %s58 = int_to_ptr.vmem [resolvable:$true] %s57
      %63 = dma.hbm_to_vmem [thread:$0]  %s3, 512, %s58, [#allocation10], 128, 128, 8
    $region17: #{tpu_custom_call.1} parent=1 // pred_fallthru
      _
    // Predicated region
    $region18: #{tpu_custom_call.1} parent=1 // pred_check
      _
    $region19: #{tpu_custom_call.1} parent=1 // pred_check_branch
      %65 = sbr.rel (0) target = $region21
    $region20: #{tpu_custom_call.1} parent=1 // pred_region
      %s67 = ssub.s32 512, 512
      %68 = vsyncadd [#allocation10], %s67
      %s69 = sshll.u32 [#allocation11], 4
      %s70 = int_to_ptr.vmem [resolvable:$true] %s69
      %75 = dma.hbm_to_vmem [thread:$0]  %s4, 512, %s70, [#allocation10], 128, 128, 8
    $region21: #{tpu_custom_call.1} parent=1 // pred_fallthru
      _
    // Predicated region
    $region22: #{tpu_custom_call.1} parent=1 // pred_check
      _
    $region23: #{tpu_custom_call.1} parent=1 // pred_check_branch
      %77 = sbr.rel (0) target = $region25
    $region24: #{tpu_custom_call.1} parent=1 // pred_region
      _
    $region25: #{tpu_custom_call.1} parent=1 // pred_fallthru
      _
    // Predicated region
    $region26: #{tpu_custom_call.1} parent=1 // pred_check
      _
    $region27: #{tpu_custom_call.1} parent=1 // pred_check_branch
      %79 = sbr.rel (0) target = $region29
    $region28: #{tpu_custom_call.1} parent=1 // pred_region
      %s81 = ssub.s32 512, 512
      %82 = vsyncadd [#allocation13], %s81
      %s83 = sshll.u32 [#allocation12], 4
      %s84 = int_to_ptr.vmem [resolvable:$true] %s83
      %89 = dma.hbm_to_vmem [thread:$0]  %s6, 512, %s84, [#allocation13], 128, 128, 8
    $region29: #{tpu_custom_call.1} parent=1 // pred_fallthru
      _
    // Predicated region
    $region30: #{tpu_custom_call.1} parent=1 // pred_check
      _
    $region31: #{tpu_custom_call.1} parent=1 // pred_check_branch
      %91 = sbr.rel (0) target = $region33
    $region32: #{tpu_custom_call.1} parent=1 // pred_region
      _
    $region33: #{tpu_custom_call.1} parent=1 // pred_fallthru
      _
    // Predicated region
    $region34: #{tpu_custom_call.1} parent=1 // pred_check
      _
    $region35: #{tpu_custom_call.1} parent=1 // pred_check_branch
      %93 = sbr.rel (0) target = $region37
    $region36: #{tpu_custom_call.1} parent=1 // pred_region
      %94 = dma.done [#allocation4], 128
    $region37: #{tpu_custom_call.1} parent=1 // pred_fallthru
      _
    // Predicated region
    $region38: #{tpu_custom_call.1} parent=1 // pred_check
      _
    $region39: #{tpu_custom_call.1} parent=1 // pred_check_branch
      %96 = sbr.rel (0) target = $region41
    $region40: #{tpu_custom_call.1} parent=1 // pred_region
      %97 = dma.done [#allocation7], 512
    $region41: #{tpu_custom_call.1} parent=1 // pred_fallthru
      _
    // Predicated region
    $region42: #{tpu_custom_call.1} parent=1 // pred_check
      _
    $region43: #{tpu_custom_call.1} parent=1 // pred_check_branch
      %99 = sbr.rel (0) target = $region45
    $region44: #{tpu_custom_call.1} parent=1 // pred_region
      %100 = dma.done [#allocation7], 512
    $region45: #{tpu_custom_call.1} parent=1 // pred_fallthru
      _
    // Predicated region
    $region46: #{tpu_custom_call.1} parent=1 // pred_check
      _
    $region47: #{tpu_custom_call.1} parent=1 // pred_check_branch
      %102 = sbr.rel (0) target = $region49
    $region48: #{tpu_custom_call.1} parent=1 // pred_region
      %103 = dma.done [#allocation10], 512
    $region49: #{tpu_custom_call.1} parent=1 // pred_fallthru
      _
    // Predicated region
    $region50: #{tpu_custom_call.1} parent=1 // pred_check
      _
    $region51: #{tpu_custom_call.1} parent=1 // pred_check_branch
      %105 = sbr.rel (0) target = $region53
    $region52: #{tpu_custom_call.1} parent=1 // pred_region
      %106 = dma.done [#allocation10], 512
    $region53: #{tpu_custom_call.1} parent=1 // pred_fallthru
      _
    // Predicated region
    $region54: #{tpu_custom_call.1} parent=1 // pred_check
      _
    $region55: #{tpu_custom_call.1} parent=1 // pred_check_branch
      %108 = sbr.rel (0) target = $region57
    $region56: #{tpu_custom_call.1} parent=1 // pred_region
      %109 = dma.done [#allocation13], 512
    $region57: #{tpu_custom_call.1} parent=1 // pred_fallthru
      _
    %v110 = vld [vmem:[#allocation3] sm:$0xff]
    %v111 = vld [vmem:[#allocation6] sm:$0xff]
    %v112 = vld [vmem:[#allocation6 + $0x8] sm:$0xff]
    %v113 = vld [vmem:[#allocation6 + $0x10] sm:$0xff]
    %v114 = vld [vmem:[#allocation6 + $0x18] sm:$0xff]
    %v115 = vld [vmem:[%s5] sm:$0x1]
    %v117 = vlaneseq
    %v118 = vshrl.u32 %v117, 7
    %v119 = vsub.s32 0, %v118
    %v120 = vrot.slane %v115, %v119
    %vm122 = vcmask 261120
    %v124 = vsel %vm122, %v110, 0
    %126 = vmatprep.subr.mxu0 0.0
    %127 = vmatpush1.msra.mxu0 %v111
    %128 = vmatprep.subr.mxu0 0.0
    %129 = vmatpush1.msra.mxu0 %v112
    %130 = vmatprep.subr.mxu0 0.0
    %131 = vmatpush1.msra.mxu0 %v113
    %132 = vmatprep.subr.mxu0 0.0
    %133 = vmatpush1.msra.mxu0 %v114
    %134 = vmatprep.subr.mxu0 0.0
    %135 = vmatpush1.msra.mxu0 0.0
    %136 = vmatprep.subr.mxu0 0.0
    %137 = vmatpush1.msra.mxu0 0.0
    %138 = vmatprep.subr.mxu0 0.0
    %139 = vmatpush1.msra.mxu0 0.0
    %140 = vmatprep.subr.mxu0 0.0
    %141 = vmatpush1.msra.mxu0 0.0
    %142 = vmatprep.subr.mxu0 0.0
    %143 = vmatpush1.msra.mxu0 0.0
    %144 = vmatprep.subr.mxu0 0.0
    %145 = vmatpush1.msra.mxu0 0.0
    %146 = vmatprep.subr.mxu0 0.0
    %147 = vmatpush1.msra.mxu0 0.0
    %148 = vmatprep.subr.mxu0 0.0
    %149 = vmatpush1.msra.mxu0 0.0
    %150 = vmatprep.subr.mxu0 0.0
    %151 = vmatpush1.msra.mxu0 0.0
    %152 = vmatprep.subr.mxu0 0.0
    %153 = vmatpush1.msra.mxu0 0.0
    %154 = vmatprep.subr.mxu0 0.0
    %155 = vmatpush1.msra.mxu0 0.0
    %156 = vmatprep.subr.mxu0 0.0
    %157 = vmatpush1.msra.mxu0 0.0
    %158 = vmatprep.subr.mxu0 0.0
    %159 = vmatpush1.msra.mxu0 0.0
    %160 = vmatprep.subr.mxu0 0.0
    %161 = vmatpush1.msra.mxu0 0.0
    %162 = vmatprep.subr.mxu0 0.0
    %163 = vmatpush1.msra.mxu0 0.0
    %164 = vmatprep.subr.mxu0 0.0
    %165 = vmatpush1.msra.mxu0 0.0
    %166 = vmatprep.subr.mxu0 0.0
    %167 = vmatpush1.msra.mxu0 0.0
    %168 = vmatprep.subr.mxu0 0.0
    %169 = vmatpush1.msra.mxu0 0.0
    %170 = vmatprep.subr.mxu0 0.0
    %171 = vmatpush1.msra.mxu0 0.0
    %172 = vmatprep.subr.mxu0 0.0
    %173 = vmatpush1.msra.mxu0 0.0
    %174 = vmatprep.subr.mxu0 0.0
    %175 = vmatpush1.msra.mxu0 0.0
    %176 = vmatprep.subr.mxu0 0.0
    %177 = vmatpush1.msra.mxu0 0.0
    %178 = vmatprep.subr.mxu0 0.0
    %179 = vmatpush1.msra.mxu0 0.0
    %180 = vmatprep.subr.mxu0 0.0
    %181 = vmatpush1.msra.mxu0 0.0
    %182 = vmatprep.subr.mxu0 0.0
    %183 = vmatpush1.msra.mxu0 0.0
    %184 = vmatprep.subr.mxu0 0.0
    %185 = vmatpush1.msra.mxu0 0.0
    %186 = vmatprep.subr.mxu0 0.0
    %187 = vmatpush1.msra.mxu0 0.0
    %188 = vmatprep.subr.mxu0 0.0
    %189 = vmatpush1.msra.mxu0 0.0
    %190 = vmatprep.mubr.f32.mxu0 0.0
    %191 = vmatmul.mubr.f32.gmra.mrb[0].mxu0 %v124
    %v192 = vpop.f32.mrb[0].mxu0
    %v193 = vadd.f32 %v120, %v192
    %v194 = vpop.f32.mrb[0].mxu0
    %195 = vdwg.mxu0
    %v196 = vld [vmem:[#allocation8] sm:$0xff]
    %v197 = vld [vmem:[#allocation8 + $0x8] sm:$0xff]
    %v198 = vld [vmem:[#allocation8 + $0x10] sm:$0xff]
    %v199 = vld [vmem:[#allocation8 + $0x18] sm:$0xff]
    %v200 = vld [vmem:[#allocation9] sm:$0xff]
    %v201 = vld [vmem:[#allocation9 + $0x8] sm:$0xff]
    %v202 = vld [vmem:[#allocation9 + $0x10] sm:$0xff]
    %v203 = vld [vmem:[#allocation9 + $0x18] sm:$0xff]
    %v204 = vld [vmem:[#allocation11] sm:$0xff]
    %v205 = vld [vmem:[#allocation11 + $0x8] sm:$0xff]
    %v206 = vld [vmem:[#allocation11 + $0x10] sm:$0xff]
    %v207 = vld [vmem:[#allocation11 + $0x18] sm:$0xff]
    %s208 = scalar_lea.vmem %s5, 1
    %v209 = vld [vmem:[%s208] sm:$0x1]
    %v211 = vsel %vm122, 0.0, 0
    %213 = vmatprep.subr.mxu0 0.0
    %214 = vmatpush1.msra.mxu0 %v196
    %215 = vmatprep.subr.mxu0 0.0
    %216 = vmatpush1.msra.mxu0 %v197
    %217 = vmatprep.subr.mxu0 0.0
    %218 = vmatpush1.msra.mxu0 %v198
    %219 = vmatprep.subr.mxu0 0.0
    %220 = vmatpush1.msra.mxu0 %v199
    %221 = vmatprep.subr.mxu0 0.0
    %222 = vmatpush1.msra.mxu0 0.0
    %223 = vmatprep.subr.mxu0 0.0
    %224 = vmatpush1.msra.mxu0 0.0
    %225 = vmatprep.subr.mxu0 0.0
    %226 = vmatpush1.msra.mxu0 0.0
    %227 = vmatprep.subr.mxu0 0.0
    %228 = vmatpush1.msra.mxu0 0.0
    %229 = vmatprep.subr.mxu0 0.0
    %230 = vmatpush1.msra.mxu0 0.0
    %231 = vmatprep.subr.mxu0 0.0
    %232 = vmatpush1.msra.mxu0 0.0
    %233 = vmatprep.subr.mxu0 0.0
    %234 = vmatpush1.msra.mxu0 0.0
    %235 = vmatprep.subr.mxu0 0.0
    %236 = vmatpush1.msra.mxu0 0.0
    %237 = vmatprep.subr.mxu0 0.0
    %238 = vmatpush1.msra.mxu0 0.0
    %239 = vmatprep.subr.mxu0 0.0
    %240 = vmatpush1.msra.mxu0 0.0
    %241 = vmatprep.subr.mxu0 0.0
    %242 = vmatpush1.msra.mxu0 0.0
    %243 = vmatprep.subr.mxu0 0.0
    %244 = vmatpush1.msra.mxu0 0.0
    %245 = vmatprep.subr.mxu0 0.0
    %246 = vmatpush1.msra.mxu0 0.0
    %247 = vmatprep.subr.mxu0 0.0
    %248 = vmatpush1.msra.mxu0 0.0
    %249 = vmatprep.subr.mxu0 0.0
    %250 = vmatpush1.msra.mxu0 0.0
    %251 = vmatprep.subr.mxu0 0.0
    %252 = vmatpush1.msra.mxu0 0.0
    %253 = vmatprep.subr.mxu0 0.0
    %254 = vmatpush1.msra.mxu0 0.0
    %255 = vmatprep.subr.mxu0 0.0
    %256 = vmatpush1.msra.mxu0 0.0
    %257 = vmatprep.subr.mxu0 0.0
    %258 = vmatpush1.msra.mxu0 0.0
    %259 = vmatprep.subr.mxu0 0.0
    %260 = vmatpush1.msra.mxu0 0.0
    %261 = vmatprep.subr.mxu0 0.0
    %262 = vmatpush1.msra.mxu0 0.0
    %263 = vmatprep.subr.mxu0 0.0
    %264 = vmatpush1.msra.mxu0 0.0
    %265 = vmatprep.subr.mxu0 0.0
    %266 = vmatpush1.msra.mxu0 0.0
    %267 = vmatprep.subr.mxu0 0.0
    %268 = vmatpush1.msra.mxu0 0.0
    %269 = vmatprep.subr.mxu0 0.0
    %270 = vmatpush1.msra.mxu0 0.0
    %271 = vmatprep.subr.mxu0 0.0
    %272 = vmatpush1.msra.mxu0 0.0
    %273 = vmatprep.subr.mxu0 0.0
    %274 = vmatpush1.msra.mxu0 0.0
    %275 = vmatprep.subr.mxu0 0.0
    %276 = vmatpush1.msra.mxu0 0.0
    %277 = vmatprep.mubr.f32.mxu0 0.0
    %278 = vmatmul.mubr.f32.gmra.mrb[0].mxu0 %v211
    %v279 = vpop.f32.mrb[0].mxu0
    %v280 = vadd.f32 0.0, %v279
    %v281 = vpop.f32.mrb[0].mxu0
    %282 = vdwg.mxu0
    %v283 = vadd.f32 %v193, %v280
    %v284 = vtanh.pop %v283
    %v285 = vmul.f32 %v284, 0.5
    %v286 = vadd.f32 %v285, 0.5
    %v287 = vmul.f32 %v286, 0.0
    %289 = vrot.lane.b32.xlu0 %v284, 64
    %v290 = vpop.permute.xlu0 %289
    %v292 = vmul.f32 %v286, %v290
    %294 = vrot.lane.b32.xlu0 %v292, 32
    %v295 = vpop.permute.xlu0 %294
    %v297 = vadd.f32 %v287, %v295
    %v298 = vtanh.pop %v297
    %300 = vrot.lane.b32.xlu0 %v298, 64
    %v301 = vpop.permute.xlu0 %300
    %v303 = vmul.f32 %v286, %v301
    %305 = vrot.lane.b32.xlu0 %v303, 32
    %v306 = vpop.permute.xlu0 %305
    %v307 = vsel %vm122, %v306, 0
    %309 = vmatprep.subr.mxu0 0.0
    %310 = vmatpush1.msra.mxu0 %v196
    %311 = vmatprep.subr.mxu0 0.0
    %312 = vmatpush1.msra.mxu0 %v197
    %313 = vmatprep.subr.mxu0 0.0
    %314 = vmatpush1.msra.mxu0 %v198
    %315 = vmatprep.subr.mxu0 0.0
    %316 = vmatpush1.msra.mxu0 %v199
    %317 = vmatprep.subr.mxu0 0.0
    %318 = vmatpush1.msra.mxu0 0.0
    %319 = vmatprep.subr.mxu0 0.0
    %320 = vmatpush1.msra.mxu0 0.0
    %321 = vmatprep.subr.mxu0 0.0
    %322 = vmatpush1.msra.mxu0 0.0
    %323 = vmatprep.subr.mxu0 0.0
    %324 = vmatpush1.msra.mxu0 0.0
    %325 = vmatprep.subr.mxu0 0.0
    %326 = vmatpush1.msra.mxu0 0.0
    %327 = vmatprep.subr.mxu0 0.0
    %328 = vmatpush1.msra.mxu0 0.0
    %329 = vmatprep.subr.mxu0 0.0
    %330 = vmatpush1.msra.mxu0 0.0
    %331 = vmatprep.subr.mxu0 0.0
    %332 = vmatpush1.msra.mxu0 0.0
    %333 = vmatprep.subr.mxu0 0.0
    %334 = vmatpush1.msra.mxu0 0.0
    %335 = vmatprep.subr.mxu0 0.0
    %336 = vmatpush1.msra.mxu0 0.0
    %337 = vmatprep.subr.mxu0 0.0
    %338 = vmatpush1.msra.mxu0 0.0
    %339 = vmatprep.subr.mxu0 0.0
    %340 = vmatpush1.msra.mxu0 0.0
    %341 = vmatprep.subr.mxu0 0.0
    %342 = vmatpush1.msra.mxu0 0.0
    %343 = vmatprep.subr.mxu0 0.0
    %344 = vmatpush1.msra.mxu0 0.0
    %345 = vmatprep.subr.mxu0 0.0
    %346 = vmatpush1.msra.mxu0 0.0
    %347 = vmatprep.subr.mxu0 0.0
    %348 = vmatpush1.msra.mxu0 0.0
    %349 = vmatprep.subr.mxu0 0.0
    %350 = vmatpush1.msra.mxu0 0.0
    %351 = vmatprep.subr.mxu0 0.0
    %352 = vmatpush1.msra.mxu0 0.0
    %353 = vmatprep.subr.mxu0 0.0
    %354 = vmatpush1.msra.mxu0 0.0
    %355 = vmatprep.subr.mxu0 0.0
    %356 = vmatpush1.msra.mxu0 0.0
    %357 = vmatprep.subr.mxu0 0.0
    %358 = vmatpush1.msra.mxu0 0.0
    %359 = vmatprep.subr.mxu0 0.0
    %360 = vmatpush1.msra.mxu0 0.0
    %361 = vmatprep.subr.mxu0 0.0
    %362 = vmatpush1.msra.mxu0 0.0
    %363 = vmatprep.subr.mxu0 0.0
    %364 = vmatpush1.msra.mxu0 0.0
    %365 = vmatprep.subr.mxu0 0.0
    %366 = vmatpush1.msra.mxu0 0.0
    %367 = vmatprep.subr.mxu0 0.0
    %368 = vmatpush1.msra.mxu0 0.0
    %369 = vmatprep.subr.mxu0 0.0
    %370 = vmatpush1.msra.mxu0 0.0
    %371 = vmatprep.subr.mxu0 0.0
    %372 = vmatpush1.msra.mxu0 0.0
    %373 = vmatprep.mubr.f32.mxu0 0.0
    %374 = vmatmul.mubr.f32.gmra.mrb[0].mxu0 %v307
    %v375 = vpop.f32.mrb[0].mxu0
    %v376 = vadd.f32 0.0, %v375
    %v377 = vpop.f32.mrb[0].mxu0
    %378 = vdwg.mxu0
    %v380 = vrot.slane %v376, 7
    %v382 = vadd.f32 %v193, %v380
    %v383 = vtanh.pop %v382
    %v384 = vmul.f32 %v383, 0.5
    %v385 = vadd.f32 %v384, 0.5
    %v387 = vrot.slane %v297, 7
    %v389 = vmul.f32 %v385, %v387
    %391 = vrot.lane.b32.xlu0 %v383, 64
    %v392 = vpop.permute.xlu0 %391
    %v394 = vmul.f32 %v385, %v392
    %396 = vrot.lane.b32.xlu0 %v394, 32
    %v397 = vpop.permute.xlu0 %396
    %v399 = vadd.f32 %v389, %v397
    %v400 = vtanh.pop %v399
    %402 = vrot.lane.b32.xlu0 %v400, 64
    %v403 = vpop.permute.xlu0 %402
    %v405 = vmul.f32 %v385, %v403
    %406 = vmatprep.subr.mxu0 0.0
    %407 = vmatpush1.msra.mxu0 %v204
    %408 = vmatprep.subr.mxu0 0.0
    %409 = vmatpush1.msra.mxu0 %v205
    %410 = vmatprep.subr.mxu0 0.0
    %411 = vmatpush1.msra.mxu0 %v206
    %412 = vmatprep.subr.mxu0 0.0
    %413 = vmatpush1.msra.mxu0 %v207
    %414 = vmatprep.subr.mxu0 0.0
    %415 = vmatpush1.msra.mxu0 0.0
    %416 = vmatprep.subr.mxu0 0.0
    %417 = vmatpush1.msra.mxu0 0.0
    %418 = vmatprep.subr.mxu0 0.0
    %419 = vmatpush1.msra.mxu0 0.0
    %420 = vmatprep.subr.mxu0 0.0
    %421 = vmatpush1.msra.mxu0 0.0
    %422 = vmatprep.subr.mxu0 0.0
    %423 = vmatpush1.msra.mxu0 0.0
    %424 = vmatprep.subr.mxu0 0.0
    %425 = vmatpush1.msra.mxu0 0.0
    %426 = vmatprep.subr.mxu0 0.0
    %427 = vmatpush1.msra.mxu0 0.0
    %428 = vmatprep.subr.mxu0 0.0
    %429 = vmatpush1.msra.mxu0 0.0
    %430 = vmatprep.subr.mxu0 0.0
    %431 = vmatpush1.msra.mxu0 0.0
    %432 = vmatprep.subr.mxu0 0.0
    %433 = vmatpush1.msra.mxu0 0.0
    %434 = vmatprep.subr.mxu0 0.0
    %435 = vmatpush1.msra.mxu0 0.0
    %436 = vmatprep.subr.mxu0 0.0
    %437 = vmatpush1.msra.mxu0 0.0
    %438 = vmatprep.subr.mxu0 0.0
    %439 = vmatpush1.msra.mxu0 0.0
    %440 = vmatprep.subr.mxu0 0.0
    %441 = vmatpush1.msra.mxu0 0.0
    %442 = vmatprep.subr.mxu0 0.0
    %443 = vmatpush1.msra.mxu0 0.0
    %444 = vmatprep.subr.mxu0 0.0
    %445 = vmatpush1.msra.mxu0 0.0
    %446 = vmatprep.subr.mxu0 0.0
    %447 = vmatpush1.msra.mxu0 0.0
    %448 = vmatprep.subr.mxu0 0.0
    %449 = vmatpush1.msra.mxu0 0.0
    %450 = vmatprep.subr.mxu0 0.0
    %451 = vmatpush1.msra.mxu0 0.0
    %452 = vmatprep.subr.mxu0 0.0
    %453 = vmatpush1.msra.mxu0 0.0
    %454 = vmatprep.subr.mxu0 0.0
    %455 = vmatpush1.msra.mxu0 0.0
    %456 = vmatprep.subr.mxu0 0.0
    %457 = vmatpush1.msra.mxu0 0.0
    %458 = vmatprep.subr.mxu0 0.0
    %459 = vmatpush1.msra.mxu0 0.0
    %460 = vmatprep.subr.mxu0 0.0
    %461 = vmatpush1.msra.mxu0 0.0
    %462 = vmatprep.subr.mxu0 0.0
    %463 = vmatpush1.msra.mxu0 0.0
    %464 = vmatprep.subr.mxu0 0.0
    %465 = vmatpush1.msra.mxu0 0.0
    %466 = vmatprep.subr.mxu0 0.0
    %467 = vmatpush1.msra.mxu0 0.0
    %468 = vmatprep.subr.mxu0 0.0
    %469 = vmatpush1.msra.mxu0 0.0
    %470 = vmatprep.mubr.f32.mxu0 0.0
    %471 = vmatmul.mubr.f32.gmra.mrb[0].mxu0 %v211
    %v472 = vpop.f32.mrb[0].mxu0
    %v473 = vadd.f32 0.0, %v472
    %v474 = vpop.f32.mrb[0].mxu0
    %475 = vdwg.mxu0
    %476 = vmatprep.subr.mxu0 0.0
    %477 = vmatpush1.msra.mxu0 %v200
    %478 = vmatprep.subr.mxu0 0.0
    %479 = vmatpush1.msra.mxu0 %v201
    %480 = vmatprep.subr.mxu0 0.0
    %481 = vmatpush1.msra.mxu0 %v202
    %482 = vmatprep.subr.mxu0 0.0
    %483 = vmatpush1.msra.mxu0 %v203
    %484 = vmatprep.subr.mxu0 0.0
    %485 = vmatpush1.msra.mxu0 0.0
    %486 = vmatprep.subr.mxu0 0.0
    %487 = vmatpush1.msra.mxu0 0.0
    %488 = vmatprep.subr.mxu0 0.0
    %489 = vmatpush1.msra.mxu0 0.0
    %490 = vmatprep.subr.mxu0 0.0
    %491 = vmatpush1.msra.mxu0 0.0
    %492 = vmatprep.subr.mxu0 0.0
    %493 = vmatpush1.msra.mxu0 0.0
    %494 = vmatprep.subr.mxu0 0.0
    %495 = vmatpush1.msra.mxu0 0.0
    %496 = vmatprep.subr.mxu0 0.0
    %497 = vmatpush1.msra.mxu0 0.0
    %498 = vmatprep.subr.mxu0 0.0
    %499 = vmatpush1.msra.mxu0 0.0
    %500 = vmatprep.subr.mxu0 0.0
    %501 = vmatpush1.msra.mxu0 0.0
    %502 = vmatprep.subr.mxu0 0.0
    %503 = vmatpush1.msra.mxu0 0.0
    %504 = vmatprep.subr.mxu0 0.0
    %505 = vmatpush1.msra.mxu0 0.0
    %506 = vmatprep.subr.mxu0 0.0
    %507 = vmatpush1.msra.mxu0 0.0
    %508 = vmatprep.subr.mxu0 0.0
    %509 = vmatpush1.msra.mxu0 0.0
    %510 = vmatprep.subr.mxu0 0.0
    %511 = vmatpush1.msra.mxu0 0.0
    %512 = vmatprep.subr.mxu0 0.0
    %513 = vmatpush1.msra.mxu0 0.0
    %514 = vmatprep.subr.mxu0 0.0
    %515 = vmatpush1.msra.mxu0 0.0
    %516 = vmatprep.subr.mxu0 0.0
    %517 = vmatpush1.msra.mxu0 0.0
    %518 = vmatprep.subr.mxu0 0.0
    %519 = vmatpush1.msra.mxu0 0.0
    %520 = vmatprep.subr.mxu0 0.0
    %521 = vmatpush1.msra.mxu0 0.0
    %522 = vmatprep.subr.mxu0 0.0
    %523 = vmatpush1.msra.mxu0 0.0
    %524 = vmatprep.subr.mxu0 0.0
    %525 = vmatpush1.msra.mxu0 0.0
    %526 = vmatprep.subr.mxu0 0.0
    %527 = vmatpush1.msra.mxu0 0.0
    %528 = vmatprep.subr.mxu0 0.0
    %529 = vmatpush1.msra.mxu0 0.0
    %530 = vmatprep.subr.mxu0 0.0
    %531 = vmatpush1.msra.mxu0 0.0
    %532 = vmatprep.subr.mxu0 0.0
    %533 = vmatpush1.msra.mxu0 0.0
    %534 = vmatprep.subr.mxu0 0.0
    %535 = vmatpush1.msra.mxu0 0.0
    %536 = vmatprep.subr.mxu0 0.0
    %537 = vmatpush1.msra.mxu0 0.0
    %538 = vmatprep.subr.mxu0 0.0
    %539 = vmatpush1.msra.mxu0 0.0
    %540 = vmatprep.mubr.f32.mxu0 0.0
    %541 = vmatmul.mubr.f32.gmra.mrb[0].mxu0 %v307
    %v542 = vpop.f32.mrb[0].mxu0
    %v543 = vadd.f32 %v473, %v542
    %v544 = vpop.f32.mrb[0].mxu0
    %545 = vdwg.mxu0
    %v546 = vadd.f32 %v543, %v209
    %v547 = vtanh.pop %v546
    %v548 = vmul.f32 %v547, 0.5
    %v549 = vadd.f32 %v548, 0.5
    %v550 = vmul.f32 %v549, 0.0
    %552 = vrot.lane.b32.xlu0 %v547, 64
    %v553 = vpop.permute.xlu0 %552
    %v555 = vmul.f32 %v549, %v553
    %557 = vrot.lane.b32.xlu0 %v555, 32
    %v558 = vpop.permute.xlu0 %557
    %v560 = vadd.f32 %v550, %v558
    %v561 = vtanh.pop %v560
    %563 = vrot.lane.b32.xlu0 %v561, 64
    %v564 = vpop.permute.xlu0 %563
    %v566 = vmul.f32 %v549, %v564
    %568 = vrot.lane.b32.xlu0 %v566, 32
    %v569 = vpop.permute.xlu0 %568
    %vm571 = vcmask 253952
    %572 = vst.msk [vmem:[#allocation2] sm:$0x1] %vm571, %v569
    %v574 = vrot.slane %v405, 1
    %575 = vrot.lane.b32.xlu0 %v574, 32
    %v576 = vpop.permute.xlu0 %575
    %v577 = vsel %vm122, %v576, 0
    %579 = vmatprep.subr.mxu0 0.0
    %580 = vmatpush1.msra.mxu0 %v196
    %581 = vmatprep.subr.mxu0 0.0
    %582 = vmatpush1.msra.mxu0 %v197
    %583 = vmatprep.subr.mxu0 0.0
    %584 = vmatpush1.msra.mxu0 %v198
    %585 = vmatprep.subr.mxu0 0.0
    %586 = vmatpush1.msra.mxu0 %v199
    %587 = vmatprep.subr.mxu0 0.0
    %588 = vmatpush1.msra.mxu0 0.0
    %589 = vmatprep.subr.mxu0 0.0
    %590 = vmatpush1.msra.mxu0 0.0
    %591 = vmatprep.subr.mxu0 0.0
    %592 = vmatpush1.msra.mxu0 0.0
    %593 = vmatprep.subr.mxu0 0.0
    %594 = vmatpush1.msra.mxu0 0.0
    %595 = vmatprep.subr.mxu0 0.0
    %596 = vmatpush1.msra.mxu0 0.0
    %597 = vmatprep.subr.mxu0 0.0
    %598 = vmatpush1.msra.mxu0 0.0
    %599 = vmatprep.subr.mxu0 0.0
    %600 = vmatpush1.msra.mxu0 0.0
    %601 = vmatprep.subr.mxu0 0.0
    %602 = vmatpush1.msra.mxu0 0.0
    %603 = vmatprep.subr.mxu0 0.0
    %604 = vmatpush1.msra.mxu0 0.0
    %605 = vmatprep.subr.mxu0 0.0
    %606 = vmatpush1.msra.mxu0 0.0
    %607 = vmatprep.subr.mxu0 0.0
    %608 = vmatpush1.msra.mxu0 0.0
    %609 = vmatprep.subr.mxu0 0.0
    %610 = vmatpush1.msra.mxu0 0.0
    %611 = vmatprep.subr.mxu0 0.0
    %612 = vmatpush1.msra.mxu0 0.0
    %613 = vmatprep.subr.mxu0 0.0
    %614 = vmatpush1.msra.mxu0 0.0
    %615 = vmatprep.subr.mxu0 0.0
    %616 = vmatpush1.msra.mxu0 0.0
    %617 = vmatprep.subr.mxu0 0.0
    %618 = vmatpush1.msra.mxu0 0.0
    %619 = vmatprep.subr.mxu0 0.0
    %620 = vmatpush1.msra.mxu0 0.0
    %621 = vmatprep.subr.mxu0 0.0
    %622 = vmatpush1.msra.mxu0 0.0
    %623 = vmatprep.subr.mxu0 0.0
    %624 = vmatpush1.msra.mxu0 0.0
    %625 = vmatprep.subr.mxu0 0.0
    %626 = vmatpush1.msra.mxu0 0.0
    %627 = vmatprep.subr.mxu0 0.0
    %628 = vmatpush1.msra.mxu0 0.0
    %629 = vmatprep.subr.mxu0 0.0
    %630 = vmatpush1.msra.mxu0 0.0
    %631 = vmatprep.subr.mxu0 0.0
    %632 = vmatpush1.msra.mxu0 0.0
    %633 = vmatprep.subr.mxu0 0.0
    %634 = vmatpush1.msra.mxu0 0.0
    %635 = vmatprep.subr.mxu0 0.0
    %636 = vmatpush1.msra.mxu0 0.0
    %637 = vmatprep.subr.mxu0 0.0
    %638 = vmatpush1.msra.mxu0 0.0
    %639 = vmatprep.subr.mxu0 0.0
    %640 = vmatpush1.msra.mxu0 0.0
    %641 = vmatprep.subr.mxu0 0.0
    %642 = vmatpush1.msra.mxu0 0.0
    %643 = vmatprep.mubr.f32.mxu0 0.0
    %644 = vmatmul.mubr.f32.gmra.mrb[0].mxu0 %v577
    %v645 = vpop.f32.mrb[0].mxu0
    %v646 = vadd.f32 0.0, %v645
    %v647 = vpop.f32.mrb[0].mxu0
    %648 = vdwg.mxu0
    %v650 = vrot.slane %v646, 6
    %v652 = vadd.f32 %v193, %v650
    %v653 = vtanh.pop %v652
    %v654 = vmul.f32 %v653, 0.5
    %v655 = vadd.f32 %v654, 0.5
    %v657 = vrot.slane %v399, 7
    %v659 = vmul.f32 %v655, %v657
    %661 = vrot.lane.b32.xlu0 %v653, 64
    %v662 = vpop.permute.xlu0 %661
    %v664 = vmul.f32 %v655, %v662
    %666 = vrot.lane.b32.xlu0 %v664, 32
    %v667 = vpop.permute.xlu0 %666
    %v669 = vadd.f32 %v659, %v667
    %v670 = vtanh.pop %v669
    %672 = vrot.lane.b32.xlu0 %v670, 64
    %v673 = vpop.permute.xlu0 %672
    %v675 = vmul.f32 %v655, %v673
    %v676 = vsel %vm122, %v569, 0
    %678 = vmatprep.subr.mxu0 0.0
    %679 = vmatpush1.msra.mxu0 %v204
    %680 = vmatprep.subr.mxu0 0.0
    %681 = vmatpush1.msra.mxu0 %v205
    %682 = vmatprep.subr.mxu0 0.0
    %683 = vmatpush1.msra.mxu0 %v206
    %684 = vmatprep.subr.mxu0 0.0
    %685 = vmatpush1.msra.mxu0 %v207
    %686 = vmatprep.subr.mxu0 0.0
    %687 = vmatpush1.msra.mxu0 0.0
    %688 = vmatprep.subr.mxu0 0.0
    %689 = vmatpush1.msra.mxu0 0.0
    %690 = vmatprep.subr.mxu0 0.0
    %691 = vmatpush1.msra.mxu0 0.0
    %692 = vmatprep.subr.mxu0 0.0
    %693 = vmatpush1.msra.mxu0 0.0
    %694 = vmatprep.subr.mxu0 0.0
    %695 = vmatpush1.msra.mxu0 0.0
    %696 = vmatprep.subr.mxu0 0.0
    %697 = vmatpush1.msra.mxu0 0.0
    %698 = vmatprep.subr.mxu0 0.0
    %699 = vmatpush1.msra.mxu0 0.0
    %700 = vmatprep.subr.mxu0 0.0
    %701 = vmatpush1.msra.mxu0 0.0
    %702 = vmatprep.subr.mxu0 0.0
    %703 = vmatpush1.msra.mxu0 0.0
    %704 = vmatprep.subr.mxu0 0.0
    %705 = vmatpush1.msra.mxu0 0.0
    %706 = vmatprep.subr.mxu0 0.0
    %707 = vmatpush1.msra.mxu0 0.0
    %708 = vmatprep.subr.mxu0 0.0
    %709 = vmatpush1.msra.mxu0 0.0
    %710 = vmatprep.subr.mxu0 0.0
    %711 = vmatpush1.msra.mxu0 0.0
    %712 = vmatprep.subr.mxu0 0.0
    %713 = vmatpush1.msra.mxu0 0.0
    %714 = vmatprep.subr.mxu0 0.0
    %715 = vmatpush1.msra.mxu0 0.0
    %716 = vmatprep.subr.mxu0 0.0
    %717 = vmatpush1.msra.mxu0 0.0
    %718 = vmatprep.subr.mxu0 0.0
    %719 = vmatpush1.msra.mxu0 0.0
    %720 = vmatprep.subr.mxu0 0.0
    %721 = vmatpush1.msra.mxu0 0.0
    %722 = vmatprep.subr.mxu0 0.0
    %723 = vmatpush1.msra.mxu0 0.0
    %724 = vmatprep.subr.mxu0 0.0
    %725 = vmatpush1.msra.mxu0 0.0
    %726 = vmatprep.subr.mxu0 0.0
    %727 = vmatpush1.msra.mxu0 0.0
    %728 = vmatprep.subr.mxu0 0.0
    %729 = vmatpush1.msra.mxu0 0.0
    %730 = vmatprep.subr.mxu0 0.0
    %731 = vmatpush1.msra.mxu0 0.0
    %732 = vmatprep.subr.mxu0 0.0
    %733 = vmatpush1.msra.mxu0 0.0
    %734 = vmatprep.subr.mxu0 0.0
    %735 = vmatpush1.msra.mxu0 0.0
    %736 = vmatprep.subr.mxu0 0.0
    %737 = vmatpush1.msra.mxu0 0.0
    %738 = vmatprep.subr.mxu0 0.0
    %739 = vmatpush1.msra.mxu0 0.0
    %740 = vmatprep.subr.mxu0 0.0
    %741 = vmatpush1.msra.mxu0 0.0
    %742 = vmatprep.mubr.f32.mxu0 0.0
    %743 = vmatmul.mubr.f32.gmra.mrb[0].mxu0 %v676
    %v744 = vpop.f32.mrb[0].mxu0
    %v745 = vadd.f32 0.0, %v744
    %v746 = vpop.f32.mrb[0].mxu0
    %747 = vdwg.mxu0
    %748 = vmatprep.subr.mxu0 0.0
    %749 = vmatpush1.msra.mxu0 %v200
    %750 = vmatprep.subr.mxu0 0.0
    %751 = vmatpush1.msra.mxu0 %v201
    %752 = vmatprep.subr.mxu0 0.0
    %753 = vmatpush1.msra.mxu0 %v202
    %754 = vmatprep.subr.mxu0 0.0
    %755 = vmatpush1.msra.mxu0 %v203
    %756 = vmatprep.subr.mxu0 0.0
    %757 = vmatpush1.msra.mxu0 0.0
    %758 = vmatprep.subr.mxu0 0.0
    %759 = vmatpush1.msra.mxu0 0.0
    %760 = vmatprep.subr.mxu0 0.0
    %761 = vmatpush1.msra.mxu0 0.0
    %762 = vmatprep.subr.mxu0 0.0
    %763 = vmatpush1.msra.mxu0 0.0
    %764 = vmatprep.subr.mxu0 0.0
    %765 = vmatpush1.msra.mxu0 0.0
    %766 = vmatprep.subr.mxu0 0.0
    %767 = vmatpush1.msra.mxu0 0.0
    %768 = vmatprep.subr.mxu0 0.0
    %769 = vmatpush1.msra.mxu0 0.0
    %770 = vmatprep.subr.mxu0 0.0
    %771 = vmatpush1.msra.mxu0 0.0
    %772 = vmatprep.subr.mxu0 0.0
    %773 = vmatpush1.msra.mxu0 0.0
    %774 = vmatprep.subr.mxu0 0.0
    %775 = vmatpush1.msra.mxu0 0.0
    %776 = vmatprep.subr.mxu0 0.0
    %777 = vmatpush1.msra.mxu0 0.0
    %778 = vmatprep.subr.mxu0 0.0
    %779 = vmatpush1.msra.mxu0 0.0
    %780 = vmatprep.subr.mxu0 0.0
    %781 = vmatpush1.msra.mxu0 0.0
    %782 = vmatprep.subr.mxu0 0.0
    %783 = vmatpush1.msra.mxu0 0.0
    %784 = vmatprep.subr.mxu0 0.0
    %785 = vmatpush1.msra.mxu0 0.0
    %786 = vmatprep.subr.mxu0 0.0
    %787 = vmatpush1.msra.mxu0 0.0
    %788 = vmatprep.subr.mxu0 0.0
    %789 = vmatpush1.msra.mxu0 0.0
    %790 = vmatprep.subr.mxu0 0.0
    %791 = vmatpush1.msra.mxu0 0.0
    %792 = vmatprep.subr.mxu0 0.0
    %793 = vmatpush1.msra.mxu0 0.0
    %794 = vmatprep.subr.mxu0 0.0
    %795 = vmatpush1.msra.mxu0 0.0
    %796 = vmatprep.subr.mxu0 0.0
    %797 = vmatpush1.msra.mxu0 0.0
    %798 = vmatprep.subr.mxu0 0.0
    %799 = vmatpush1.msra.mxu0 0.0
    %800 = vmatprep.subr.mxu0 0.0
    %801 = vmatpush1.msra.mxu0 0.0
    %802 = vmatprep.subr.mxu0 0.0
    %803 = vmatpush1.msra.mxu0 0.0
    %804 = vmatprep.subr.mxu0 0.0
    %805 = vmatpush1.msra.mxu0 0.0
    %806 = vmatprep.subr.mxu0 0.0
    %807 = vmatpush1.msra.mxu0 0.0
    %808 = vmatprep.subr.mxu0 0.0
    %809 = vmatpush1.msra.mxu0 0.0
    %810 = vmatprep.subr.mxu0 0.0
    %811 = vmatpush1.msra.mxu0 0.0
    %812 = vmatprep.mubr.f32.mxu0 0.0
    %813 = vmatmul.mubr.f32.gmra.mrb[0].mxu0 %v577
    %v814 = vpop.f32.mrb[0].mxu0
    %v815 = vadd.f32 %v745, %v814
    %v816 = vpop.f32.mrb[0].mxu0
    %817 = vdwg.mxu0
    %v818 = vadd.f32 %v815, %v209
    %v819 = vtanh.pop %v818
    %v820 = vmul.f32 %v819, 0.5
    %v821 = vadd.f32 %v820, 0.5
    %v822 = vmul.f32 %v821, %v560
    %824 = vrot.lane.b32.xlu0 %v819, 64
    %v825 = vpop.permute.xlu0 %824
    %v827 = vmul.f32 %v821, %v825
    %829 = vrot.lane.b32.xlu0 %v827, 32
    %v830 = vpop.permute.xlu0 %829
    %v832 = vadd.f32 %v822, %v830
    %v833 = vtanh.pop %v832
    %835 = vrot.lane.b32.xlu0 %v833, 64
    %v836 = vpop.permute.xlu0 %835
    %v838 = vmul.f32 %v821, %v836
    %840 = vrot.lane.b32.xlu0 %v838, 32
    %v841 = vpop.permute.xlu0 %840
    %843 = vst.msk [vmem:[#allocation2 + $0x1] sm:$0x1] %vm571, %v841
    %v845 = vrot.slane %v675, 2
    %846 = vrot.lane.b32.xlu0 %v845, 32
    %v847 = vpop.permute.xlu0 %846
    %v848 = vsel %vm122, %v847, 0
    %850 = vmatprep.subr.mxu0 0.0
    %851 = vmatpush1.msra.mxu0 %v196
    %852 = vmatprep.subr.mxu0 0.0
    %853 = vmatpush1.msra.mxu0 %v197
    %854 = vmatprep.subr.mxu0 0.0
    %855 = vmatpush1.msra.mxu0 %v198
    %856 = vmatprep.subr.mxu0 0.0
    %857 = vmatpush1.msra.mxu0 %v199
    %858 = vmatprep.subr.mxu0 0.0
    %859 = vmatpush1.msra.mxu0 0.0
    %860 = vmatprep.subr.mxu0 0.0
    %861 = vmatpush1.msra.mxu0 0.0
    %862 = vmatprep.subr.mxu0 0.0
    %863 = vmatpush1.msra.mxu0 0.0
    %864 = vmatprep.subr.mxu0 0.0
    %865 = vmatpush1.msra.mxu0 0.0
    %866 = vmatprep.subr.mxu0 0.0
    %867 = vmatpush1.msra.mxu0 0.0
    %868 = vmatprep.subr.mxu0 0.0
    %869 = vmatpush1.msra.mxu0 0.0
    %870 = vmatprep.subr.mxu0 0.0
    %871 = vmatpush1.msra.mxu0 0.0
    %872 = vmatprep.subr.mxu0 0.0
    %873 = vmatpush1.msra.mxu0 0.0
    %874 = vmatprep.subr.mxu0 0.0
    %875 = vmatpush1.msra.mxu0 0.0
    %876 = vmatprep.subr.mxu0 0.0
    %877 = vmatpush1.msra.mxu0 0.0
    %878 = vmatprep.subr.mxu0 0.0
    %879 = vmatpush1.msra.mxu0 0.0
    %880 = vmatprep.subr.mxu0 0.0
    %881 = vmatpush1.msra.mxu0 0.0
    %882 = vmatprep.subr.mxu0 0.0
    %883 = vmatpush1.msra.mxu0 0.0
    %884 = vmatprep.subr.mxu0 0.0
    %885 = vmatpush1.msra.mxu0 0.0
    %886 = vmatprep.subr.mxu0 0.0
    %887 = vmatpush1.msra.mxu0 0.0
    %888 = vmatprep.subr.mxu0 0.0
    %889 = vmatpush1.msra.mxu0 0.0
    %890 = vmatprep.subr.mxu0 0.0
    %891 = vmatpush1.msra.mxu0 0.0
    %892 = vmatprep.subr.mxu0 0.0
    %893 = vmatpush1.msra.mxu0 0.0
    %894 = vmatprep.subr.mxu0 0.0
    %895 = vmatpush1.msra.mxu0 0.0
    %896 = vmatprep.subr.mxu0 0.0
    %897 = vmatpush1.msra.mxu0 0.0
    %898 = vmatprep.subr.mxu0 0.0
    %899 = vmatpush1.msra.mxu0 0.0
    %900 = vmatprep.subr.mxu0 0.0
    %901 = vmatpush1.msra.mxu0 0.0
    %902 = vmatprep.subr.mxu0 0.0
    %903 = vmatpush1.msra.mxu0 0.0
    %904 = vmatprep.subr.mxu0 0.0
    %905 = vmatpush1.msra.mxu0 0.0
    %906 = vmatprep.subr.mxu0 0.0
    %907 = vmatpush1.msra.mxu0 0.0
    %908 = vmatprep.subr.mxu0 0.0
    %909 = vmatpush1.msra.mxu0 0.0
    %910 = vmatprep.subr.mxu0 0.0
    %911 = vmatpush1.msra.mxu0 0.0
    %912 = vmatprep.subr.mxu0 0.0
    %913 = vmatpush1.msra.mxu0 0.0
    %914 = vmatprep.mubr.f32.mxu0 0.0
    %915 = vmatmul.mubr.f32.gmra.mrb[0].mxu0 %v848
    %v916 = vpop.f32.mrb[0].mxu0
    %v917 = vadd.f32 0.0, %v916
    %v918 = vpop.f32.mrb[0].mxu0
    %919 = vdwg.mxu0
    %v921 = vrot.slane %v917, 5
    %v923 = vadd.f32 %v193, %v921
    %v924 = vtanh.pop %v923
    %v925 = vmul.f32 %v924, 0.5
    %v926 = vadd.f32 %v925, 0.5
    %v928 = vrot.slane %v669, 7
    %v930 = vmul.f32 %v926, %v928
    %932 = vrot.lane.b32.xlu0 %v924, 64
    %v933 = vpop.permute.xlu0 %932
    %v935 = vmul.f32 %v926, %v933
    %937 = vrot.lane.b32.xlu0 %v935, 32
    %v938 = vpop.permute.xlu0 %937
    %v940 = vadd.f32 %v930, %v938
    %v941 = vtanh.pop %v940
    %943 = vrot.lane.b32.xlu0 %v941, 64
    %v944 = vpop.permute.xlu0 %943
    %v946 = vmul.f32 %v926, %v944
    %v947 = vsel %vm122, %v841, 0
    %949 = vmatprep.subr.mxu0 0.0
    %950 = vmatpush1.msra.mxu0 %v204
    %951 = vmatprep.subr.mxu0 0.0
    %952 = vmatpush1.msra.mxu0 %v205
    %953 = vmatprep.subr.mxu0 0.0
    %954 = vmatpush1.msra.mxu0 %v206
    %955 = vmatprep.subr.mxu0 0.0
    %956 = vmatpush1.msra.mxu0 %v207
    %957 = vmatprep.subr.mxu0 0.0
    %958 = vmatpush1.msra.mxu0 0.0
    %959 = vmatprep.subr.mxu0 0.0
    %960 = vmatpush1.msra.mxu0 0.0
    %961 = vmatprep.subr.mxu0 0.0
    %962 = vmatpush1.msra.mxu0 0.0
    %963 = vmatprep.subr.mxu0 0.0
    %964 = vmatpush1.msra.mxu0 0.0
    %965 = vmatprep.subr.mxu0 0.0
    %966 = vmatpush1.msra.mxu0 0.0
    %967 = vmatprep.subr.mxu0 0.0
    %968 = vmatpush1.msra.mxu0 0.0
    %969 = vmatprep.subr.mxu0 0.0
    %970 = vmatpush1.msra.mxu0 0.0
    %971 = vmatprep.subr.mxu0 0.0
    %972 = vmatpush1.msra.mxu0 0.0
    %973 = vmatprep.subr.mxu0 0.0
    %974 = vmatpush1.msra.mxu0 0.0
    %975 = vmatprep.subr.mxu0 0.0
    %976 = vmatpush1.msra.mxu0 0.0
    %977 = vmatprep.subr.mxu0 0.0
    %978 = vmatpush1.msra.mxu0 0.0
    %979 = vmatprep.subr.mxu0 0.0
    %980 = vmatpush1.msra.mxu0 0.0
    %981 = vmatprep.subr.mxu0 0.0
    %982 = vmatpush1.msra.mxu0 0.0
    %983 = vmatprep.subr.mxu0 0.0
    %984 = vmatpush1.msra.mxu0 0.0
    %985 = vmatprep.subr.mxu0 0.0
    %986 = vmatpush1.msra.mxu0 0.0
    %987 = vmatprep.subr.mxu0 0.0
    %988 = vmatpush1.msra.mxu0 0.0
    %989 = vmatprep.subr.mxu0 0.0
    %990 = vmatpush1.msra.mxu0 0.0
    %991 = vmatprep.subr.mxu0 0.0
    %992 = vmatpush1.msra.mxu0 0.0
    %993 = vmatprep.subr.mxu0 0.0
    %994 = vmatpush1.msra.mxu0 0.0
    %995 = vmatprep.subr.mxu0 0.0
    %996 = vmatpush1.msra.mxu0 0.0
    %997 = vmatprep.subr.mxu0 0.0
    %998 = vmatpush1.msra.mxu0 0.0
    %999 = vmatprep.subr.mxu0 0.0
    %1000 = vmatpush1.msra.mxu0 0.0
    %1001 = vmatprep.subr.mxu0 0.0
    %1002 = vmatpush1.msra.mxu0 0.0
    %1003 = vmatprep.subr.mxu0 0.0
    %1004 = vmatpush1.msra.mxu0 0.0
    %1005 = vmatprep.subr.mxu0 0.0
    %1006 = vmatpush1.msra.mxu0 0.0
    %1007 = vmatprep.subr.mxu0 0.0
    %1008 = vmatpush1.msra.mxu0 0.0
    %1009 = vmatprep.subr.mxu0 0.0
    %1010 = vmatpush1.msra.mxu0 0.0
    %1011 = vmatprep.subr.mxu0 0.0
    %1012 = vmatpush1.msra.mxu0 0.0
    %1013 = vmatprep.mubr.f32.mxu0 0.0
    %1014 = vmatmul.mubr.f32.gmra.mrb[0].mxu0 %v947
    %v1015 = vpop.f32.mrb[0].mxu0
    %v1016 = vadd.f32 0.0, %v1015
    %v1017 = vpop.f32.mrb[0].mxu0
    %1018 = vdwg.mxu0
    %1019 = vmatprep.subr.mxu0 0.0
    %1020 = vmatpush1.msra.mxu0 %v200
    %1021 = vmatprep.subr.mxu0 0.0
    %1022 = vmatpush1.msra.mxu0 %v201
    %1023 = vmatprep.subr.mxu0 0.0
    %1024 = vmatpush1.msra.mxu0 %v202
    %1025 = vmatprep.subr.mxu0 0.0
    %1026 = vmatpush1.msra.mxu0 %v203
    %1027 = vmatprep.subr.mxu0 0.0
    %1028 = vmatpush1.msra.mxu0 0.0
    %1029 = vmatprep.subr.mxu0 0.0
    %1030 = vmatpush1.msra.mxu0 0.0
    %1031 = vmatprep.subr.mxu0 0.0
    %1032 = vmatpush1.msra.mxu0 0.0
    %1033 = vmatprep.subr.mxu0 0.0
    %1034 = vmatpush1.msra.mxu0 0.0
    %1035 = vmatprep.subr.mxu0 0.0
    %1036 = vmatpush1.msra.mxu0 0.0
    %1037 = vmatprep.subr.mxu0 0.0
    %1038 = vmatpush1.msra.mxu0 0.0
    %1039 = vmatprep.subr.mxu0 0.0
    %1040 = vmatpush1.msra.mxu0 0.0
    %1041 = vmatprep.subr.mxu0 0.0
    %1042 = vmatpush1.msra.mxu0 0.0
    %1043 = vmatprep.subr.mxu0 0.0
    %1044 = vmatpush1.msra.mxu0 0.0
    %1045 = vmatprep.subr.mxu0 0.0
    %1046 = vmatpush1.msra.mxu0 0.0
    %1047 = vmatprep.subr.mxu0 0.0
    %1048 = vmatpush1.msra.mxu0 0.0
    %1049 = vmatprep.subr.mxu0 0.0
    %1050 = vmatpush1.msra.mxu0 0.0
    %1051 = vmatprep.subr.mxu0 0.0
    %1052 = vmatpush1.msra.mxu0 0.0
    %1053 = vmatprep.subr.mxu0 0.0
    %1054 = vmatpush1.msra.mxu0 0.0
    %1055 = vmatprep.subr.mxu0 0.0
    %1056 = vmatpush1.msra.mxu0 0.0
    %1057 = vmatprep.subr.mxu0 0.0
    %1058 = vmatpush1.msra.mxu0 0.0
    %1059 = vmatprep.subr.mxu0 0.0
    %1060 = vmatpush1.msra.mxu0 0.0
    %1061 = vmatprep.subr.mxu0 0.0
    %1062 = vmatpush1.msra.mxu0 0.0
    %1063 = vmatprep.subr.mxu0 0.0
    %1064 = vmatpush1.msra.mxu0 0.0
    %1065 = vmatprep.subr.mxu0 0.0
    %1066 = vmatpush1.msra.mxu0 0.0
    %1067 = vmatprep.subr.mxu0 0.0
    %1068 = vmatpush1.msra.mxu0 0.0
    %1069 = vmatprep.subr.mxu0 0.0
    %1070 = vmatpush1.msra.mxu0 0.0
    %1071 = vmatprep.subr.mxu0 0.0
    %1072 = vmatpush1.msra.mxu0 0.0
    %1073 = vmatprep.subr.mxu0 0.0
    %1074 = vmatpush1.msra.mxu0 0.0
    %1075 = vmatprep.subr.mxu0 0.0
    %1076 = vmatpush1.msra.mxu0 0.0
    %1077 = vmatprep.subr.mxu0 0.0
    %1078 = vmatpush1.msra.mxu0 0.0
    %1079 = vmatprep.subr.mxu0 0.0
    %1080 = vmatpush1.msra.mxu0 0.0
    %1081 = vmatprep.subr.mxu0 0.0
    %1082 = vmatpush1.msra.mxu0 0.0
    %1083 = vmatprep.mubr.f32.mxu0 0.0
    %1084 = vmatmul.mubr.f32.gmra.mrb[0].mxu0 %v848
    %v1085 = vpop.f32.mrb[0].mxu0
    %v1086 = vadd.f32 %v1016, %v1085
    %v1087 = vpop.f32.mrb[0].mxu0
    %1088 = vdwg.mxu0
    %v1089 = vadd.f32 %v1086, %v209
    %v1090 = vtanh.pop %v1089
    %v1091 = vmul.f32 %v1090, 0.5
    %v1092 = vadd.f32 %v1091, 0.5
    %v1093 = vmul.f32 %v1092, %v832
    %1095 = vrot.lane.b32.xlu0 %v1090, 64
    %v1096 = vpop.permute.xlu0 %1095
    %v1098 = vmul.f32 %v1092, %v1096
    %1100 = vrot.lane.b32.xlu0 %v1098, 32
    %v1101 = vpop.permute.xlu0 %1100
    %v1103 = vadd.f32 %v1093, %v1101
    %v1104 = vtanh.pop %v1103
    %1106 = vrot.lane.b32.xlu0 %v1104, 64
    %v1107 = vpop.permute.xlu0 %1106
    %v1109 = vmul.f32 %v1092, %v1107
    %1111 = vrot.lane.b32.xlu0 %v1109, 32
    %v1112 = vpop.permute.xlu0 %1111
    %1114 = vst.msk [vmem:[#allocation2 + $0x2] sm:$0x1] %vm571, %v1112
    %v1116 = vrot.slane %v946, 3
    %1117 = vrot.lane.b32.xlu0 %v1116, 32
    %v1118 = vpop.permute.xlu0 %1117
    %v1119 = vsel %vm122, %v1118, 0
    %1121 = vmatprep.subr.mxu0 0.0
    %1122 = vmatpush1.msra.mxu0 %v196
    %1123 = vmatprep.subr.mxu0 0.0
    %1124 = vmatpush1.msra.mxu0 %v197
    %1125 = vmatprep.subr.mxu0 0.0
    %1126 = vmatpush1.msra.mxu0 %v198
    %1127 = vmatprep.subr.mxu0 0.0
    %1128 = vmatpush1.msra.mxu0 %v199
    %1129 = vmatprep.subr.mxu0 0.0
    %1130 = vmatpush1.msra.mxu0 0.0
    %1131 = vmatprep.subr.mxu0 0.0
    %1132 = vmatpush1.msra.mxu0 0.0
    %1133 = vmatprep.subr.mxu0 0.0
    %1134 = vmatpush1.msra.mxu0 0.0
    %1135 = vmatprep.subr.mxu0 0.0
    %1136 = vmatpush1.msra.mxu0 0.0
    %1137 = vmatprep.subr.mxu0 0.0
    %1138 = vmatpush1.msra.mxu0 0.0
    %1139 = vmatprep.subr.mxu0 0.0
    %1140 = vmatpush1.msra.mxu0 0.0
    %1141 = vmatprep.subr.mxu0 0.0
    %1142 = vmatpush1.msra.mxu0 0.0
    %1143 = vmatprep.subr.mxu0 0.0
    %1144 = vmatpush1.msra.mxu0 0.0
    %1145 = vmatprep.subr.mxu0 0.0
    %1146 = vmatpush1.msra.mxu0 0.0
    %1147 = vmatprep.subr.mxu0 0.0
    %1148 = vmatpush1.msra.mxu0 0.0
    %1149 = vmatprep.subr.mxu0 0.0
    %1150 = vmatpush1.msra.mxu0 0.0
    %1151 = vmatprep.subr.mxu0 0.0
    %1152 = vmatpush1.msra.mxu0 0.0
    %1153 = vmatprep.subr.mxu0 0.0
    %1154 = vmatpush1.msra.mxu0 0.0
    %1155 = vmatprep.subr.mxu0 0.0
    %1156 = vmatpush1.msra.mxu0 0.0
    %1157 = vmatprep.subr.mxu0 0.0
    %1158 = vmatpush1.msra.mxu0 0.0
    %1159 = vmatprep.subr.mxu0 0.0
    %1160 = vmatpush1.msra.mxu0 0.0
    %1161 = vmatprep.subr.mxu0 0.0
    %1162 = vmatpush1.msra.mxu0 0.0
    %1163 = vmatprep.subr.mxu0 0.0
    %1164 = vmatpush1.msra.mxu0 0.0
    %1165 = vmatprep.subr.mxu0 0.0
    %1166 = vmatpush1.msra.mxu0 0.0
    %1167 = vmatprep.subr.mxu0 0.0
    %1168 = vmatpush1.msra.mxu0 0.0
    %1169 = vmatprep.subr.mxu0 0.0
    %1170 = vmatpush1.msra.mxu0 0.0
    %1171 = vmatprep.subr.mxu0 0.0
    %1172 = vmatpush1.msra.mxu0 0.0
    %1173 = vmatprep.subr.mxu0 0.0
    %1174 = vmatpush1.msra.mxu0 0.0
    %1175 = vmatprep.subr.mxu0 0.0
    %1176 = vmatpush1.msra.mxu0 0.0
    %1177 = vmatprep.subr.mxu0 0.0
    %1178 = vmatpush1.msra.mxu0 0.0
    %1179 = vmatprep.subr.mxu0 0.0
    %1180 = vmatpush1.msra.mxu0 0.0
    %1181 = vmatprep.subr.mxu0 0.0
    %1182 = vmatpush1.msra.mxu0 0.0
    %1183 = vmatprep.subr.mxu0 0.0
    %1184 = vmatpush1.msra.mxu0 0.0
    %1185 = vmatprep.mubr.f32.mxu0 0.0
    %1186 = vmatmul.mubr.f32.gmra.mrb[0].mxu0 %v1119
    %v1187 = vpop.f32.mrb[0].mxu0
    %v1188 = vadd.f32 0.0, %v1187
    %v1189 = vpop.f32.mrb[0].mxu0
    %1190 = vdwg.mxu0
    %v1192 = vrot.slane %v1188, 4
    %v1194 = vadd.f32 %v193, %v1192
    %v1195 = vtanh.pop %v1194
    %v1196 = vmul.f32 %v1195, 0.5
    %v1197 = vadd.f32 %v1196, 0.5
    %v1199 = vrot.slane %v940, 7
    %v1201 = vmul.f32 %v1197, %v1199
    %1203 = vrot.lane.b32.xlu0 %v1195, 64
    %v1204 = vpop.permute.xlu0 %1203
    %v1206 = vmul.f32 %v1197, %v1204
    %1208 = vrot.lane.b32.xlu0 %v1206, 32
    %v1209 = vpop.permute.xlu0 %1208
    %v1211 = vadd.f32 %v1201, %v1209
    %v1212 = vtanh.pop %v1211
    %1214 = vrot.lane.b32.xlu0 %v1212, 64
    %v1215 = vpop.permute.xlu0 %1214
    %v1217 = vmul.f32 %v1197, %v1215
    %v1218 = vsel %vm122, %v1112, 0
    %1220 = vmatprep.subr.mxu0 0.0
    %1221 = vmatpush1.msra.mxu0 %v204
    %1222 = vmatprep.subr.mxu0 0.0
    %1223 = vmatpush1.msra.mxu0 %v205
    %1224 = vmatprep.subr.mxu0 0.0
    %1225 = vmatpush1.msra.mxu0 %v206
    %1226 = vmatprep.subr.mxu0 0.0
    %1227 = vmatpush1.msra.mxu0 %v207
    %1228 = vmatprep.subr.mxu0 0.0
    %1229 = vmatpush1.msra.mxu0 0.0
    %1230 = vmatprep.subr.mxu0 0.0
    %1231 = vmatpush1.msra.mxu0 0.0
    %1232 = vmatprep.subr.mxu0 0.0
    %1233 = vmatpush1.msra.mxu0 0.0
    %1234 = vmatprep.subr.mxu0 0.0
    %1235 = vmatpush1.msra.mxu0 0.0
    %1236 = vmatprep.subr.mxu0 0.0
    %1237 = vmatpush1.msra.mxu0 0.0
    %1238 = vmatprep.subr.mxu0 0.0
    %1239 = vmatpush1.msra.mxu0 0.0
    %1240 = vmatprep.subr.mxu0 0.0
    %1241 = vmatpush1.msra.mxu0 0.0
    %1242 = vmatprep.subr.mxu0 0.0
    %1243 = vmatpush1.msra.mxu0 0.0
    %1244 = vmatprep.subr.mxu0 0.0
    %1245 = vmatpush1.msra.mxu0 0.0
    %1246 = vmatprep.subr.mxu0 0.0
    %1247 = vmatpush1.msra.mxu0 0.0
    %1248 = vmatprep.subr.mxu0 0.0
    %1249 = vmatpush1.msra.mxu0 0.0
    %1250 = vmatprep.subr.mxu0 0.0
    %1251 = vmatpush1.msra.mxu0 0.0
    %1252 = vmatprep.subr.mxu0 0.0
    %1253 = vmatpush1.msra.mxu0 0.0
    %1254 = vmatprep.subr.mxu0 0.0
    %1255 = vmatpush1.msra.mxu0 0.0
    %1256 = vmatprep.subr.mxu0 0.0
    %1257 = vmatpush1.msra.mxu0 0.0
    %1258 = vmatprep.subr.mxu0 0.0
    %1259 = vmatpush1.msra.mxu0 0.0
    %1260 = vmatprep.subr.mxu0 0.0
    %1261 = vmatpush1.msra.mxu0 0.0
    %1262 = vmatprep.subr.mxu0 0.0
    %1263 = vmatpush1.msra.mxu0 0.0
    %1264 = vmatprep.subr.mxu0 0.0
    %1265 = vmatpush1.msra.mxu0 0.0
    %1266 = vmatprep.subr.mxu0 0.0
    %1267 = vmatpush1.msra.mxu0 0.0
    %1268 = vmatprep.subr.mxu0 0.0
    %1269 = vmatpush1.msra.mxu0 0.0
    %1270 = vmatprep.subr.mxu0 0.0
    %1271 = vmatpush1.msra.mxu0 0.0
    %1272 = vmatprep.subr.mxu0 0.0
    %1273 = vmatpush1.msra.mxu0 0.0
    %1274 = vmatprep.subr.mxu0 0.0
    %1275 = vmatpush1.msra.mxu0 0.0
    %1276 = vmatprep.subr.mxu0 0.0
    %1277 = vmatpush1.msra.mxu0 0.0
    %1278 = vmatprep.subr.mxu0 0.0
    %1279 = vmatpush1.msra.mxu0 0.0
    %1280 = vmatprep.subr.mxu0 0.0
    %1281 = vmatpush1.msra.mxu0 0.0
    %1282 = vmatprep.subr.mxu0 0.0
    %1283 = vmatpush1.msra.mxu0 0.0
    %1284 = vmatprep.mubr.f32.mxu0 0.0
    %1285 = vmatmul.mubr.f32.gmra.mrb[0].mxu0 %v1218
    %v1286 = vpop.f32.mrb[0].mxu0
    %v1287 = vadd.f32 0.0, %v1286
    %v1288 = vpop.f32.mrb[0].mxu0
    %1289 = vdwg.mxu0
    %1290 = vmatprep.subr.mxu0 0.0
    %1291 = vmatpush1.msra.mxu0 %v200
    %1292 = vmatprep.subr.mxu0 0.0
    %1293 = vmatpush1.msra.mxu0 %v201
    %1294 = vmatprep.subr.mxu0 0.0
    %1295 = vmatpush1.msra.mxu0 %v202
    %1296 = vmatprep.subr.mxu0 0.0
    %1297 = vmatpush1.msra.mxu0 %v203
    %1298 = vmatprep.subr.mxu0 0.0
    %1299 = vmatpush1.msra.mxu0 0.0
    %1300 = vmatprep.subr.mxu0 0.0
    %1301 = vmatpush1.msra.mxu0 0.0
    %1302 = vmatprep.subr.mxu0 0.0
    %1303 = vmatpush1.msra.mxu0 0.0
    %1304 = vmatprep.subr.mxu0 0.0
    %1305 = vmatpush1.msra.mxu0 0.0
    %1306 = vmatprep.subr.mxu0 0.0
    %1307 = vmatpush1.msra.mxu0 0.0
    %1308 = vmatprep.subr.mxu0 0.0
    %1309 = vmatpush1.msra.mxu0 0.0
    %1310 = vmatprep.subr.mxu0 0.0
    %1311 = vmatpush1.msra.mxu0 0.0
    %1312 = vmatprep.subr.mxu0 0.0
    %1313 = vmatpush1.msra.mxu0 0.0
    %1314 = vmatprep.subr.mxu0 0.0
    %1315 = vmatpush1.msra.mxu0 0.0
    %1316 = vmatprep.subr.mxu0 0.0
    %1317 = vmatpush1.msra.mxu0 0.0
    %1318 = vmatprep.subr.mxu0 0.0
    %1319 = vmatpush1.msra.mxu0 0.0
    %1320 = vmatprep.subr.mxu0 0.0
    %1321 = vmatpush1.msra.mxu0 0.0
    %1322 = vmatprep.subr.mxu0 0.0
    %1323 = vmatpush1.msra.mxu0 0.0
    %1324 = vmatprep.subr.mxu0 0.0
    %1325 = vmatpush1.msra.mxu0 0.0
    %1326 = vmatprep.subr.mxu0 0.0
    %1327 = vmatpush1.msra.mxu0 0.0
    %1328 = vmatprep.subr.mxu0 0.0
    %1329 = vmatpush1.msra.mxu0 0.0
    %1330 = vmatprep.subr.mxu0 0.0
    %1331 = vmatpush1.msra.mxu0 0.0
    %1332 = vmatprep.subr.mxu0 0.0
    %1333 = vmatpush1.msra.mxu0 0.0
    %1334 = vmatprep.subr.mxu0 0.0
    %1335 = vmatpush1.msra.mxu0 0.0
    %1336 = vmatprep.subr.mxu0 0.0
    %1337 = vmatpush1.msra.mxu0 0.0
    %1338 = vmatprep.subr.mxu0 0.0
    %1339 = vmatpush1.msra.mxu0 0.0
    %1340 = vmatprep.subr.mxu0 0.0
    %1341 = vmatpush1.msra.mxu0 0.0
    %1342 = vmatprep.subr.mxu0 0.0
    %1343 = vmatpush1.msra.mxu0 0.0
    %1344 = vmatprep.subr.mxu0 0.0
    %1345 = vmatpush1.msra.mxu0 0.0
    %1346 = vmatprep.subr.mxu0 0.0
    %1347 = vmatpush1.msra.mxu0 0.0
    %1348 = vmatprep.subr.mxu0 0.0
    %1349 = vmatpush1.msra.mxu0 0.0
    %1350 = vmatprep.subr.mxu0 0.0
    %1351 = vmatpush1.msra.mxu0 0.0
    %1352 = vmatprep.subr.mxu0 0.0
    %1353 = vmatpush1.msra.mxu0 0.0
    %1354 = vmatprep.mubr.f32.mxu0 0.0
    %1355 = vmatmul.mubr.f32.gmra.mrb[0].mxu0 %v1119
    %v1356 = vpop.f32.mrb[0].mxu0
    %v1357 = vadd.f32 %v1287, %v1356
    %v1358 = vpop.f32.mrb[0].mxu0
    %1359 = vdwg.mxu0
    %v1360 = vadd.f32 %v1357, %v209
    %v1361 = vtanh.pop %v1360
    %v1362 = vmul.f32 %v1361, 0.5
    %v1363 = vadd.f32 %v1362, 0.5
    %v1364 = vmul.f32 %v1363, %v1103
    %1366 = vrot.lane.b32.xlu0 %v1361, 64
    %v1367 = vpop.permute.xlu0 %1366
    %v1369 = vmul.f32 %v1363, %v1367
    %1371 = vrot.lane.b32.xlu0 %v1369, 32
    %v1372 = vpop.permute.xlu0 %1371
    %v1374 = vadd.f32 %v1364, %v1372
    %v1375 = vtanh.pop %v1374
    %1377 = vrot.lane.b32.xlu0 %v1375, 64
    %v1378 = vpop.permute.xlu0 %1377
    %v1380 = vmul.f32 %v1363, %v1378
    %1382 = vrot.lane.b32.xlu0 %v1380, 32
    %v1383 = vpop.permute.xlu0 %1382
    %1385 = vst.msk [vmem:[#allocation2 + $0x3] sm:$0x1] %vm571, %v1383
    %v1387 = vrot.slane %v1217, 4
    %1388 = vrot.lane.b32.xlu0 %v1387, 32
    %v1389 = vpop.permute.xlu0 %1388
    %v1390 = vsel %vm122, %v1389, 0
    %1392 = vmatprep.subr.mxu0 0.0
    %1393 = vmatpush1.msra.mxu0 %v196
    %1394 = vmatprep.subr.mxu0 0.0
    %1395 = vmatpush1.msra.mxu0 %v197
    %1396 = vmatprep.subr.mxu0 0.0
    %1397 = vmatpush1.msra.mxu0 %v198
    %1398 = vmatprep.subr.mxu0 0.0
    %1399 = vmatpush1.msra.mxu0 %v199
    %1400 = vmatprep.subr.mxu0 0.0
    %1401 = vmatpush1.msra.mxu0 0.0
    %1402 = vmatprep.subr.mxu0 0.0
    %1403 = vmatpush1.msra.mxu0 0.0
    %1404 = vmatprep.subr.mxu0 0.0
    %1405 = vmatpush1.msra.mxu0 0.0
    %1406 = vmatprep.subr.mxu0 0.0
    %1407 = vmatpush1.msra.mxu0 0.0
    %1408 = vmatprep.subr.mxu0 0.0
    %1409 = vmatpush1.msra.mxu0 0.0
    %1410 = vmatprep.subr.mxu0 0.0
    %1411 = vmatpush1.msra.mxu0 0.0
    %1412 = vmatprep.subr.mxu0 0.0
    %1413 = vmatpush1.msra.mxu0 0.0
    %1414 = vmatprep.subr.mxu0 0.0
    %1415 = vmatpush1.msra.mxu0 0.0
    %1416 = vmatprep.subr.mxu0 0.0
    %1417 = vmatpush1.msra.mxu0 0.0
    %1418 = vmatprep.subr.mxu0 0.0
    %1419 = vmatpush1.msra.mxu0 0.0
    %1420 = vmatprep.subr.mxu0 0.0
    %1421 = vmatpush1.msra.mxu0 0.0
    %1422 = vmatprep.subr.mxu0 0.0
    %1423 = vmatpush1.msra.mxu0 0.0
    %1424 = vmatprep.subr.mxu0 0.0
    %1425 = vmatpush1.msra.mxu0 0.0
    %1426 = vmatprep.subr.mxu0 0.0
    %1427 = vmatpush1.msra.mxu0 0.0
    %1428 = vmatprep.subr.mxu0 0.0
    %1429 = vmatpush1.msra.mxu0 0.0
    %1430 = vmatprep.subr.mxu0 0.0
    %1431 = vmatpush1.msra.mxu0 0.0
    %1432 = vmatprep.subr.mxu0 0.0
    %1433 = vmatpush1.msra.mxu0 0.0
    %1434 = vmatprep.subr.mxu0 0.0
    %1435 = vmatpush1.msra.mxu0 0.0
    %1436 = vmatprep.subr.mxu0 0.0
    %1437 = vmatpush1.msra.mxu0 0.0
    %1438 = vmatprep.subr.mxu0 0.0
    %1439 = vmatpush1.msra.mxu0 0.0
    %1440 = vmatprep.subr.mxu0 0.0
    %1441 = vmatpush1.msra.mxu0 0.0
    %1442 = vmatprep.subr.mxu0 0.0
    %1443 = vmatpush1.msra.mxu0 0.0
    %1444 = vmatprep.subr.mxu0 0.0
    %1445 = vmatpush1.msra.mxu0 0.0
    %1446 = vmatprep.subr.mxu0 0.0
    %1447 = vmatpush1.msra.mxu0 0.0
    %1448 = vmatprep.subr.mxu0 0.0
    %1449 = vmatpush1.msra.mxu0 0.0
    %1450 = vmatprep.subr.mxu0 0.0
    %1451 = vmatpush1.msra.mxu0 0.0
    %1452 = vmatprep.subr.mxu0 0.0
    %1453 = vmatpush1.msra.mxu0 0.0
    %1454 = vmatprep.subr.mxu0 0.0
    %1455 = vmatpush1.msra.mxu0 0.0
    %1456 = vmatprep.mubr.f32.mxu0 0.0
    %1457 = vmatmul.mubr.f32.gmra.mrb[0].mxu0 %v1390
    %v1458 = vpop.f32.mrb[0].mxu0
    %v1459 = vadd.f32 0.0, %v1458
    %v1460 = vpop.f32.mrb[0].mxu0
    %1461 = vdwg.mxu0
    %v1463 = vrot.slane %v1459, 3
    %v1465 = vadd.f32 %v193, %v1463
    %v1466 = vtanh.pop %v1465
    %v1467 = vmul.f32 %v1466, 0.5
    %v1468 = vadd.f32 %v1467, 0.5
    %v1470 = vrot.slane %v1211, 7
    %v1472 = vmul.f32 %v1468, %v1470
    %1474 = vrot.lane.b32.xlu0 %v1466, 64
    %v1475 = vpop.permute.xlu0 %1474
    %v1477 = vmul.f32 %v1468, %v1475
    %1479 = vrot.lane.b32.xlu0 %v1477, 32
    %v1480 = vpop.permute.xlu0 %1479
    %v1482 = vadd.f32 %v1472, %v1480
    %v1483 = vtanh.pop %v1482
    %1485 = vrot.lane.b32.xlu0 %v1483, 64
    %v1486 = vpop.permute.xlu0 %1485
    %v1488 = vmul.f32 %v1468, %v1486
    %v1489 = vsel %vm122, %v1383, 0
    %1491 = vmatprep.subr.mxu0 0.0
    %1492 = vmatpush1.msra.mxu0 %v204
    %1493 = vmatprep.subr.mxu0 0.0
    %1494 = vmatpush1.msra.mxu0 %v205
    %1495 = vmatprep.subr.mxu0 0.0
    %1496 = vmatpush1.msra.mxu0 %v206
    %1497 = vmatprep.subr.mxu0 0.0
    %1498 = vmatpush1.msra.mxu0 %v207
    %1499 = vmatprep.subr.mxu0 0.0
    %1500 = vmatpush1.msra.mxu0 0.0
    %1501 = vmatprep.subr.mxu0 0.0
    %1502 = vmatpush1.msra.mxu0 0.0
    %1503 = vmatprep.subr.mxu0 0.0
    %1504 = vmatpush1.msra.mxu0 0.0
    %1505 = vmatprep.subr.mxu0 0.0
    %1506 = vmatpush1.msra.mxu0 0.0
    %1507 = vmatprep.subr.mxu0 0.0
    %1508 = vmatpush1.msra.mxu0 0.0
    %1509 = vmatprep.subr.mxu0 0.0
    %1510 = vmatpush1.msra.mxu0 0.0
    %1511 = vmatprep.subr.mxu0 0.0
    %1512 = vmatpush1.msra.mxu0 0.0
    %1513 = vmatprep.subr.mxu0 0.0
    %1514 = vmatpush1.msra.mxu0 0.0
    %1515 = vmatprep.subr.mxu0 0.0
    %1516 = vmatpush1.msra.mxu0 0.0
    %1517 = vmatprep.subr.mxu0 0.0
    %1518 = vmatpush1.msra.mxu0 0.0
    %1519 = vmatprep.subr.mxu0 0.0
    %1520 = vmatpush1.msra.mxu0 0.0
    %1521 = vmatprep.subr.mxu0 0.0
    %1522 = vmatpush1.msra.mxu0 0.0
    %1523 = vmatprep.subr.mxu0 0.0
    %1524 = vmatpush1.msra.mxu0 0.0
    %1525 = vmatprep.subr.mxu0 0.0
    %1526 = vmatpush1.msra.mxu0 0.0
    %1527 = vmatprep.subr.mxu0 0.0
    %1528 = vmatpush1.msra.mxu0 0.0
    %1529 = vmatprep.subr.mxu0 0.0
    %1530 = vmatpush1.msra.mxu0 0.0
    %1531 = vmatprep.subr.mxu0 0.0
    %1532 = vmatpush1.msra.mxu0 0.0
    %1533 = vmatprep.subr.mxu0 0.0
    %1534 = vmatpush1.msra.mxu0 0.0
    %1535 = vmatprep.subr.mxu0 0.0
    %1536 = vmatpush1.msra.mxu0 0.0
    %1537 = vmatprep.subr.mxu0 0.0
    %1538 = vmatpush1.msra.mxu0 0.0
    %1539 = vmatprep.subr.mxu0 0.0
    %1540 = vmatpush1.msra.mxu0 0.0
    %1541 = vmatprep.subr.mxu0 0.0
    %1542 = vmatpush1.msra.mxu0 0.0
    %1543 = vmatprep.subr.mxu0 0.0
    %1544 = vmatpush1.msra.mxu0 0.0
    %1545 = vmatprep.subr.mxu0 0.0
    %1546 = vmatpush1.msra.mxu0 0.0
    %1547 = vmatprep.subr.mxu0 0.0
    %1548 = vmatpush1.msra.mxu0 0.0
    %1549 = vmatprep.subr.mxu0 0.0
    %1550 = vmatpush1.msra.mxu0 0.0
    %1551 = vmatprep.subr.mxu0 0.0
    %1552 = vmatpush1.msra.mxu0 0.0
    %1553 = vmatprep.subr.mxu0 0.0
    %1554 = vmatpush1.msra.mxu0 0.0
    %1555 = vmatprep.mubr.f32.mxu0 0.0
    %1556 = vmatmul.mubr.f32.gmra.mrb[0].mxu0 %v1489
    %v1557 = vpop.f32.mrb[0].mxu0
    %v1558 = vadd.f32 0.0, %v1557
    %v1559 = vpop.f32.mrb[0].mxu0
    %1560 = vdwg.mxu0
    %1561 = vmatprep.subr.mxu0 0.0
    %1562 = vmatpush1.msra.mxu0 %v200
    %1563 = vmatprep.subr.mxu0 0.0
    %1564 = vmatpush1.msra.mxu0 %v201
    %1565 = vmatprep.subr.mxu0 0.0
    %1566 = vmatpush1.msra.mxu0 %v202
    %1567 = vmatprep.subr.mxu0 0.0
    %1568 = vmatpush1.msra.mxu0 %v203
    %1569 = vmatprep.subr.mxu0 0.0
    %1570 = vmatpush1.msra.mxu0 0.0
    %1571 = vmatprep.subr.mxu0 0.0
    %1572 = vmatpush1.msra.mxu0 0.0
    %1573 = vmatprep.subr.mxu0 0.0
    %1574 = vmatpush1.msra.mxu0 0.0
    %1575 = vmatprep.subr.mxu0 0.0
    %1576 = vmatpush1.msra.mxu0 0.0
    %1577 = vmatprep.subr.mxu0 0.0
    %1578 = vmatpush1.msra.mxu0 0.0
    %1579 = vmatprep.subr.mxu0 0.0
    %1580 = vmatpush1.msra.mxu0 0.0
    %1581 = vmatprep.subr.mxu0 0.0
    %1582 = vmatpush1.msra.mxu0 0.0
    %1583 = vmatprep.subr.mxu0 0.0
    %1584 = vmatpush1.msra.mxu0 0.0
    %1585 = vmatprep.subr.mxu0 0.0
    %1586 = vmatpush1.msra.mxu0 0.0
    %1587 = vmatprep.subr.mxu0 0.0
    %1588 = vmatpush1.msra.mxu0 0.0
    %1589 = vmatprep.subr.mxu0 0.0
    %1590 = vmatpush1.msra.mxu0 0.0
    %1591 = vmatprep.subr.mxu0 0.0
    %1592 = vmatpush1.msra.mxu0 0.0
    %1593 = vmatprep.subr.mxu0 0.0
    %1594 = vmatpush1.msra.mxu0 0.0
    %1595 = vmatprep.subr.mxu0 0.0
    %1596 = vmatpush1.msra.mxu0 0.0
    %1597 = vmatprep.subr.mxu0 0.0
    %1598 = vmatpush1.msra.mxu0 0.0
    %1599 = vmatprep.subr.mxu0 0.0
    %1600 = vmatpush1.msra.mxu0 0.0
    %1601 = vmatprep.subr.mxu0 0.0
    %1602 = vmatpush1.msra.mxu0 0.0
    %1603 = vmatprep.subr.mxu0 0.0
    %1604 = vmatpush1.msra.mxu0 0.0
    %1605 = vmatprep.subr.mxu0 0.0
    %1606 = vmatpush1.msra.mxu0 0.0
    %1607 = vmatprep.subr.mxu0 0.0
    %1608 = vmatpush1.msra.mxu0 0.0
    %1609 = vmatprep.subr.mxu0 0.0
    %1610 = vmatpush1.msra.mxu0 0.0
    %1611 = vmatprep.subr.mxu0 0.0
    %1612 = vmatpush1.msra.mxu0 0.0
    %1613 = vmatprep.subr.mxu0 0.0
    %1614 = vmatpush1.msra.mxu0 0.0
    %1615 = vmatprep.subr.mxu0 0.0
    %1616 = vmatpush1.msra.mxu0 0.0
    %1617 = vmatprep.subr.mxu0 0.0
    %1618 = vmatpush1.msra.mxu0 0.0
    %1619 = vmatprep.subr.mxu0 0.0
    %1620 = vmatpush1.msra.mxu0 0.0
    %1621 = vmatprep.subr.mxu0 0.0
    %1622 = vmatpush1.msra.mxu0 0.0
    %1623 = vmatprep.subr.mxu0 0.0
    %1624 = vmatpush1.msra.mxu0 0.0
    %1625 = vmatprep.mubr.f32.mxu0 0.0
    %1626 = vmatmul.mubr.f32.gmra.mrb[0].mxu0 %v1390
    %v1627 = vpop.f32.mrb[0].mxu0
    %v1628 = vadd.f32 %v1558, %v1627
    %v1629 = vpop.f32.mrb[0].mxu0
    %1630 = vdwg.mxu0
    %v1631 = vadd.f32 %v1628, %v209
    %v1632 = vtanh.pop %v1631
    %v1633 = vmul.f32 %v1632, 0.5
    %v1634 = vadd.f32 %v1633, 0.5
    %v1635 = vmul.f32 %v1634, %v1374
    %1637 = vrot.lane.b32.xlu0 %v1632, 64
    %v1638 = vpop.permute.xlu0 %1637
    %v1640 = vmul.f32 %v1634, %v1638
    %1642 = vrot.lane.b32.xlu0 %v1640, 32
    %v1643 = vpop.permute.xlu0 %1642
    %v1645 = vadd.f32 %v1635, %v1643
    %v1646 = vtanh.pop %v1645
    %1648 = vrot.lane.b32.xlu0 %v1646, 64
    %v1649 = vpop.permute.xlu0 %1648
    %v1651 = vmul.f32 %v1634, %v1649
    %1653 = vrot.lane.b32.xlu0 %v1651, 32
    %v1654 = vpop.permute.xlu0 %1653
    %1656 = vst.msk [vmem:[#allocation2 + $0x4] sm:$0x1] %vm571, %v1654
    %v1658 = vrot.slane %v1488, 5
    %1659 = vrot.lane.b32.xlu0 %v1658, 32
    %v1660 = vpop.permute.xlu0 %1659
    %v1661 = vsel %vm122, %v1660, 0
    %1663 = vmatprep.subr.mxu0 0.0
    %1664 = vmatpush1.msra.mxu0 %v196
    %1665 = vmatprep.subr.mxu0 0.0
    %1666 = vmatpush1.msra.mxu0 %v197
    %1667 = vmatprep.subr.mxu0 0.0
    %1668 = vmatpush1.msra.mxu0 %v198
    %1669 = vmatprep.subr.mxu0 0.0
    %1670 = vmatpush1.msra.mxu0 %v199
    %1671 = vmatprep.subr.mxu0 0.0
    %1672 = vmatpush1.msra.mxu0 0.0
    %1673 = vmatprep.subr.mxu0 0.0
    %1674 = vmatpush1.msra.mxu0 0.0
    %1675 = vmatprep.subr.mxu0 0.0
    %1676 = vmatpush1.msra.mxu0 0.0
    %1677 = vmatprep.subr.mxu0 0.0
    %1678 = vmatpush1.msra.mxu0 0.0
    %1679 = vmatprep.subr.mxu0 0.0
    %1680 = vmatpush1.msra.mxu0 0.0
    %1681 = vmatprep.subr.mxu0 0.0
    %1682 = vmatpush1.msra.mxu0 0.0
    %1683 = vmatprep.subr.mxu0 0.0
    %1684 = vmatpush1.msra.mxu0 0.0
    %1685 = vmatprep.subr.mxu0 0.0
    %1686 = vmatpush1.msra.mxu0 0.0
    %1687 = vmatprep.subr.mxu0 0.0
    %1688 = vmatpush1.msra.mxu0 0.0
    %1689 = vmatprep.subr.mxu0 0.0
    %1690 = vmatpush1.msra.mxu0 0.0
    %1691 = vmatprep.subr.mxu0 0.0
    %1692 = vmatpush1.msra.mxu0 0.0
    %1693 = vmatprep.subr.mxu0 0.0
    %1694 = vmatpush1.msra.mxu0 0.0
    %1695 = vmatprep.subr.mxu0 0.0
    %1696 = vmatpush1.msra.mxu0 0.0
    %1697 = vmatprep.subr.mxu0 0.0
    %1698 = vmatpush1.msra.mxu0 0.0
    %1699 = vmatprep.subr.mxu0 0.0
    %1700 = vmatpush1.msra.mxu0 0.0
    %1701 = vmatprep.subr.mxu0 0.0
    %1702 = vmatpush1.msra.mxu0 0.0
    %1703 = vmatprep.subr.mxu0 0.0
    %1704 = vmatpush1.msra.mxu0 0.0
    %1705 = vmatprep.subr.mxu0 0.0
    %1706 = vmatpush1.msra.mxu0 0.0
    %1707 = vmatprep.subr.mxu0 0.0
    %1708 = vmatpush1.msra.mxu0 0.0
    %1709 = vmatprep.subr.mxu0 0.0
    %1710 = vmatpush1.msra.mxu0 0.0
    %1711 = vmatprep.subr.mxu0 0.0
    %1712 = vmatpush1.msra.mxu0 0.0
    %1713 = vmatprep.subr.mxu0 0.0
    %1714 = vmatpush1.msra.mxu0 0.0
    %1715 = vmatprep.subr.mxu0 0.0
    %1716 = vmatpush1.msra.mxu0 0.0
    %1717 = vmatprep.subr.mxu0 0.0
    %1718 = vmatpush1.msra.mxu0 0.0
    %1719 = vmatprep.subr.mxu0 0.0
    %1720 = vmatpush1.msra.mxu0 0.0
    %1721 = vmatprep.subr.mxu0 0.0
    %1722 = vmatpush1.msra.mxu0 0.0
    %1723 = vmatprep.subr.mxu0 0.0
    %1724 = vmatpush1.msra.mxu0 0.0
    %1725 = vmatprep.subr.mxu0 0.0
    %1726 = vmatpush1.msra.mxu0 0.0
    %1727 = vmatprep.mubr.f32.mxu0 0.0
    %1728 = vmatmul.mubr.f32.gmra.mrb[0].mxu0 %v1661
    %v1729 = vpop.f32.mrb[0].mxu0
    %v1730 = vadd.f32 0.0, %v1729
    %v1731 = vpop.f32.mrb[0].mxu0
    %1732 = vdwg.mxu0
    %v1734 = vrot.slane %v1730, 2
    %v1736 = vadd.f32 %v193, %v1734
    %v1737 = vtanh.pop %v1736
    %v1738 = vmul.f32 %v1737, 0.5
    %v1739 = vadd.f32 %v1738, 0.5
    %v1741 = vrot.slane %v1482, 7
    %v1743 = vmul.f32 %v1739, %v1741
    %1745 = vrot.lane.b32.xlu0 %v1737, 64
    %v1746 = vpop.permute.xlu0 %1745
    %v1748 = vmul.f32 %v1739, %v1746
    %1750 = vrot.lane.b32.xlu0 %v1748, 32
    %v1751 = vpop.permute.xlu0 %1750
    %v1753 = vadd.f32 %v1743, %v1751
    %v1754 = vtanh.pop %v1753
    %1756 = vrot.lane.b32.xlu0 %v1754, 64
    %v1757 = vpop.permute.xlu0 %1756
    %v1759 = vmul.f32 %v1739, %v1757
    %v1760 = vsel %vm122, %v1654, 0
    %1762 = vmatprep.subr.mxu0 0.0
    %1763 = vmatpush1.msra.mxu0 %v204
    %1764 = vmatprep.subr.mxu0 0.0
    %1765 = vmatpush1.msra.mxu0 %v205
    %1766 = vmatprep.subr.mxu0 0.0
    %1767 = vmatpush1.msra.mxu0 %v206
    %1768 = vmatprep.subr.mxu0 0.0
    %1769 = vmatpush1.msra.mxu0 %v207
    %1770 = vmatprep.subr.mxu0 0.0
    %1771 = vmatpush1.msra.mxu0 0.0
    %1772 = vmatprep.subr.mxu0 0.0
    %1773 = vmatpush1.msra.mxu0 0.0
    %1774 = vmatprep.subr.mxu0 0.0
    %1775 = vmatpush1.msra.mxu0 0.0
    %1776 = vmatprep.subr.mxu0 0.0
    %1777 = vmatpush1.msra.mxu0 0.0
    %1778 = vmatprep.subr.mxu0 0.0
    %1779 = vmatpush1.msra.mxu0 0.0
    %1780 = vmatprep.subr.mxu0 0.0
    %1781 = vmatpush1.msra.mxu0 0.0
    %1782 = vmatprep.subr.mxu0 0.0
    %1783 = vmatpush1.msra.mxu0 0.0
    %1784 = vmatprep.subr.mxu0 0.0
    %1785 = vmatpush1.msra.mxu0 0.0
    %1786 = vmatprep.subr.mxu0 0.0
    %1787 = vmatpush1.msra.mxu0 0.0
    %1788 = vmatprep.subr.mxu0 0.0
    %1789 = vmatpush1.msra.mxu0 0.0
    %1790 = vmatprep.subr.mxu0 0.0
    %1791 = vmatpush1.msra.mxu0 0.0
    %1792 = vmatprep.subr.mxu0 0.0
    %1793 = vmatpush1.msra.mxu0 0.0
    %1794 = vmatprep.subr.mxu0 0.0
    %1795 = vmatpush1.msra.mxu0 0.0
    %1796 = vmatprep.subr.mxu0 0.0
    %1797 = vmatpush1.msra.mxu0 0.0
    %1798 = vmatprep.subr.mxu0 0.0
    %1799 = vmatpush1.msra.mxu0 0.0
    %1800 = vmatprep.subr.mxu0 0.0
    %1801 = vmatpush1.msra.mxu0 0.0
    %1802 = vmatprep.subr.mxu0 0.0
    %1803 = vmatpush1.msra.mxu0 0.0
    %1804 = vmatprep.subr.mxu0 0.0
    %1805 = vmatpush1.msra.mxu0 0.0
    %1806 = vmatprep.subr.mxu0 0.0
    %1807 = vmatpush1.msra.mxu0 0.0
    %1808 = vmatprep.subr.mxu0 0.0
    %1809 = vmatpush1.msra.mxu0 0.0
    %1810 = vmatprep.subr.mxu0 0.0
    %1811 = vmatpush1.msra.mxu0 0.0
    %1812 = vmatprep.subr.mxu0 0.0
    %1813 = vmatpush1.msra.mxu0 0.0
    %1814 = vmatprep.subr.mxu0 0.0
    %1815 = vmatpush1.msra.mxu0 0.0
    %1816 = vmatprep.subr.mxu0 0.0
    %1817 = vmatpush1.msra.mxu0 0.0
    %1818 = vmatprep.subr.mxu0 0.0
    %1819 = vmatpush1.msra.mxu0 0.0
    %1820 = vmatprep.subr.mxu0 0.0
    %1821 = vmatpush1.msra.mxu0 0.0
    %1822 = vmatprep.subr.mxu0 0.0
    %1823 = vmatpush1.msra.mxu0 0.0
    %1824 = vmatprep.subr.mxu0 0.0
    %1825 = vmatpush1.msra.mxu0 0.0
    %1826 = vmatprep.mubr.f32.mxu0 0.0
    %1827 = vmatmul.mubr.f32.gmra.mrb[0].mxu0 %v1760
    %v1828 = vpop.f32.mrb[0].mxu0
    %v1829 = vadd.f32 0.0, %v1828
    %v1830 = vpop.f32.mrb[0].mxu0
    %1831 = vdwg.mxu0
    %1832 = vmatprep.subr.mxu0 0.0
    %1833 = vmatpush1.msra.mxu0 %v200
    %1834 = vmatprep.subr.mxu0 0.0
    %1835 = vmatpush1.msra.mxu0 %v201
    %1836 = vmatprep.subr.mxu0 0.0
    %1837 = vmatpush1.msra.mxu0 %v202
    %1838 = vmatprep.subr.mxu0 0.0
    %1839 = vmatpush1.msra.mxu0 %v203
    %1840 = vmatprep.subr.mxu0 0.0
    %1841 = vmatpush1.msra.mxu0 0.0
    %1842 = vmatprep.subr.mxu0 0.0
    %1843 = vmatpush1.msra.mxu0 0.0
    %1844 = vmatprep.subr.mxu0 0.0
    %1845 = vmatpush1.msra.mxu0 0.0
    %1846 = vmatprep.subr.mxu0 0.0
    %1847 = vmatpush1.msra.mxu0 0.0
    %1848 = vmatprep.subr.mxu0 0.0
    %1849 = vmatpush1.msra.mxu0 0.0
    %1850 = vmatprep.subr.mxu0 0.0
    %1851 = vmatpush1.msra.mxu0 0.0
    %1852 = vmatprep.subr.mxu0 0.0
    %1853 = vmatpush1.msra.mxu0 0.0
    %1854 = vmatprep.subr.mxu0 0.0
    %1855 = vmatpush1.msra.mxu0 0.0
    %1856 = vmatprep.subr.mxu0 0.0
    %1857 = vmatpush1.msra.mxu0 0.0
    %1858 = vmatprep.subr.mxu0 0.0
    %1859 = vmatpush1.msra.mxu0 0.0
    %1860 = vmatprep.subr.mxu0 0.0
    %1861 = vmatpush1.msra.mxu0 0.0
    %1862 = vmatprep.subr.mxu0 0.0
    %1863 = vmatpush1.msra.mxu0 0.0
    %1864 = vmatprep.subr.mxu0 0.0
    %1865 = vmatpush1.msra.mxu0 0.0
    %1866 = vmatprep.subr.mxu0 0.0
    %1867 = vmatpush1.msra.mxu0 0.0
    %1868 = vmatprep.subr.mxu0 0.0
    %1869 = vmatpush1.msra.mxu0 0.0
    %1870 = vmatprep.subr.mxu0 0.0
    %1871 = vmatpush1.msra.mxu0 0.0
    %1872 = vmatprep.subr.mxu0 0.0
    %1873 = vmatpush1.msra.mxu0 0.0
    %1874 = vmatprep.subr.mxu0 0.0
    %1875 = vmatpush1.msra.mxu0 0.0
    %1876 = vmatprep.subr.mxu0 0.0
    %1877 = vmatpush1.msra.mxu0 0.0
    %1878 = vmatprep.subr.mxu0 0.0
    %1879 = vmatpush1.msra.mxu0 0.0
    %1880 = vmatprep.subr.mxu0 0.0
    %1881 = vmatpush1.msra.mxu0 0.0
    %1882 = vmatprep.subr.mxu0 0.0
    %1883 = vmatpush1.msra.mxu0 0.0
    %1884 = vmatprep.subr.mxu0 0.0
    %1885 = vmatpush1.msra.mxu0 0.0
    %1886 = vmatprep.subr.mxu0 0.0
    %1887 = vmatpush1.msra.mxu0 0.0
    %1888 = vmatprep.subr.mxu0 0.0
    %1889 = vmatpush1.msra.mxu0 0.0
    %1890 = vmatprep.subr.mxu0 0.0
    %1891 = vmatpush1.msra.mxu0 0.0
    %1892 = vmatprep.subr.mxu0 0.0
    %1893 = vmatpush1.msra.mxu0 0.0
    %1894 = vmatprep.subr.mxu0 0.0
    %1895 = vmatpush1.msra.mxu0 0.0
    %1896 = vmatprep.mubr.f32.mxu0 0.0
    %1897 = vmatmul.mubr.f32.gmra.mrb[0].mxu0 %v1661
    %v1898 = vpop.f32.mrb[0].mxu0
    %v1899 = vadd.f32 %v1829, %v1898
    %v1900 = vpop.f32.mrb[0].mxu0
    %1901 = vdwg.mxu0
    %v1902 = vadd.f32 %v1899, %v209
    %v1903 = vtanh.pop %v1902
    %v1904 = vmul.f32 %v1903, 0.5
    %v1905 = vadd.f32 %v1904, 0.5
    %v1906 = vmul.f32 %v1905, %v1645
    %1908 = vrot.lane.b32.xlu0 %v1903, 64
    %v1909 = vpop.permute.xlu0 %1908
    %v1911 = vmul.f32 %v1905, %v1909
    %1913 = vrot.lane.b32.xlu0 %v1911, 32
    %v1914 = vpop.permute.xlu0 %1913
    %v1916 = vadd.f32 %v1906, %v1914
    %v1917 = vtanh.pop %v1916
    %1919 = vrot.lane.b32.xlu0 %v1917, 64
    %v1920 = vpop.permute.xlu0 %1919
    %v1922 = vmul.f32 %v1905, %v1920
    %1924 = vrot.lane.b32.xlu0 %v1922, 32
    %v1925 = vpop.permute.xlu0 %1924
    %1927 = vst.msk [vmem:[#allocation2 + $0x5] sm:$0x1] %vm571, %v1925
    %v1929 = vrot.slane %v1759, 6
    %1930 = vrot.lane.b32.xlu0 %v1929, 32
    %v1931 = vpop.permute.xlu0 %1930
    %v1932 = vsel %vm122, %v1931, 0
    %1934 = vmatprep.subr.mxu0 0.0
    %1935 = vmatpush1.msra.mxu0 %v196
    %1936 = vmatprep.subr.mxu0 0.0
    %1937 = vmatpush1.msra.mxu0 %v197
    %1938 = vmatprep.subr.mxu0 0.0
    %1939 = vmatpush1.msra.mxu0 %v198
    %1940 = vmatprep.subr.mxu0 0.0
    %1941 = vmatpush1.msra.mxu0 %v199
    %1942 = vmatprep.subr.mxu0 0.0
    %1943 = vmatpush1.msra.mxu0 0.0
    %1944 = vmatprep.subr.mxu0 0.0
    %1945 = vmatpush1.msra.mxu0 0.0
    %1946 = vmatprep.subr.mxu0 0.0
    %1947 = vmatpush1.msra.mxu0 0.0
    %1948 = vmatprep.subr.mxu0 0.0
    %1949 = vmatpush1.msra.mxu0 0.0
    %1950 = vmatprep.subr.mxu0 0.0
    %1951 = vmatpush1.msra.mxu0 0.0
    %1952 = vmatprep.subr.mxu0 0.0
    %1953 = vmatpush1.msra.mxu0 0.0
    %1954 = vmatprep.subr.mxu0 0.0
    %1955 = vmatpush1.msra.mxu0 0.0
    %1956 = vmatprep.subr.mxu0 0.0
    %1957 = vmatpush1.msra.mxu0 0.0
    %1958 = vmatprep.subr.mxu0 0.0
    %1959 = vmatpush1.msra.mxu0 0.0
    %1960 = vmatprep.subr.mxu0 0.0
    %1961 = vmatpush1.msra.mxu0 0.0
    %1962 = vmatprep.subr.mxu0 0.0
    %1963 = vmatpush1.msra.mxu0 0.0
    %1964 = vmatprep.subr.mxu0 0.0
    %1965 = vmatpush1.msra.mxu0 0.0
    %1966 = vmatprep.subr.mxu0 0.0
    %1967 = vmatpush1.msra.mxu0 0.0
    %1968 = vmatprep.subr.mxu0 0.0
    %1969 = vmatpush1.msra.mxu0 0.0
    %1970 = vmatprep.subr.mxu0 0.0
    %1971 = vmatpush1.msra.mxu0 0.0
    %1972 = vmatprep.subr.mxu0 0.0
    %1973 = vmatpush1.msra.mxu0 0.0
    %1974 = vmatprep.subr.mxu0 0.0
    %1975 = vmatpush1.msra.mxu0 0.0
    %1976 = vmatprep.subr.mxu0 0.0
    %1977 = vmatpush1.msra.mxu0 0.0
    %1978 = vmatprep.subr.mxu0 0.0
    %1979 = vmatpush1.msra.mxu0 0.0
    %1980 = vmatprep.subr.mxu0 0.0
    %1981 = vmatpush1.msra.mxu0 0.0
    %1982 = vmatprep.subr.mxu0 0.0
    %1983 = vmatpush1.msra.mxu0 0.0
    %1984 = vmatprep.subr.mxu0 0.0
    %1985 = vmatpush1.msra.mxu0 0.0
    %1986 = vmatprep.subr.mxu0 0.0
    %1987 = vmatpush1.msra.mxu0 0.0
    %1988 = vmatprep.subr.mxu0 0.0
    %1989 = vmatpush1.msra.mxu0 0.0
    %1990 = vmatprep.subr.mxu0 0.0
    %1991 = vmatpush1.msra.mxu0 0.0
    %1992 = vmatprep.subr.mxu0 0.0
    %1993 = vmatpush1.msra.mxu0 0.0
    %1994 = vmatprep.subr.mxu0 0.0
    %1995 = vmatpush1.msra.mxu0 0.0
    %1996 = vmatprep.subr.mxu0 0.0
    %1997 = vmatpush1.msra.mxu0 0.0
    %1998 = vmatprep.mubr.f32.mxu0 0.0
    %1999 = vmatmul.mubr.f32.gmra.mrb[0].mxu0 %v1932
    %v2000 = vpop.f32.mrb[0].mxu0
    %v2001 = vadd.f32 0.0, %v2000
    %v2002 = vpop.f32.mrb[0].mxu0
    %2003 = vdwg.mxu0
    %v2005 = vrot.slane %v2001, 1
    %v2007 = vadd.f32 %v193, %v2005
    %v2008 = vtanh.pop %v2007
    %v2009 = vmul.f32 %v2008, 0.5
    %v2010 = vadd.f32 %v2009, 0.5
    %v2012 = vrot.slane %v1753, 7
    %v2014 = vmul.f32 %v2010, %v2012
    %2016 = vrot.lane.b32.xlu0 %v2008, 64
    %v2017 = vpop.permute.xlu0 %2016
    %v2019 = vmul.f32 %v2010, %v2017
    %2021 = vrot.lane.b32.xlu0 %v2019, 32
    %v2022 = vpop.permute.xlu0 %2021
    %v2024 = vadd.f32 %v2014, %v2022
    %v2025 = vtanh.pop %v2024
    %2027 = vrot.lane.b32.xlu0 %v2025, 64
    %v2028 = vpop.permute.xlu0 %2027
    %v2030 = vmul.f32 %v2010, %v2028
    %v2031 = vsel %vm122, %v1925, 0
    %2033 = vmatprep.subr.mxu0 0.0
    %2034 = vmatpush1.msra.mxu0 %v204
    %2035 = vmatprep.subr.mxu0 0.0
    %2036 = vmatpush1.msra.mxu0 %v205
    %2037 = vmatprep.subr.mxu0 0.0
    %2038 = vmatpush1.msra.mxu0 %v206
    %2039 = vmatprep.subr.mxu0 0.0
    %2040 = vmatpush1.msra.mxu0 %v207
    %2041 = vmatprep.subr.mxu0 0.0
    %2042 = vmatpush1.msra.mxu0 0.0
    %2043 = vmatprep.subr.mxu0 0.0
    %2044 = vmatpush1.msra.mxu0 0.0
    %2045 = vmatprep.subr.mxu0 0.0
    %2046 = vmatpush1.msra.mxu0 0.0
    %2047 = vmatprep.subr.mxu0 0.0
    %2048 = vmatpush1.msra.mxu0 0.0
    %2049 = vmatprep.subr.mxu0 0.0
    %2050 = vmatpush1.msra.mxu0 0.0
    %2051 = vmatprep.subr.mxu0 0.0
    %2052 = vmatpush1.msra.mxu0 0.0
    %2053 = vmatprep.subr.mxu0 0.0
    %2054 = vmatpush1.msra.mxu0 0.0
    %2055 = vmatprep.subr.mxu0 0.0
    %2056 = vmatpush1.msra.mxu0 0.0
    %2057 = vmatprep.subr.mxu0 0.0
    %2058 = vmatpush1.msra.mxu0 0.0
    %2059 = vmatprep.subr.mxu0 0.0
    %2060 = vmatpush1.msra.mxu0 0.0
    %2061 = vmatprep.subr.mxu0 0.0
    %2062 = vmatpush1.msra.mxu0 0.0
    %2063 = vmatprep.subr.mxu0 0.0
    %2064 = vmatpush1.msra.mxu0 0.0
    %2065 = vmatprep.subr.mxu0 0.0
    %2066 = vmatpush1.msra.mxu0 0.0
    %2067 = vmatprep.subr.mxu0 0.0
    %2068 = vmatpush1.msra.mxu0 0.0
    %2069 = vmatprep.subr.mxu0 0.0
    %2070 = vmatpush1.msra.mxu0 0.0
    %2071 = vmatprep.subr.mxu0 0.0
    %2072 = vmatpush1.msra.mxu0 0.0
    %2073 = vmatprep.subr.mxu0 0.0
    %2074 = vmatpush1.msra.mxu0 0.0
    %2075 = vmatprep.subr.mxu0 0.0
    %2076 = vmatpush1.msra.mxu0 0.0
    %2077 = vmatprep.subr.mxu0 0.0
    %2078 = vmatpush1.msra.mxu0 0.0
    %2079 = vmatprep.subr.mxu0 0.0
    %2080 = vmatpush1.msra.mxu0 0.0
    %2081 = vmatprep.subr.mxu0 0.0
    %2082 = vmatpush1.msra.mxu0 0.0
    %2083 = vmatprep.subr.mxu0 0.0
    %2084 = vmatpush1.msra.mxu0 0.0
    %2085 = vmatprep.subr.mxu0 0.0
    %2086 = vmatpush1.msra.mxu0 0.0
    %2087 = vmatprep.subr.mxu0 0.0
    %2088 = vmatpush1.msra.mxu0 0.0
    %2089 = vmatprep.subr.mxu0 0.0
    %2090 = vmatpush1.msra.mxu0 0.0
    %2091 = vmatprep.subr.mxu0 0.0
    %2092 = vmatpush1.msra.mxu0 0.0
    %2093 = vmatprep.subr.mxu0 0.0
    %2094 = vmatpush1.msra.mxu0 0.0
    %2095 = vmatprep.subr.mxu0 0.0
    %2096 = vmatpush1.msra.mxu0 0.0
    %2097 = vmatprep.mubr.f32.mxu0 0.0
    %2098 = vmatmul.mubr.f32.gmra.mrb[0].mxu0 %v2031
    %v2099 = vpop.f32.mrb[0].mxu0
    %v2100 = vadd.f32 0.0, %v2099
    %v2101 = vpop.f32.mrb[0].mxu0
    %2102 = vdwg.mxu0
    %2103 = vmatprep.subr.mxu0 0.0
    %2104 = vmatpush1.msra.mxu0 %v200
    %2105 = vmatprep.subr.mxu0 0.0
    %2106 = vmatpush1.msra.mxu0 %v201
    %2107 = vmatprep.subr.mxu0 0.0
    %2108 = vmatpush1.msra.mxu0 %v202
    %2109 = vmatprep.subr.mxu0 0.0
    %2110 = vmatpush1.msra.mxu0 %v203
    %2111 = vmatprep.subr.mxu0 0.0
    %2112 = vmatpush1.msra.mxu0 0.0
    %2113 = vmatprep.subr.mxu0 0.0
    %2114 = vmatpush1.msra.mxu0 0.0
    %2115 = vmatprep.subr.mxu0 0.0
    %2116 = vmatpush1.msra.mxu0 0.0
    %2117 = vmatprep.subr.mxu0 0.0
    %2118 = vmatpush1.msra.mxu0 0.0
    %2119 = vmatprep.subr.mxu0 0.0
    %2120 = vmatpush1.msra.mxu0 0.0
    %2121 = vmatprep.subr.mxu0 0.0
    %2122 = vmatpush1.msra.mxu0 0.0
    %2123 = vmatprep.subr.mxu0 0.0
    %2124 = vmatpush1.msra.mxu0 0.0
    %2125 = vmatprep.subr.mxu0 0.0
    %2126 = vmatpush1.msra.mxu0 0.0
    %2127 = vmatprep.subr.mxu0 0.0
    %2128 = vmatpush1.msra.mxu0 0.0
    %2129 = vmatprep.subr.mxu0 0.0
    %2130 = vmatpush1.msra.mxu0 0.0
    %2131 = vmatprep.subr.mxu0 0.0
    %2132 = vmatpush1.msra.mxu0 0.0
    %2133 = vmatprep.subr.mxu0 0.0
    %2134 = vmatpush1.msra.mxu0 0.0
    %2135 = vmatprep.subr.mxu0 0.0
    %2136 = vmatpush1.msra.mxu0 0.0
    %2137 = vmatprep.subr.mxu0 0.0
    %2138 = vmatpush1.msra.mxu0 0.0
    %2139 = vmatprep.subr.mxu0 0.0
    %2140 = vmatpush1.msra.mxu0 0.0
    %2141 = vmatprep.subr.mxu0 0.0
    %2142 = vmatpush1.msra.mxu0 0.0
    %2143 = vmatprep.subr.mxu0 0.0
    %2144 = vmatpush1.msra.mxu0 0.0
    %2145 = vmatprep.subr.mxu0 0.0
    %2146 = vmatpush1.msra.mxu0 0.0
    %2147 = vmatprep.subr.mxu0 0.0
    %2148 = vmatpush1.msra.mxu0 0.0
    %2149 = vmatprep.subr.mxu0 0.0
    %2150 = vmatpush1.msra.mxu0 0.0
    %2151 = vmatprep.subr.mxu0 0.0
    %2152 = vmatpush1.msra.mxu0 0.0
    %2153 = vmatprep.subr.mxu0 0.0
    %2154 = vmatpush1.msra.mxu0 0.0
    %2155 = vmatprep.subr.mxu0 0.0
    %2156 = vmatpush1.msra.mxu0 0.0
    %2157 = vmatprep.subr.mxu0 0.0
    %2158 = vmatpush1.msra.mxu0 0.0
    %2159 = vmatprep.subr.mxu0 0.0
    %2160 = vmatpush1.msra.mxu0 0.0
    %2161 = vmatprep.subr.mxu0 0.0
    %2162 = vmatpush1.msra.mxu0 0.0
    %2163 = vmatprep.subr.mxu0 0.0
    %2164 = vmatpush1.msra.mxu0 0.0
    %2165 = vmatprep.subr.mxu0 0.0
    %2166 = vmatpush1.msra.mxu0 0.0
    %2167 = vmatprep.mubr.f32.mxu0 0.0
    %2168 = vmatmul.mubr.f32.gmra.mrb[0].mxu0 %v1932
    %v2169 = vpop.f32.mrb[0].mxu0
    %v2170 = vadd.f32 %v2100, %v2169
    %v2171 = vpop.f32.mrb[0].mxu0
    %2172 = vdwg.mxu0
    %v2173 = vadd.f32 %v2170, %v209
    %v2174 = vtanh.pop %v2173
    %v2175 = vmul.f32 %v2174, 0.5
    %v2176 = vadd.f32 %v2175, 0.5
    %v2177 = vmul.f32 %v2176, %v1916
    %2179 = vrot.lane.b32.xlu0 %v2174, 64
    %v2180 = vpop.permute.xlu0 %2179
    %v2182 = vmul.f32 %v2176, %v2180
    %2184 = vrot.lane.b32.xlu0 %v2182, 32
    %v2185 = vpop.permute.xlu0 %2184
    %v2187 = vadd.f32 %v2177, %v2185
    %v2188 = vtanh.pop %v2187
    %2190 = vrot.lane.b32.xlu0 %v2188, 64
    %v2191 = vpop.permute.xlu0 %2190
    %v2193 = vmul.f32 %v2176, %v2191
    %2195 = vrot.lane.b32.xlu0 %v2193, 32
    %v2196 = vpop.permute.xlu0 %2195
    %2198 = vst.msk [vmem:[#allocation2 + $0x6] sm:$0x1] %vm571, %v2196
    %v2199 = vsel %vm122, %v2196, 0
    %2201 = vmatprep.subr.mxu0 0.0
    %2202 = vmatpush1.msra.mxu0 %v204
    %2203 = vmatprep.subr.mxu0 0.0
    %2204 = vmatpush1.msra.mxu0 %v205
    %2205 = vmatprep.subr.mxu0 0.0
    %2206 = vmatpush1.msra.mxu0 %v206
    %2207 = vmatprep.subr.mxu0 0.0
    %2208 = vmatpush1.msra.mxu0 %v207
    %2209 = vmatprep.subr.mxu0 0.0
    %2210 = vmatpush1.msra.mxu0 0.0
    %2211 = vmatprep.subr.mxu0 0.0
    %2212 = vmatpush1.msra.mxu0 0.0
    %2213 = vmatprep.subr.mxu0 0.0
    %2214 = vmatpush1.msra.mxu0 0.0
    %2215 = vmatprep.subr.mxu0 0.0
    %2216 = vmatpush1.msra.mxu0 0.0
    %2217 = vmatprep.subr.mxu0 0.0
    %2218 = vmatpush1.msra.mxu0 0.0
    %2219 = vmatprep.subr.mxu0 0.0
    %2220 = vmatpush1.msra.mxu0 0.0
    %2221 = vmatprep.subr.mxu0 0.0
    %2222 = vmatpush1.msra.mxu0 0.0
    %2223 = vmatprep.subr.mxu0 0.0
    %2224 = vmatpush1.msra.mxu0 0.0
    %2225 = vmatprep.subr.mxu0 0.0
    %2226 = vmatpush1.msra.mxu0 0.0
    %2227 = vmatprep.subr.mxu0 0.0
    %2228 = vmatpush1.msra.mxu0 0.0
    %2229 = vmatprep.subr.mxu0 0.0
    %2230 = vmatpush1.msra.mxu0 0.0
    %2231 = vmatprep.subr.mxu0 0.0
    %2232 = vmatpush1.msra.mxu0 0.0
    %2233 = vmatprep.subr.mxu0 0.0
    %2234 = vmatpush1.msra.mxu0 0.0
    %2235 = vmatprep.subr.mxu0 0.0
    %2236 = vmatpush1.msra.mxu0 0.0
    %2237 = vmatprep.subr.mxu0 0.0
    %2238 = vmatpush1.msra.mxu0 0.0
    %2239 = vmatprep.subr.mxu0 0.0
    %2240 = vmatpush1.msra.mxu0 0.0
    %2241 = vmatprep.subr.mxu0 0.0
    %2242 = vmatpush1.msra.mxu0 0.0
    %2243 = vmatprep.subr.mxu0 0.0
    %2244 = vmatpush1.msra.mxu0 0.0
    %2245 = vmatprep.subr.mxu0 0.0
    %2246 = vmatpush1.msra.mxu0 0.0
    %2247 = vmatprep.subr.mxu0 0.0
    %2248 = vmatpush1.msra.mxu0 0.0
    %2249 = vmatprep.subr.mxu0 0.0
    %2250 = vmatpush1.msra.mxu0 0.0
    %2251 = vmatprep.subr.mxu0 0.0
    %2252 = vmatpush1.msra.mxu0 0.0
    %2253 = vmatprep.subr.mxu0 0.0
    %2254 = vmatpush1.msra.mxu0 0.0
    %2255 = vmatprep.subr.mxu0 0.0
    %2256 = vmatpush1.msra.mxu0 0.0
    %2257 = vmatprep.subr.mxu0 0.0
    %2258 = vmatpush1.msra.mxu0 0.0
    %2259 = vmatprep.subr.mxu0 0.0
    %2260 = vmatpush1.msra.mxu0 0.0
    %2261 = vmatprep.subr.mxu0 0.0
    %2262 = vmatpush1.msra.mxu0 0.0
    %2263 = vmatprep.subr.mxu0 0.0
    %2264 = vmatpush1.msra.mxu0 0.0
    %2265 = vmatprep.mubr.f32.mxu0 0.0
    %2266 = vmatmul.mubr.f32.gmra.mrb[0].mxu0 %v2199
    %v2267 = vpop.f32.mrb[0].mxu0
    %v2268 = vadd.f32 0.0, %v2267
    %v2269 = vpop.f32.mrb[0].mxu0
    %2270 = vdwg.mxu0
    %v2272 = vrot.slane %v2030, 7
    %2273 = vrot.lane.b32.xlu0 %v2272, 32
    %v2274 = vpop.permute.xlu0 %2273
    %v2275 = vsel %vm122, %v2274, 0
    %2277 = vmatprep.subr.mxu0 0.0
    %2278 = vmatpush1.msra.mxu0 %v200
    %2279 = vmatprep.subr.mxu0 0.0
    %2280 = vmatpush1.msra.mxu0 %v201
    %2281 = vmatprep.subr.mxu0 0.0
    %2282 = vmatpush1.msra.mxu0 %v202
    %2283 = vmatprep.subr.mxu0 0.0
    %2284 = vmatpush1.msra.mxu0 %v203
    %2285 = vmatprep.subr.mxu0 0.0
    %2286 = vmatpush1.msra.mxu0 0.0
    %2287 = vmatprep.subr.mxu0 0.0
    %2288 = vmatpush1.msra.mxu0 0.0
    %2289 = vmatprep.subr.mxu0 0.0
    %2290 = vmatpush1.msra.mxu0 0.0
    %2291 = vmatprep.subr.mxu0 0.0
    %2292 = vmatpush1.msra.mxu0 0.0
    %2293 = vmatprep.subr.mxu0 0.0
    %2294 = vmatpush1.msra.mxu0 0.0
    %2295 = vmatprep.subr.mxu0 0.0
    %2296 = vmatpush1.msra.mxu0 0.0
    %2297 = vmatprep.subr.mxu0 0.0
    %2298 = vmatpush1.msra.mxu0 0.0
    %2299 = vmatprep.subr.mxu0 0.0
    %2300 = vmatpush1.msra.mxu0 0.0
    %2301 = vmatprep.subr.mxu0 0.0
    %2302 = vmatpush1.msra.mxu0 0.0
    %2303 = vmatprep.subr.mxu0 0.0
    %2304 = vmatpush1.msra.mxu0 0.0
    %2305 = vmatprep.subr.mxu0 0.0
    %2306 = vmatpush1.msra.mxu0 0.0
    %2307 = vmatprep.subr.mxu0 0.0
    %2308 = vmatpush1.msra.mxu0 0.0
    %2309 = vmatprep.subr.mxu0 0.0
    %2310 = vmatpush1.msra.mxu0 0.0
    %2311 = vmatprep.subr.mxu0 0.0
    %2312 = vmatpush1.msra.mxu0 0.0
    %2313 = vmatprep.subr.mxu0 0.0
    %2314 = vmatpush1.msra.mxu0 0.0
    %2315 = vmatprep.subr.mxu0 0.0
    %2316 = vmatpush1.msra.mxu0 0.0
    %2317 = vmatprep.subr.mxu0 0.0
    %2318 = vmatpush1.msra.mxu0 0.0
    %2319 = vmatprep.subr.mxu0 0.0
    %2320 = vmatpush1.msra.mxu0 0.0
    %2321 = vmatprep.subr.mxu0 0.0
    %2322 = vmatpush1.msra.mxu0 0.0
    %2323 = vmatprep.subr.mxu0 0.0
    %2324 = vmatpush1.msra.mxu0 0.0
    %2325 = vmatprep.subr.mxu0 0.0
    %2326 = vmatpush1.msra.mxu0 0.0
    %2327 = vmatprep.subr.mxu0 0.0
    %2328 = vmatpush1.msra.mxu0 0.0
    %2329 = vmatprep.subr.mxu0 0.0
    %2330 = vmatpush1.msra.mxu0 0.0
    %2331 = vmatprep.subr.mxu0 0.0
    %2332 = vmatpush1.msra.mxu0 0.0
    %2333 = vmatprep.subr.mxu0 0.0
    %2334 = vmatpush1.msra.mxu0 0.0
    %2335 = vmatprep.subr.mxu0 0.0
    %2336 = vmatpush1.msra.mxu0 0.0
    %2337 = vmatprep.subr.mxu0 0.0
    %2338 = vmatpush1.msra.mxu0 0.0
    %2339 = vmatprep.subr.mxu0 0.0
    %2340 = vmatpush1.msra.mxu0 0.0
    %2341 = vmatprep.mubr.f32.mxu0 0.0
    %2342 = vmatmul.mubr.f32.gmra.mrb[0].mxu0 %v2275
    %v2343 = vpop.f32.mrb[0].mxu0
    %v2344 = vadd.f32 %v2268, %v2343
    %v2345 = vpop.f32.mrb[0].mxu0
    %2346 = vdwg.mxu0
    %v2347 = vadd.f32 %v2344, %v209
    %v2348 = vtanh.pop %v2347
    %v2349 = vmul.f32 %v2348, 0.5
    %v2350 = vadd.f32 %v2349, 0.5
    %v2351 = vmul.f32 %v2350, %v2187
    %2353 = vrot.lane.b32.xlu0 %v2348, 64
    %v2354 = vpop.permute.xlu0 %2353
    %v2356 = vmul.f32 %v2350, %v2354
    %2358 = vrot.lane.b32.xlu0 %v2356, 32
    %v2359 = vpop.permute.xlu0 %2358
    %v2361 = vadd.f32 %v2351, %v2359
    %v2362 = vtanh.pop %v2361
    %2364 = vrot.lane.b32.xlu0 %v2362, 64
    %v2365 = vpop.permute.xlu0 %2364
    %v2367 = vmul.f32 %v2350, %v2365
    %2369 = vrot.lane.b32.xlu0 %v2367, 32
    %v2370 = vpop.permute.xlu0 %2369
    %2372 = vst.msk [vmem:[#allocation2 + $0x7] sm:$0x1] %vm571, %v2370
    %v2373 = vld [vmem:[#allocation2] sm:$0xff]
    %v2374 = vld [vmem:[#allocation12] sm:$0xff]
    %v2375 = vld [vmem:[#allocation12 + $0x8] sm:$0xff]
    %v2376 = vld [vmem:[#allocation12 + $0x10] sm:$0xff]
    %v2377 = vld [vmem:[#allocation12 + $0x18] sm:$0xff]
    %v2378 = vld [vmem:[%s7] sm:$0x1]
    %v2380 = vlaneseq
    %v2381 = vshrl.u32 %v2380, 7
    %v2382 = vsub.s32 0, %v2381
    %v2383 = vrot.slane %v2378, %v2382
    %v2386 = vsel %vm122, %v2373, 0
    %2388 = vmatprep.subr.mxu0 0.0
    %2389 = vmatpush1.msra.mxu0 %v2374
    %2390 = vmatprep.subr.mxu0 0.0
    %2391 = vmatpush1.msra.mxu0 %v2375
    %2392 = vmatprep.subr.mxu0 0.0
    %2393 = vmatpush1.msra.mxu0 %v2376
    %2394 = vmatprep.subr.mxu0 0.0
    %2395 = vmatpush1.msra.mxu0 %v2377
    %2396 = vmatprep.subr.mxu0 0.0
    %2397 = vmatpush1.msra.mxu0 0.0
    %2398 = vmatprep.subr.mxu0 0.0
    %2399 = vmatpush1.msra.mxu0 0.0
    %2400 = vmatprep.subr.mxu0 0.0
    %2401 = vmatpush1.msra.mxu0 0.0
    %2402 = vmatprep.subr.mxu0 0.0
    %2403 = vmatpush1.msra.mxu0 0.0
    %2404 = vmatprep.subr.mxu0 0.0
    %2405 = vmatpush1.msra.mxu0 0.0
    %2406 = vmatprep.subr.mxu0 0.0
    %2407 = vmatpush1.msra.mxu0 0.0
    %2408 = vmatprep.subr.mxu0 0.0
    %2409 = vmatpush1.msra.mxu0 0.0
    %2410 = vmatprep.subr.mxu0 0.0
    %2411 = vmatpush1.msra.mxu0 0.0
    %2412 = vmatprep.subr.mxu0 0.0
    %2413 = vmatpush1.msra.mxu0 0.0
    %2414 = vmatprep.subr.mxu0 0.0
    %2415 = vmatpush1.msra.mxu0 0.0
    %2416 = vmatprep.subr.mxu0 0.0
    %2417 = vmatpush1.msra.mxu0 0.0
    %2418 = vmatprep.subr.mxu0 0.0
    %2419 = vmatpush1.msra.mxu0 0.0
    %2420 = vmatprep.subr.mxu0 0.0
    %2421 = vmatpush1.msra.mxu0 0.0
    %2422 = vmatprep.subr.mxu0 0.0
    %2423 = vmatpush1.msra.mxu0 0.0
    %2424 = vmatprep.subr.mxu0 0.0
    %2425 = vmatpush1.msra.mxu0 0.0
    %2426 = vmatprep.subr.mxu0 0.0
    %2427 = vmatpush1.msra.mxu0 0.0
    %2428 = vmatprep.subr.mxu0 0.0
    %2429 = vmatpush1.msra.mxu0 0.0
    %2430 = vmatprep.subr.mxu0 0.0
    %2431 = vmatpush1.msra.mxu0 0.0
    %2432 = vmatprep.subr.mxu0 0.0
    %2433 = vmatpush1.msra.mxu0 0.0
    %2434 = vmatprep.subr.mxu0 0.0
    %2435 = vmatpush1.msra.mxu0 0.0
    %2436 = vmatprep.subr.mxu0 0.0
    %2437 = vmatpush1.msra.mxu0 0.0
    %2438 = vmatprep.subr.mxu0 0.0
    %2439 = vmatpush1.msra.mxu0 0.0
    %2440 = vmatprep.subr.mxu0 0.0
    %2441 = vmatpush1.msra.mxu0 0.0
    %2442 = vmatprep.subr.mxu0 0.0
    %2443 = vmatpush1.msra.mxu0 0.0
    %2444 = vmatprep.subr.mxu0 0.0
    %2445 = vmatpush1.msra.mxu0 0.0
    %2446 = vmatprep.subr.mxu0 0.0
    %2447 = vmatpush1.msra.mxu0 0.0
    %2448 = vmatprep.subr.mxu0 0.0
    %2449 = vmatpush1.msra.mxu0 0.0
    %2450 = vmatprep.subr.mxu0 0.0
    %2451 = vmatpush1.msra.mxu0 0.0
    %2452 = vmatprep.mubr.f32.mxu0 0.0
    %2453 = vmatmul.mubr.f32.gmra.mrb[0].mxu0 %v2386
    %v2454 = vpop.f32.mrb[0].mxu0
    %v2455 = vadd.f32 %v2383, %v2454
    %v2456 = vpop.f32.mrb[0].mxu0
    %2457 = vdwg.mxu0
    %2458 = vmax.xlane.f32.xlu0 %v2455
    %v2459 = vpop.xlane.xlu0 %2458
    %v2460 = vsub.f32 %v2455, %v2459
    %v2461 = vmul.f32 %v2460, 1.442695
    %v2462 = vpow.pop %v2461
    %2463 = vadd.xlane.f32.xlu0 %v2462
    %v2464 = vpop.xlane.xlu0 %2463
    %v2465 = vlog2.pop %v2464
    %v2466 = vmul.f32 %v2465, 0.6931472
    %v2467 = vadd.f32 %v2459, %v2466
    %v2468 = vsub.f32 %v2455, %v2467
    %2469 = vst [vmem:[#allocation14] sm:$0xff] %v2468
    // Predicated region
    $region58: #{tpu_custom_call.1} parent=1 // pred_check
      _
    $region59: #{tpu_custom_call.1} parent=1 // pred_check_branch
      %2471 = sbr.rel (0) target = $region61
    $region60: #{tpu_custom_call.1} parent=1 // pred_region
      %s2473 = ssub.s32 128, 128
      %2474 = vsyncadd [#allocation5], %s2473
      %s2476 = sshll.u32 [#allocation14], 4
      %s2477 = int_to_ptr.vmem [resolvable:$true] %s2476
      %2479 = dma.vmem_to_hbm [thread:$0]  %s2477, 128, %s8, [#allocation5]
    $region61: #{tpu_custom_call.1} parent=1 // pred_fallthru
      _
    // Predicated region
    $region62: #{tpu_custom_call.1} parent=1 // pred_check
      _
    $region63: #{tpu_custom_call.1} parent=1 // pred_check_branch
      %2481 = sbr.rel (0) target = $region65
    $region64: #{tpu_custom_call.1} parent=1 // pred_region
      %2482 = dma.done [#allocation5], 128
    $region65: #{tpu_custom_call.1} parent=1 // pred_fallthru
      _
    %2483 = vsyncpa [#allocation4], 1
    %2484 = vsyncpa [#allocation7], 1
    %2485 = vsyncpa [#allocation10], 1
    %2486 = vsyncpa [#allocation13], 1
    %2487 = vsyncpa [#allocation5], 1

</llo_original>
